<compile_context>
chip_gen: v7x
topology: tpu7x:2x2x1
jax: 0.10.0
libtpu: 0.0.40
codegen_flags: <defaults>
</compile_context>

<pallas_src>
import numpy as np

import jax
import jax.numpy as jnp
from jax.experimental import pallas as pl
from jax.experimental.pallas import tpu as pltpu


# ----------------------------------------------------------------------------
# Host-side weight repacking (one-time, tiny).
# ----------------------------------------------------------------------------
def _band_conv3x3(w_hwio, W):
    """(3,3,Cin,Cout) HWIO -> (3, W*Cin, W*Cout) width-banded matrices.

    For kernel row dy, the matrix maps a width-major input row
    (lane index col*Cin + c) to a width-major output row
    (lane index col*Cout + o).  Out-of-range horizontal taps are omitted,
    which implements the zero "SAME" padding on the left/right edge.
    """
    kh, kw, cin, cout = w_hwio.shape
    assert kh == 3 and kw == 3
    w_np = np.asarray(w_hwio, np.float32)
    out = np.zeros((3, W * cin, W * cout), np.float32)
    for dy in range(3):
        for dx in range(3):
            for col in range(W):
                src = col + dx - 1
                if 0 <= src < W:
                    out[dy, src * cin:(src + 1) * cin,
                        col * cout:(col + 1) * cout] = w_np[dy, dx]
    return out


def _tile_vec(v, W):
    """Per-channel vector -> width-major (1, W*len(v)) row."""
    return np.tile(np.asarray(v, np.float32), W)[None, :]


def _replication_matrix(W, colors, r2, cop):
    """0/1 matrix implementing torch.repeat_interleave(x, r2, dim=channel)
    in the width-major layout: (W*colors) -> (W*cop) (cop >= colors*r2)."""
    rep = np.zeros((W * colors, W * cop), np.float32)
    for col in range(W):
        for c in range(colors):
            rep[col * colors + c,
                col * cop + c * r2: col * cop + (c + 1) * r2] = 1.0
    return rep


# ----------------------------------------------------------------------------
# Fused Pallas kernel: one grid step processes Nb images.
# ----------------------------------------------------------------------------
def _make_fused_kernel(Nb, H, W, C, colors, cop, nblk):
    WC = W * C
    Wc3 = W * colors
    Wcop = W * cop
    M = Nb * H  # matmul LHS rows per grid step

    def kernel(x_ref, w0_ref, b0_ref, wb_ref, bb_ref, ab_ref,
               w1_ref, b1_ref, rep_ref, o_ref,
               xpad_ref, pad_ref, f0_ref):
        # --- per-grid-step halo init (per-step => safe under megacore) ---
        zx = jnp.zeros((Nb, 1, Wc3), jnp.float32)
        za = jnp.zeros((Nb, 1, WC), jnp.float32)
        xpad_ref[:, pl.ds(0, 1), :] = zx
        xpad_ref[:, pl.ds(H + 1, 1), :] = zx
        pad_ref[:, pl.ds(0, 1), :] = za
        pad_ref[:, pl.ds(H + 1, 1), :] = za

        # Stage the (Cin = colors) input rows into the haloed input scratch.
        xpad_ref[:, pl.ds(1, H), :] = x_ref[...]

        def conv3x3(src_ref, k_lanes, get_w):
            """3x3 'SAME' conv of the activation in src_ref as 3 width-banded
            MXU matmuls (one per kernel row), M = Nb*H, bf16 in / f32 acc."""
            acc = None
            for dy in range(3):
                lhs = src_ref[:, pl.ds(dy, H), :].reshape(M, k_lanes)
                part = jnp.dot(lhs.astype(jnp.bfloat16), get_w(dy),
                               preferred_element_type=jnp.float32)
                acc = part if acc is None else acc + part
            return acc                                     # (M, n_out) f32

        def set_act(a):                                    # a: (M, WC) f32
            pad_ref[:, pl.ds(1, H), :] = a.reshape(Nb, H, WC)

        # conv0 (K = W*colors)
        f0 = conv3x3(xpad_ref, Wc3, lambda dy: w0_ref[dy]) + b0_ref[...]
        f0_ref[...] = f0

        # Backbone: RMBM blocks (deploy form: 3x3 conv + per-channel PReLU).
        h = f0
        for bi in range(nblk):
            set_act(h)
            z = conv3x3(pad_ref, WC,
                        lambda dy, bi=bi: wb_ref[bi * 3 + dy]) + bb_ref[bi]
            h = jnp.where(z > 0, z, ab_ref[bi] * z)

        # Trunk residual, conv1 (padded out channels), shortcut, ClippedReLU.
        set_act(h + f0_ref[...])
        y = conv3x3(pad_ref, WC, lambda dy: w1_ref[dy]) + b1_ref[...]
        sc = jnp.dot(x_ref[...].reshape(M, Wc3), rep_ref[...],
                     preferred_element_type=jnp.float32)   # exact f32 shortcut
        y = jnp.clip(y + sc, 0.0, 255.0)
        o_ref[...] = y.reshape(Nb, H, Wcop).astype(o_ref.dtype)

    return kernel


# ----------------------------------------------------------------------------
# t_RMBN forward (single fused Pallas call + pure-layout glue in XLA).
# ----------------------------------------------------------------------------
def t_rmbn_forward(x_nchw, params, scale, rows_per_step=256):
    """rows_per_step: target M per grid step (>=128 saturates the v5e MXU,
    ~256 for v6e/v7x); actual Nb is the largest divisor of N that fits."""
    N, colors, H, W = x_nchw.shape
    C = params["conv0_w"].shape[-1]          # channel_nums
    nblk = len(params["blocks"])
    r2 = scale * scale
    cout1 = colors * r2

    assert H % 8 == 0 and (W * C) % 128 == 0, "layout assumptions of this kernel"

    # Pad conv1 output channels so the output row is a multiple of 128 lanes.
    cop = cout1
    while (W * cop) % 128 != 0:
        cop += 1

    # Images per grid step (largest divisor of N with Nb*H <= rows_per_step).
    nb = 1
    for d in range(1, N + 1):
        if N % d == 0 and d * H <= max(H, rows_per_step):
            nb = d

    # ---- host-side repacking: bf16 banded weights, f32 bias/alpha/rep ----
    w0 = jnp.asarray(_band_conv3x3(np.asarray(params["conv0_w"]), W),
                     jnp.bfloat16)                                   # (3, W*colors, WC)
    b0 = jnp.asarray(_tile_vec(params["conv0_b"], W))                # (1, WC)
    wb = jnp.asarray(np.concatenate(
        [_band_conv3x3(np.asarray(w), W) for (w, _, _) in params["blocks"]],
        axis=0), jnp.bfloat16)                                       # (3*nblk, WC, WC)
    bb = jnp.asarray(np.stack([_tile_vec(b, W)
                               for (_, b, _) in params["blocks"]]))  # (nblk, 1, WC)
    ab = jnp.asarray(np.stack([_tile_vec(a, W)
                               for (_, _, a) in params["blocks"]]))  # (nblk, 1, WC)
    w1_full = np.zeros((3, 3, C, cop), np.float32)
    w1_full[..., :cout1] = np.asarray(params["conv1_w"], np.float32)
    w1 = jnp.asarray(_band_conv3x3(w1_full, W), jnp.bfloat16)        # (3, WC, W*cop)
    b1_full = np.zeros((cop,), np.float32)
    b1_full[:cout1] = np.asarray(params["conv1_b"], np.float32)
    b1 = jnp.asarray(_tile_vec(b1_full, W))                          # (1, W*cop)
    rep = jnp.asarray(_replication_matrix(W, colors, r2, cop))       # (W*colors, W*cop)

    # ---- input: NCHW -> width-major rows, Cin stays at `colors` ----
    x_flat = jnp.transpose(x_nchw, (0, 2, 3, 1)).astype(jnp.float32)
    x_flat = x_flat.reshape(N, H, W * colors)

    kern = _make_fused_kernel(nb, H, W, C, colors, cop, nblk)
    const3 = lambda shape: pl.BlockSpec(shape, lambda g: (0, 0, 0))
    const2 = lambda shape: pl.BlockSpec(shape, lambda g: (0, 0))
    in_specs = [
        pl.BlockSpec((nb, H, W * colors), lambda g: (g, 0, 0)),   # x (Nb images)
        const3(w0.shape), const2(b0.shape),                       # conv0
        const3(wb.shape), const3(bb.shape), const3(ab.shape),     # blocks
        const3(w1.shape), const2(b1.shape),                       # conv1
        const2(rep.shape),                                        # shortcut
    ]

    out_flat = pl.pallas_call(
        kern,
        grid=(N // nb,),
        in_specs=in_specs,
        out_specs=pl.BlockSpec((nb, H, W * cop), lambda g: (g, 0, 0)),
        out_shape=jax.ShapeDtypeStruct((N, H, W * cop), jnp.bfloat16),
        scratch_shapes=[
            pltpu.VMEM((nb, H + 2, W * colors), jnp.float32),  # haloed input
            pltpu.VMEM((nb, H + 2, W * C), jnp.float32),       # haloed activations
            pltpu.VMEM((nb * H, W * C), jnp.float32),          # f0 (trunk residual)
        ],
        compiler_params=pltpu.CompilerParams(
            dimension_semantics=("parallel",),
            vmem_limit_bytes=32 * 1024 * 1024),
    )(x_flat, w0, b0, wb, bb, ab, w1, b1, rep)

    # ---- layout-only epilogue: drop channel pad, PixelShuffle, NCHW ----
    y = out_flat.astype(jnp.float32).reshape(N, H, W, cop)[..., :cout1]
    y = y.reshape(N, H, W, colors, scale, scale)
    y = jnp.transpose(y, (0, 1, 4, 2, 5, 3)).reshape(N, H * scale, W * scale,
                                                     colors)
    return jnp.transpose(y, (0, 3, 1, 2))


# ----------------------------------------------------------------------------
# Pure-JAX reference (f32 lax.conv) for the correctness check.
# ----------------------------------------------------------------------------
def _ref_conv(x, w, b):
    return jax.lax.conv_general_dilated(
        x, w, (1, 1), "SAME",
        dimension_numbers=("NHWC", "HWIO", "NHWC")) + b


def t_rmbn_reference(x_nchw, params, scale):
    r2 = scale * scale
    x = jnp.transpose(x_nchw, (0, 2, 3, 1)).astype(jnp.float32)
    shortcut = jnp.repeat(x, r2, axis=-1)
    f0 = _ref_conv(x, params["conv0_w"], params["conv0_b"])
    h = f0
    for (w, b, a) in params["blocks"]:
        z = _ref_conv(h, w, b)
        h = jnp.where(z > 0, z, a * z)
    y = _ref_conv(h + f0, params["conv1_w"], params["conv1_b"]) + shortcut
    N, H, W, _ = y.shape
    C = y.shape[-1] // r2
    y = y.reshape(N, H, W, C, scale, scale)
    y = jnp.transpose(y, (0, 1, 4, 2, 5, 3)).reshape(N, H * scale, W * scale, C)
    y = jnp.clip(y, 0.0, 255.0)
    return jnp.transpose(y, (0, 3, 1, 2))


# ----------------------------------------------------------------------------
# Deterministic parameter construction.
# ----------------------------------------------------------------------------
def make_params(key, colors, channels, module_nums, scale):
    ks = jax.random.split(key, 2 + module_nums)
    p = {}
    p["conv0_w"] = 0.05 * jax.random.normal(ks[0], (3, 3, colors, channels),
                                            jnp.float32)
    p["conv0_b"] = jnp.zeros((channels,), jnp.float32)
    blocks = []
    for i in range(module_nums):
        w = 0.05 * jax.random.normal(ks[2 + i], (3, 3, channels, channels),
                                     jnp.float32)
        b = jnp.zeros((channels,), jnp.float32)
        a = jnp.full((channels,), 0.25, jnp.float32)   # nn.PReLU default init
        blocks.append((w, b, a))
    p["blocks"] = blocks
    cout = colors * scale * scale
    p["conv1_w"] = 0.05 * jax.random.normal(ks[1], (3, 3, channels, cout),
                                            jnp.float32)
    p["conv1_b"] = jnp.zeros((cout,), jnp.float32)
    return p


if __name__ == "__main__":
    # Small config: colors=3, module_nums=3, channel_nums=16, scale=2
    N, colors, H, W = 4, 3, 16, 16
    channels, module_nums, scale = 16, 3, 2

    key = jax.random.PRNGKey(0)
    kx, kp = jax.random.split(key)
    x = 10.0 * jax.random.normal(kx, (N, colors, H, W), jnp.float32)  # NCHW
    params = make_params(kp, colors, channels, module_nums, scale)

    out = jax.block_until_ready(t_rmbn_forward(x, params, scale))
    ref = jax.block_until_ready(t_rmbn_reference(x, params, scale))

    assert out.shape == (N, colors, H * scale, W * scale), out.shape
    max_err = float(jnp.max(jnp.abs(out - ref)))
    # bf16 matmul operands + bf16 output => loosened tolerance vs f32 reference.
    assert max_err < 1.0, max_err

    print("KERNEL_OK")
</pallas_src>

<mosaic_0001>
module attributes {stable_mosaic.version = 11 : i64} {
  func.func @kernel(%arg0: i32, %arg1: memref<4x16x48xf32, #tpu.memory_space<vmem>>, %arg2: memref<3x48x256xbf16, #tpu.memory_space<vmem>>, %arg3: memref<1x256xf32, #tpu.memory_space<vmem>>, %arg4: memref<9x256x256xbf16, #tpu.memory_space<vmem>>, %arg5: memref<3x1x256xf32, #tpu.memory_space<vmem>>, %arg6: memref<3x1x256xf32, #tpu.memory_space<vmem>>, %arg7: memref<3x256x256xbf16, #tpu.memory_space<vmem>>, %arg8: memref<1x256xf32, #tpu.memory_space<vmem>>, %arg9: memref<48x256xf32, #tpu.memory_space<vmem>>, %arg10: memref<4x16x256xbf16, #tpu.memory_space<vmem>>, %arg11: memref<4x18x48xf32, #tpu.memory_space<vmem>>, %arg12: memref<4x18x256xf32, #tpu.memory_space<vmem>>, %arg13: memref<64x256xf32, #tpu.memory_space<vmem>>) attributes {dimension_semantics = [#tpu.dimension_semantics<parallel>], iteration_bounds = array<i64: 1>, scalar_prefetch = 0 : i64, scratch_operands = 3 : i64, tpu.core_type = #tpu.core_type<tc>, window_params = [{transform_indices = @transform_0, window_bounds = array<i64: 4, 16, 48>}, {pipeline_mode = #tpu.pipeline_mode<synchronous>, transform_indices = @transform_1, window_bounds = array<i64: 3, 48, 256>}, {pipeline_mode = #tpu.pipeline_mode<synchronous>, transform_indices = @transform_2, window_bounds = array<i64: 1, 256>}, {pipeline_mode = #tpu.pipeline_mode<synchronous>, transform_indices = @transform_3, window_bounds = array<i64: 9, 256, 256>}, {pipeline_mode = #tpu.pipeline_mode<synchronous>, transform_indices = @transform_4, window_bounds = array<i64: 3, 1, 256>}, {pipeline_mode = #tpu.pipeline_mode<synchronous>, transform_indices = @transform_5, window_bounds = array<i64: 3, 1, 256>}, {pipeline_mode = #tpu.pipeline_mode<synchronous>, transform_indices = @transform_6, window_bounds = array<i64: 3, 256, 256>}, {pipeline_mode = #tpu.pipeline_mode<synchronous>, transform_indices = @transform_7, window_bounds = array<i64: 1, 256>}, {pipeline_mode = #tpu.pipeline_mode<synchronous>, transform_indices = @transform_8, window_bounds = array<i64: 48, 256>}, {transform_indices = @transform_9, window_bounds = array<i64: 4, 16, 256>}]} {
    %cst = arith.constant 0.000000e+00 : f32
    %0 = vector.broadcast %cst : f32 to vector<4x1x48xf32>
    %cst_0 = arith.constant 0.000000e+00 : f32
    %1 = vector.broadcast %cst_0 : f32 to vector<4x1x256xf32>
    %c0 = arith.constant 0 : index
    %c0_1 = arith.constant 0 : index
    %c0_2 = arith.constant 0 : index
    %2 = vector.load %arg11[%c0, %c0_1, %c0_2] : memref<4x18x48xf32, #tpu.memory_space<vmem>>, vector<4x1x48xf32>
    tpu.vector_store %arg11[%c0, %c0_1, %c0_2], %0 {strides = array<i32>} : memref<4x18x48xf32, #tpu.memory_space<vmem>>, vector<4x1x48xf32>,
    %c0_3 = arith.constant 0 : index
    %c17 = arith.constant 17 : index
    %c0_4 = arith.constant 0 : index
    %3 = vector.load %arg11[%c0_3, %c17, %c0_4] : memref<4x18x48xf32, #tpu.memory_space<vmem>>, vector<4x1x48xf32>
    tpu.vector_store %arg11[%c0_3, %c17, %c0_4], %0 {strides = array<i32>} : memref<4x18x48xf32, #tpu.memory_space<vmem>>, vector<4x1x48xf32>,
    %c0_5 = arith.constant 0 : index
    %c0_6 = arith.constant 0 : index
    %c0_7 = arith.constant 0 : index
    %4 = vector.load %arg12[%c0_5, %c0_6, %c0_7] : memref<4x18x256xf32, #tpu.memory_space<vmem>>, vector<4x1x256xf32>
    tpu.vector_store %arg12[%c0_5, %c0_6, %c0_7], %1 {strides = array<i32>} : memref<4x18x256xf32, #tpu.memory_space<vmem>>, vector<4x1x256xf32>,
    %c0_8 = arith.constant 0 : index
    %c17_9 = arith.constant 17 : index
    %c0_10 = arith.constant 0 : index
    %5 = vector.load %arg12[%c0_8, %c17_9, %c0_10] : memref<4x18x256xf32, #tpu.memory_space<vmem>>, vector<4x1x256xf32>
    tpu.vector_store %arg12[%c0_8, %c17_9, %c0_10], %1 {strides = array<i32>} : memref<4x18x256xf32, #tpu.memory_space<vmem>>, vector<4x1x256xf32>,
    %c0_11 = arith.constant 0 : index
    %c0_12 = arith.constant 0 : index
    %c0_13 = arith.constant 0 : index
    %6 = vector.load %arg1[%c0_11, %c0_12, %c0_13] : memref<4x16x48xf32, #tpu.memory_space<vmem>>, vector<4x16x48xf32>
    %c0_14 = arith.constant 0 : index
    %c1 = arith.constant 1 : index
    %c0_15 = arith.constant 0 : index
    %7 = vector.load %arg11[%c0_14, %c1, %c0_15] : memref<4x18x48xf32, #tpu.memory_space<vmem>>, vector<4x16x48xf32>
    tpu.vector_store %arg11[%c0_14, %c1, %c0_15], %6 {strides = array<i32>} : memref<4x18x48xf32, #tpu.memory_space<vmem>>, vector<4x16x48xf32>,
    %c0_16 = arith.constant 0 : index
    %c0_17 = arith.constant 0 : index
    %c0_18 = arith.constant 0 : index
    %8 = vector.load %arg11[%c0_16, %c0_17, %c0_18] : memref<4x18x48xf32, #tpu.memory_space<vmem>>, vector<4x16x48xf32>
    %9 = vector.shape_cast %8 : vector<4x16x48xf32> to vector<64x48xf32>
    %10 = arith.truncf %9 : vector<64x48xf32> to vector<64x48xbf16>
    %c0_19 = arith.constant 0 : index
    %c0_20 = arith.constant 0 : index
    %c0_21 = arith.constant 0 : index
    %11 = vector.load %arg2[%c0_19, %c0_20, %c0_21] : memref<3x48x256xbf16, #tpu.memory_space<vmem>>, vector<1x48x256xbf16>
    %12 = vector.shape_cast %11 : vector<1x48x256xbf16> to vector<48x256xbf16>
    %cst_22 = arith.constant dense<0.000000e+00> : vector<64x256xf32>
    %13 = tpu.matmul %10, %12, %cst_22 {dimension_numbers = #tpu.dot_dimension_numbers<[1], [0], [0], [1], [0, 0, 1, 1], [], []>} : vector<64x48xbf16>, vector<48x256xbf16>, vector<64x256xf32> -> vector<64x256xf32>
    %c0_23 = arith.constant 0 : index
    %c1_24 = arith.constant 1 : index
    %c0_25 = arith.constant 0 : index
    %14 = vector.load %arg11[%c0_23, %c1_24, %c0_25] : memref<4x18x48xf32, #tpu.memory_space<vmem>>, vector<4x16x48xf32>
    %15 = vector.shape_cast %14 : vector<4x16x48xf32> to vector<64x48xf32>
    %16 = arith.truncf %15 : vector<64x48xf32> to vector<64x48xbf16>
    %c1_26 = arith.constant 1 : index
    %c0_27 = arith.constant 0 : index
    %c0_28 = arith.constant 0 : index
    %17 = vector.load %arg2[%c1_26, %c0_27, %c0_28] : memref<3x48x256xbf16, #tpu.memory_space<vmem>>, vector<1x48x256xbf16>
    %18 = vector.shape_cast %17 : vector<1x48x256xbf16> to vector<48x256xbf16>
    %cst_29 = arith.constant dense<0.000000e+00> : vector<64x256xf32>
    %19 = tpu.matmul %16, %18, %cst_29 {dimension_numbers = #tpu.dot_dimension_numbers<[1], [0], [0], [1], [0, 0, 1, 1], [], []>} : vector<64x48xbf16>, vector<48x256xbf16>, vector<64x256xf32> -> vector<64x256xf32>
    %20 = arith.addf %13, %19 : vector<64x256xf32>
    %c0_30 = arith.constant 0 : index
    %c2 = arith.constant 2 : index
    %c0_31 = arith.constant 0 : index
    %21 = vector.load %arg11[%c0_30, %c2, %c0_31] : memref<4x18x48xf32, #tpu.memory_space<vmem>>, vector<4x16x48xf32>
    %22 = vector.shape_cast %21 : vector<4x16x48xf32> to vector<64x48xf32>
    %23 = arith.truncf %22 : vector<64x48xf32> to vector<64x48xbf16>
    %c2_32 = arith.constant 2 : index
    %c0_33 = arith.constant 0 : index
    %c0_34 = arith.constant 0 : index
    %24 = vector.load %arg2[%c2_32, %c0_33, %c0_34] : memref<3x48x256xbf16, #tpu.memory_space<vmem>>, vector<1x48x256xbf16>
    %25 = vector.shape_cast %24 : vector<1x48x256xbf16> to vector<48x256xbf16>
    %cst_35 = arith.constant dense<0.000000e+00> : vector<64x256xf32>
    %26 = tpu.matmul %23, %25, %cst_35 {dimension_numbers = #tpu.dot_dimension_numbers<[1], [0], [0], [1], [0, 0, 1, 1], [], []>} : vector<64x48xbf16>, vector<48x256xbf16>, vector<64x256xf32> -> vector<64x256xf32>
    %27 = arith.addf %20, %26 : vector<64x256xf32>
    %c0_36 = arith.constant 0 : index
    %c0_37 = arith.constant 0 : index
    %28 = vector.load %arg3[%c0_36, %c0_37] : memref<1x256xf32, #tpu.memory_space<vmem>>, vector<1x256xf32>
    %29 = vector.broadcast %28 : vector<1x256xf32> to vector<64x256xf32>
    %30 = arith.addf %27, %29 : vector<64x256xf32>
    %c0_38 = arith.constant 0 : index
    %c0_39 = arith.constant 0 : index
    %31 = vector.load %arg13[%c0_38, %c0_39] : memref<64x256xf32, #tpu.memory_space<vmem>>, vector<64x256xf32>
    tpu.vector_store %arg13[%c0_38, %c0_39], %30 {strides = array<i32>} : memref<64x256xf32, #tpu.memory_space<vmem>>, vector<64x256xf32>,
    %32 = vector.shape_cast %30 : vector<64x256xf32> to vector<4x16x256xf32>
    %c0_40 = arith.constant 0 : index
    %c1_41 = arith.constant 1 : index
    %c0_42 = arith.constant 0 : index
    %33 = vector.load %arg12[%c0_40, %c1_41, %c0_42] : memref<4x18x256xf32, #tpu.memory_space<vmem>>, vector<4x16x256xf32>
    tpu.vector_store %arg12[%c0_40, %c1_41, %c0_42], %32 {strides = array<i32>} : memref<4x18x256xf32, #tpu.memory_space<vmem>>, vector<4x16x256xf32>,
    %c0_43 = arith.constant 0 : index
    %c0_44 = arith.constant 0 : index
    %c0_45 = arith.constant 0 : index
    %34 = vector.load %arg12[%c0_43, %c0_44, %c0_45] : memref<4x18x256xf32, #tpu.memory_space<vmem>>, vector<4x16x256xf32>
    %35 = vector.shape_cast %34 : vector<4x16x256xf32> to vector<64x256xf32>
    %36 = arith.truncf %35 : vector<64x256xf32> to vector<64x256xbf16>
    %c0_46 = arith.constant 0 : index
    %c0_47 = arith.constant 0 : index
    %c0_48 = arith.constant 0 : index
    %37 = vector.load %arg4[%c0_46, %c0_47, %c0_48] : memref<9x256x256xbf16, #tpu.memory_space<vmem>>, vector<1x256x256xbf16>
    %38 = vector.shape_cast %37 : vector<1x256x256xbf16> to vector<256x256xbf16>
    %cst_49 = arith.constant dense<0.000000e+00> : vector<64x256xf32>
    %39 = tpu.matmul %36, %38, %cst_49 {dimension_numbers = #tpu.dot_dimension_numbers<[1], [0], [0], [1], [0, 0, 1, 1], [], []>} : vector<64x256xbf16>, vector<256x256xbf16>, vector<64x256xf32> -> vector<64x256xf32>
    %c0_50 = arith.constant 0 : index
    %c1_51 = arith.constant 1 : index
    %c0_52 = arith.constant 0 : index
    %40 = vector.load %arg12[%c0_50, %c1_51, %c0_52] : memref<4x18x256xf32, #tpu.memory_space<vmem>>, vector<4x16x256xf32>
    %41 = vector.shape_cast %40 : vector<4x16x256xf32> to vector<64x256xf32>
    %42 = arith.truncf %41 : vector<64x256xf32> to vector<64x256xbf16>
    %c1_53 = arith.constant 1 : index
    %c0_54 = arith.constant 0 : index
    %c0_55 = arith.constant 0 : index
    %43 = vector.load %arg4[%c1_53, %c0_54, %c0_55] : memref<9x256x256xbf16, #tpu.memory_space<vmem>>, vector<1x256x256xbf16>
    %44 = vector.shape_cast %43 : vector<1x256x256xbf16> to vector<256x256xbf16>
    %cst_56 = arith.constant dense<0.000000e+00> : vector<64x256xf32>
    %45 = tpu.matmul %42, %44, %cst_56 {dimension_numbers = #tpu.dot_dimension_numbers<[1], [0], [0], [1], [0, 0, 1, 1], [], []>} : vector<64x256xbf16>, vector<256x256xbf16>, vector<64x256xf32> -> vector<64x256xf32>
    %46 = arith.addf %39, %45 : vector<64x256xf32>
    %c0_57 = arith.constant 0 : index
    %c2_58 = arith.constant 2 : index
    %c0_59 = arith.constant 0 : index
    %47 = vector.load %arg12[%c0_57, %c2_58, %c0_59] : memref<4x18x256xf32, #tpu.memory_space<vmem>>, vector<4x16x256xf32>
    %48 = vector.shape_cast %47 : vector<4x16x256xf32> to vector<64x256xf32>
    %49 = arith.truncf %48 : vector<64x256xf32> to vector<64x256xbf16>
    %c2_60 = arith.constant 2 : index
    %c0_61 = arith.constant 0 : index
    %c0_62 = arith.constant 0 : index
    %50 = vector.load %arg4[%c2_60, %c0_61, %c0_62] : memref<9x256x256xbf16, #tpu.memory_space<vmem>>, vector<1x256x256xbf16>
    %51 = vector.shape_cast %50 : vector<1x256x256xbf16> to vector<256x256xbf16>
    %cst_63 = arith.constant dense<0.000000e+00> : vector<64x256xf32>
    %52 = tpu.matmul %49, %51, %cst_63 {dimension_numbers = #tpu.dot_dimension_numbers<[1], [0], [0], [1], [0, 0, 1, 1], [], []>} : vector<64x256xbf16>, vector<256x256xbf16>, vector<64x256xf32> -> vector<64x256xf32>
    %53 = arith.addf %46, %52 : vector<64x256xf32>
    %c0_64 = arith.constant 0 : index
    %c0_65 = arith.constant 0 : index
    %c0_66 = arith.constant 0 : index
    %54 = vector.load %arg5[%c0_64, %c0_65, %c0_66] : memref<3x1x256xf32, #tpu.memory_space<vmem>>, vector<1x1x256xf32>
    %55 = vector.shape_cast %54 : vector<1x1x256xf32> to vector<1x256xf32>
    %56 = vector.broadcast %55 : vector<1x256xf32> to vector<64x256xf32>
    %57 = arith.addf %53, %56 : vector<64x256xf32>
    %cst_67 = arith.constant 0.000000e+00 : f32
    %58 = vector.broadcast %cst_67 : f32 to vector<64x256xf32>
    %59 = arith.cmpf ogt, %57, %58 : vector<64x256xf32>
    %c0_68 = arith.constant 0 : index
    %c0_69 = arith.constant 0 : index
    %c0_70 = arith.constant 0 : index
    %60 = vector.load %arg6[%c0_68, %c0_69, %c0_70] : memref<3x1x256xf32, #tpu.memory_space<vmem>>, vector<1x1x256xf32>
    %61 = vector.shape_cast %60 : vector<1x1x256xf32> to vector<1x256xf32>
    %62 = vector.broadcast %61 : vector<1x256xf32> to vector<64x256xf32>
    %63 = arith.mulf %62, %57 : vector<64x256xf32>
    %64 = arith.select %59, %57, %63 : vector<64x256xi1>, vector<64x256xf32>
    %65 = vector.shape_cast %64 : vector<64x256xf32> to vector<4x16x256xf32>
    %c0_71 = arith.constant 0 : index
    %c1_72 = arith.constant 1 : index
    %c0_73 = arith.constant 0 : index
    %66 = vector.load %arg12[%c0_71, %c1_72, %c0_73] : memref<4x18x256xf32, #tpu.memory_space<vmem>>, vector<4x16x256xf32>
    tpu.vector_store %arg12[%c0_71, %c1_72, %c0_73], %65 {strides = array<i32>} : memref<4x18x256xf32, #tpu.memory_space<vmem>>, vector<4x16x256xf32>,
    %c0_74 = arith.constant 0 : index
    %c0_75 = arith.constant 0 : index
    %c0_76 = arith.constant 0 : index
    %67 = vector.load %arg12[%c0_74, %c0_75, %c0_76] : memref<4x18x256xf32, #tpu.memory_space<vmem>>, vector<4x16x256xf32>
    %68 = vector.shape_cast %67 : vector<4x16x256xf32> to vector<64x256xf32>
    %69 = arith.truncf %68 : vector<64x256xf32> to vector<64x256xbf16>
    %c3 = arith.constant 3 : index
    %c0_77 = arith.constant 0 : index
    %c0_78 = arith.constant 0 : index
    %70 = vector.load %arg4[%c3, %c0_77, %c0_78] : memref<9x256x256xbf16, #tpu.memory_space<vmem>>, vector<1x256x256xbf16>
    %71 = vector.shape_cast %70 : vector<1x256x256xbf16> to vector<256x256xbf16>
    %cst_79 = arith.constant dense<0.000000e+00> : vector<64x256xf32>
    %72 = tpu.matmul %69, %71, %cst_79 {dimension_numbers = #tpu.dot_dimension_numbers<[1], [0], [0], [1], [0, 0, 1, 1], [], []>} : vector<64x256xbf16>, vector<256x256xbf16>, vector<64x256xf32> -> vector<64x256xf32>
    %c0_80 = arith.constant 0 : index
    %c1_81 = arith.constant 1 : index
    %c0_82 = arith.constant 0 : index
    %73 = vector.load %arg12[%c0_80, %c1_81, %c0_82] : memref<4x18x256xf32, #tpu.memory_space<vmem>>, vector<4x16x256xf32>
    %74 = vector.shape_cast %73 : vector<4x16x256xf32> to vector<64x256xf32>
    %75 = arith.truncf %74 : vector<64x256xf32> to vector<64x256xbf16>
    %c4 = arith.constant 4 : index
    %c0_83 = arith.constant 0 : index
    %c0_84 = arith.constant 0 : index
    %76 = vector.load %arg4[%c4, %c0_83, %c0_84] : memref<9x256x256xbf16, #tpu.memory_space<vmem>>, vector<1x256x256xbf16>
    %77 = vector.shape_cast %76 : vector<1x256x256xbf16> to vector<256x256xbf16>
    %cst_85 = arith.constant dense<0.000000e+00> : vector<64x256xf32>
    %78 = tpu.matmul %75, %77, %cst_85 {dimension_numbers = #tpu.dot_dimension_numbers<[1], [0], [0], [1], [0, 0, 1, 1], [], []>} : vector<64x256xbf16>, vector<256x256xbf16>, vector<64x256xf32> -> vector<64x256xf32>
    %79 = arith.addf %72, %78 : vector<64x256xf32>
    %c0_86 = arith.constant 0 : index
    %c2_87 = arith.constant 2 : index
    %c0_88 = arith.constant 0 : index
    %80 = vector.load %arg12[%c0_86, %c2_87, %c0_88] : memref<4x18x256xf32, #tpu.memory_space<vmem>>, vector<4x16x256xf32>
    %81 = vector.shape_cast %80 : vector<4x16x256xf32> to vector<64x256xf32>
    %82 = arith.truncf %81 : vector<64x256xf32> to vector<64x256xbf16>
    %c5 = arith.constant 5 : index
    %c0_89 = arith.constant 0 : index
    %c0_90 = arith.constant 0 : index
    %83 = vector.load %arg4[%c5, %c0_89, %c0_90] : memref<9x256x256xbf16, #tpu.memory_space<vmem>>, vector<1x256x256xbf16>
    %84 = vector.shape_cast %83 : vector<1x256x256xbf16> to vector<256x256xbf16>
    %cst_91 = arith.constant dense<0.000000e+00> : vector<64x256xf32>
    %85 = tpu.matmul %82, %84, %cst_91 {dimension_numbers = #tpu.dot_dimension_numbers<[1], [0], [0], [1], [0, 0, 1, 1], [], []>} : vector<64x256xbf16>, vector<256x256xbf16>, vector<64x256xf32> -> vector<64x256xf32>
    %86 = arith.addf %79, %85 : vector<64x256xf32>
    %c1_92 = arith.constant 1 : index
    %c0_93 = arith.constant 0 : index
    %c0_94 = arith.constant 0 : index
    %87 = vector.load %arg5[%c1_92, %c0_93, %c0_94] : memref<3x1x256xf32, #tpu.memory_space<vmem>>, vector<1x1x256xf32>
    %88 = vector.shape_cast %87 : vector<1x1x256xf32> to vector<1x256xf32>
    %89 = vector.broadcast %88 : vector<1x256xf32> to vector<64x256xf32>
    %90 = arith.addf %86, %89 : vector<64x256xf32>
    %cst_95 = arith.constant 0.000000e+00 : f32
    %91 = vector.broadcast %cst_95 : f32 to vector<64x256xf32>
    %92 = arith.cmpf ogt, %90, %91 : vector<64x256xf32>
    %c1_96 = arith.constant 1 : index
    %c0_97 = arith.constant 0 : index
    %c0_98 = arith.constant 0 : index
    %93 = vector.load %arg6[%c1_96, %c0_97, %c0_98] : memref<3x1x256xf32, #tpu.memory_space<vmem>>, vector<1x1x256xf32>
    %94 = vector.shape_cast %93 : vector<1x1x256xf32> to vector<1x256xf32>
    %95 = vector.broadcast %94 : vector<1x256xf32> to vector<64x256xf32>
    %96 = arith.mulf %95, %90 : vector<64x256xf32>
    %97 = arith.select %92, %90, %96 : vector<64x256xi1>, vector<64x256xf32>
    %98 = vector.shape_cast %97 : vector<64x256xf32> to vector<4x16x256xf32>
    %c0_99 = arith.constant 0 : index
    %c1_100 = arith.constant 1 : index
    %c0_101 = arith.constant 0 : index
    %99 = vector.load %arg12[%c0_99, %c1_100, %c0_101] : memref<4x18x256xf32, #tpu.memory_space<vmem>>, vector<4x16x256xf32>
    tpu.vector_store %arg12[%c0_99, %c1_100, %c0_101], %98 {strides = array<i32>} : memref<4x18x256xf32, #tpu.memory_space<vmem>>, vector<4x16x256xf32>,
    %c0_102 = arith.constant 0 : index
    %c0_103 = arith.constant 0 : index
    %c0_104 = arith.constant 0 : index
    %100 = vector.load %arg12[%c0_102, %c0_103, %c0_104] : memref<4x18x256xf32, #tpu.memory_space<vmem>>, vector<4x16x256xf32>
    %101 = vector.shape_cast %100 : vector<4x16x256xf32> to vector<64x256xf32>
    %102 = arith.truncf %101 : vector<64x256xf32> to vector<64x256xbf16>
    %c6 = arith.constant 6 : index
    %c0_105 = arith.constant 0 : index
    %c0_106 = arith.constant 0 : index
    %103 = vector.load %arg4[%c6, %c0_105, %c0_106] : memref<9x256x256xbf16, #tpu.memory_space<vmem>>, vector<1x256x256xbf16>
    %104 = vector.shape_cast %103 : vector<1x256x256xbf16> to vector<256x256xbf16>
    %cst_107 = arith.constant dense<0.000000e+00> : vector<64x256xf32>
    %105 = tpu.matmul %102, %104, %cst_107 {dimension_numbers = #tpu.dot_dimension_numbers<[1], [0], [0], [1], [0, 0, 1, 1], [], []>} : vector<64x256xbf16>, vector<256x256xbf16>, vector<64x256xf32> -> vector<64x256xf32>
    %c0_108 = arith.constant 0 : index
    %c1_109 = arith.constant 1 : index
    %c0_110 = arith.constant 0 : index
    %106 = vector.load %arg12[%c0_108, %c1_109, %c0_110] : memref<4x18x256xf32, #tpu.memory_space<vmem>>, vector<4x16x256xf32>
    %107 = vector.shape_cast %106 : vector<4x16x256xf32> to vector<64x256xf32>
    %108 = arith.truncf %107 : vector<64x256xf32> to vector<64x256xbf16>
    %c7 = arith.constant 7 : index
    %c0_111 = arith.constant 0 : index
    %c0_112 = arith.constant 0 : index
    %109 = vector.load %arg4[%c7, %c0_111, %c0_112] : memref<9x256x256xbf16, #tpu.memory_space<vmem>>, vector<1x256x256xbf16>
    %110 = vector.shape_cast %109 : vector<1x256x256xbf16> to vector<256x256xbf16>
    %cst_113 = arith.constant dense<0.000000e+00> : vector<64x256xf32>
    %111 = tpu.matmul %108, %110, %cst_113 {dimension_numbers = #tpu.dot_dimension_numbers<[1], [0], [0], [1], [0, 0, 1, 1], [], []>} : vector<64x256xbf16>, vector<256x256xbf16>, vector<64x256xf32> -> vector<64x256xf32>
    %112 = arith.addf %105, %111 : vector<64x256xf32>
    %c0_114 = arith.constant 0 : index
    %c2_115 = arith.constant 2 : index
    %c0_116 = arith.constant 0 : index
    %113 = vector.load %arg12[%c0_114, %c2_115, %c0_116] : memref<4x18x256xf32, #tpu.memory_space<vmem>>, vector<4x16x256xf32>
    %114 = vector.shape_cast %113 : vector<4x16x256xf32> to vector<64x256xf32>
    %115 = arith.truncf %114 : vector<64x256xf32> to vector<64x256xbf16>
    %c8 = arith.constant 8 : index
    %c0_117 = arith.constant 0 : index
    %c0_118 = arith.constant 0 : index
    %116 = vector.load %arg4[%c8, %c0_117, %c0_118] : memref<9x256x256xbf16, #tpu.memory_space<vmem>>, vector<1x256x256xbf16>
    %117 = vector.shape_cast %116 : vector<1x256x256xbf16> to vector<256x256xbf16>
    %cst_119 = arith.constant dense<0.000000e+00> : vector<64x256xf32>
    %118 = tpu.matmul %115, %117, %cst_119 {dimension_numbers = #tpu.dot_dimension_numbers<[1], [0], [0], [1], [0, 0, 1, 1], [], []>} : vector<64x256xbf16>, vector<256x256xbf16>, vector<64x256xf32> -> vector<64x256xf32>
    %119 = arith.addf %112, %118 : vector<64x256xf32>
    %c2_120 = arith.constant 2 : index
    %c0_121 = arith.constant 0 : index
    %c0_122 = arith.constant 0 : index
    %120 = vector.load %arg5[%c2_120, %c0_121, %c0_122] : memref<3x1x256xf32, #tpu.memory_space<vmem>>, vector<1x1x256xf32>
    %121 = vector.shape_cast %120 : vector<1x1x256xf32> to vector<1x256xf32>
    %122 = vector.broadcast %121 : vector<1x256xf32> to vector<64x256xf32>
    %123 = arith.addf %119, %122 : vector<64x256xf32>
    %cst_123 = arith.constant 0.000000e+00 : f32
    %124 = vector.broadcast %cst_123 : f32 to vector<64x256xf32>
    %125 = arith.cmpf ogt, %123, %124 : vector<64x256xf32>
    %c2_124 = arith.constant 2 : index
    %c0_125 = arith.constant 0 : index
    %c0_126 = arith.constant 0 : index
    %126 = vector.load %arg6[%c2_124, %c0_125, %c0_126] : memref<3x1x256xf32, #tpu.memory_space<vmem>>, vector<1x1x256xf32>
    %127 = vector.shape_cast %126 : vector<1x1x256xf32> to vector<1x256xf32>
    %128 = vector.broadcast %127 : vector<1x256xf32> to vector<64x256xf32>
    %129 = arith.mulf %128, %123 : vector<64x256xf32>
    %130 = arith.select %125, %123, %129 : vector<64x256xi1>, vector<64x256xf32>
    %c0_127 = arith.constant 0 : index
    %c0_128 = arith.constant 0 : index
    %131 = vector.load %arg13[%c0_127, %c0_128] : memref<64x256xf32, #tpu.memory_space<vmem>>, vector<64x256xf32>
    %132 = arith.addf %130, %131 : vector<64x256xf32>
    %133 = vector.shape_cast %132 : vector<64x256xf32> to vector<4x16x256xf32>
    %c0_129 = arith.constant 0 : index
    %c1_130 = arith.constant 1 : index
    %c0_131 = arith.constant 0 : index
    %134 = vector.load %arg12[%c0_129, %c1_130, %c0_131] : memref<4x18x256xf32, #tpu.memory_space<vmem>>, vector<4x16x256xf32>
    tpu.vector_store %arg12[%c0_129, %c1_130, %c0_131], %133 {strides = array<i32>} : memref<4x18x256xf32, #tpu.memory_space<vmem>>, vector<4x16x256xf32>,
    %c0_132 = arith.constant 0 : index
    %c0_133 = arith.constant 0 : index
    %c0_134 = arith.constant 0 : index
    %135 = vector.load %arg12[%c0_132, %c0_133, %c0_134] : memref<4x18x256xf32, #tpu.memory_space<vmem>>, vector<4x16x256xf32>
    %136 = vector.shape_cast %135 : vector<4x16x256xf32> to vector<64x256xf32>
    %137 = arith.truncf %136 : vector<64x256xf32> to vector<64x256xbf16>
    %c0_135 = arith.constant 0 : index
    %c0_136 = arith.constant 0 : index
    %c0_137 = arith.constant 0 : index
    %138 = vector.load %arg7[%c0_135, %c0_136, %c0_137] : memref<3x256x256xbf16, #tpu.memory_space<vmem>>, vector<1x256x256xbf16>
    %139 = vector.shape_cast %138 : vector<1x256x256xbf16> to vector<256x256xbf16>
    %cst_138 = arith.constant dense<0.000000e+00> : vector<64x256xf32>
    %140 = tpu.matmul %137, %139, %cst_138 {dimension_numbers = #tpu.dot_dimension_numbers<[1], [0], [0], [1], [0, 0, 1, 1], [], []>} : vector<64x256xbf16>, vector<256x256xbf16>, vector<64x256xf32> -> vector<64x256xf32>
    %c0_139 = arith.constant 0 : index
    %c1_140 = arith.constant 1 : index
    %c0_141 = arith.constant 0 : index
    %141 = vector.load %arg12[%c0_139, %c1_140, %c0_141] : memref<4x18x256xf32, #tpu.memory_space<vmem>>, vector<4x16x256xf32>
    %142 = vector.shape_cast %141 : vector<4x16x256xf32> to vector<64x256xf32>
    %143 = arith.truncf %142 : vector<64x256xf32> to vector<64x256xbf16>
    %c1_142 = arith.constant 1 : index
    %c0_143 = arith.constant 0 : index
    %c0_144 = arith.constant 0 : index
    %144 = vector.load %arg7[%c1_142, %c0_143, %c0_144] : memref<3x256x256xbf16, #tpu.memory_space<vmem>>, vector<1x256x256xbf16>
    %145 = vector.shape_cast %144 : vector<1x256x256xbf16> to vector<256x256xbf16>
    %cst_145 = arith.constant dense<0.000000e+00> : vector<64x256xf32>
    %146 = tpu.matmul %143, %145, %cst_145 {dimension_numbers = #tpu.dot_dimension_numbers<[1], [0], [0], [1], [0, 0, 1, 1], [], []>} : vector<64x256xbf16>, vector<256x256xbf16>, vector<64x256xf32> -> vector<64x256xf32>
    %147 = arith.addf %140, %146 : vector<64x256xf32>
    %c0_146 = arith.constant 0 : index
    %c2_147 = arith.constant 2 : index
    %c0_148 = arith.constant 0 : index
    %148 = vector.load %arg12[%c0_146, %c2_147, %c0_148] : memref<4x18x256xf32, #tpu.memory_space<vmem>>, vector<4x16x256xf32>
    %149 = vector.shape_cast %148 : vector<4x16x256xf32> to vector<64x256xf32>
    %150 = arith.truncf %149 : vector<64x256xf32> to vector<64x256xbf16>
    %c2_149 = arith.constant 2 : index
    %c0_150 = arith.constant 0 : index
    %c0_151 = arith.constant 0 : index
    %151 = vector.load %arg7[%c2_149, %c0_150, %c0_151] : memref<3x256x256xbf16, #tpu.memory_space<vmem>>, vector<1x256x256xbf16>
    %152 = vector.shape_cast %151 : vector<1x256x256xbf16> to vector<256x256xbf16>
    %cst_152 = arith.constant dense<0.000000e+00> : vector<64x256xf32>
    %153 = tpu.matmul %150, %152, %cst_152 {dimension_numbers = #tpu.dot_dimension_numbers<[1], [0], [0], [1], [0, 0, 1, 1], [], []>} : vector<64x256xbf16>, vector<256x256xbf16>, vector<64x256xf32> -> vector<64x256xf32>
    %154 = arith.addf %147, %153 : vector<64x256xf32>
    %c0_153 = arith.constant 0 : index
    %c0_154 = arith.constant 0 : index
    %155 = vector.load %arg8[%c0_153, %c0_154] : memref<1x256xf32, #tpu.memory_space<vmem>>, vector<1x256xf32>
    %156 = vector.broadcast %155 : vector<1x256xf32> to vector<64x256xf32>
    %157 = arith.addf %154, %156 : vector<64x256xf32>
    %c0_155 = arith.constant 0 : index
    %c0_156 = arith.constant 0 : index
    %c0_157 = arith.constant 0 : index
    %158 = vector.load %arg1[%c0_155, %c0_156, %c0_157] : memref<4x16x48xf32, #tpu.memory_space<vmem>>, vector<4x16x48xf32>
    %159 = vector.shape_cast %158 : vector<4x16x48xf32> to vector<64x48xf32>
    %c0_158 = arith.constant 0 : index
    %c0_159 = arith.constant 0 : index
    %160 = vector.load %arg9[%c0_158, %c0_159] : memref<48x256xf32, #tpu.memory_space<vmem>>, vector<48x256xf32>
    %cst_160 = arith.constant dense<0.000000e+00> : vector<64x256xf32>
    %161 = tpu.matmul %159, %160, %cst_160 {dimension_numbers = #tpu.dot_dimension_numbers<[1], [0], [0], [1], [0, 0, 1, 1], [], []>} : vector<64x48xf32>, vector<48x256xf32>, vector<64x256xf32> -> vector<64x256xf32>
    %162 = arith.addf %157, %161 : vector<64x256xf32>
    %cst_161 = arith.constant 0.000000e+00 : f32
    %cst_162 = arith.constant 2.550000e+02 : f32
    %163 = vector.broadcast %cst_161 : f32 to vector<64x256xf32>
    %164 = arith.maximumf %163, %162 : vector<64x256xf32>
    %165 = vector.broadcast %cst_162 : f32 to vector<64x256xf32>
    %166 = arith.minimumf %165, %164 : vector<64x256xf32>
    %167 = vector.shape_cast %166 : vector<64x256xf32> to vector<4x16x256xf32>
    %168 = arith.truncf %167 : vector<4x16x256xf32> to vector<4x16x256xbf16>
    %c0_163 = arith.constant 0 : index
    %c0_164 = arith.constant 0 : index
    %c0_165 = arith.constant 0 : index
    %169 = vector.load %arg10[%c0_163, %c0_164, %c0_165] : memref<4x16x256xbf16, #tpu.memory_space<vmem>>, vector<4x16x256xbf16>
    tpu.vector_store %arg10[%c0_163, %c0_164, %c0_165], %168 {strides = array<i32>} : memref<4x16x256xbf16, #tpu.memory_space<vmem>>, vector<4x16x256xbf16>,
    return
  }
  func.func @transform_0(%arg0: i32) -> (i32, i32, i32) {
    %c0_i32 = arith.constant 0 : i32
    %c0_i32_0 = arith.constant 0 : i32
    %c0_i32_1 = arith.constant 0 : i32
    return %arg0, %c0_i32, %c0_i32_0 : i32, i32, i32
  }
  func.func @transform_1(%arg0: i32) -> (i32, i32, i32) {
    %c0_i32 = arith.constant 0 : i32
    %c0_i32_0 = arith.constant 0 : i32
    %c0_i32_1 = arith.constant 0 : i32
    %c0_i32_2 = arith.constant 0 : i32
    return %c0_i32, %c0_i32_0, %c0_i32_1 : i32, i32, i32
  }
  func.func @transform_2(%arg0: i32) -> (i32, i32) {
    %c0_i32 = arith.constant 0 : i32
    %c0_i32_0 = arith.constant 0 : i32
    %c0_i32_1 = arith.constant 0 : i32
    return %c0_i32, %c0_i32_0 : i32, i32
  }
  func.func @transform_3(%arg0: i32) -> (i32, i32, i32) {
    %c0_i32 = arith.constant 0 : i32
    %c0_i32_0 = arith.constant 0 : i32
    %c0_i32_1 = arith.constant 0 : i32
    %c0_i32_2 = arith.constant 0 : i32
    return %c0_i32, %c0_i32_0, %c0_i32_1 : i32, i32, i32
  }
  func.func @transform_4(%arg0: i32) -> (i32, i32, i32) {
    %c0_i32 = arith.constant 0 : i32
    %c0_i32_0 = arith.constant 0 : i32
    %c0_i32_1 = arith.constant 0 : i32
    %c0_i32_2 = arith.constant 0 : i32
    return %c0_i32, %c0_i32_0, %c0_i32_1 : i32, i32, i32
  }
  func.func @transform_5(%arg0: i32) -> (i32, i32, i32) {
    %c0_i32 = arith.constant 0 : i32
    %c0_i32_0 = arith.constant 0 : i32
    %c0_i32_1 = arith.constant 0 : i32
    %c0_i32_2 = arith.constant 0 : i32
    return %c0_i32, %c0_i32_0, %c0_i32_1 : i32, i32, i32
  }
  func.func @transform_6(%arg0: i32) -> (i32, i32, i32) {
    %c0_i32 = arith.constant 0 : i32
    %c0_i32_0 = arith.constant 0 : i32
    %c0_i32_1 = arith.constant 0 : i32
    %c0_i32_2 = arith.constant 0 : i32
    return %c0_i32, %c0_i32_0, %c0_i32_1 : i32, i32, i32
  }
  func.func @transform_7(%arg0: i32) -> (i32, i32) {
    %c0_i32 = arith.constant 0 : i32
    %c0_i32_0 = arith.constant 0 : i32
    %c0_i32_1 = arith.constant 0 : i32
    return %c0_i32, %c0_i32_0 : i32, i32
  }
  func.func @transform_8(%arg0: i32) -> (i32, i32) {
    %c0_i32 = arith.constant 0 : i32
    %c0_i32_0 = arith.constant 0 : i32
    %c0_i32_1 = arith.constant 0 : i32
    return %c0_i32, %c0_i32_0 : i32, i32
  }
  func.func @transform_9(%arg0: i32) -> (i32, i32, i32) {
    %c0_i32 = arith.constant 0 : i32
    %c0_i32_0 = arith.constant 0 : i32
    %c0_i32_1 = arith.constant 0 : i32
    return %arg0, %c0_i32, %c0_i32_0 : i32, i32, i32
  }
}

</mosaic_0001>

<llo_original>
// kernel: tpu_custom_call.1
$region0: #{tpu_custom_call.1}
  #allocation0 [shape = 'u32[]', space=smem, size = 0x4, offset = 0x4, fixed_abs, tag = 'smem constant byte address 0x4 - core index']
  #allocation1 [shape = 'u32[144,128]{1,0:T(1,128)}', space=vmem, size = 0x12000, scoped, tag = 'internal scratch']
  #allocation2 [shape = 'f32[4,18,48]{2,1,0:T(8,128)}', space=vmem, size = 0xc000, scoped, tag = 'scratch operand']
  #allocation3 [shape = 'f32[4,18,256]{2,1,0:T(8,128)}', space=vmem, size = 0x18000, scoped, tag = 'scratch operand']
  #allocation4 [shape = 'f32[64,256]{1,0:T(8,128)}', space=vmem, size = 0x10000, scoped, tag = 'scratch operand']
  %s0 = inlined_call_operand.hbm [shape: f32[4,16,48], index: 0, kind: input, shape index: {}]
  %s1 = inlined_call_operand.hbm [shape: bf16[3,48,256], index: 1, kind: input, shape index: {}]
  %s2 = inlined_call_operand.hbm [shape: f32[1,256], index: 2, kind: input, shape index: {}]
  %s3 = inlined_call_operand.hbm [shape: bf16[9,256,256], index: 3, kind: input, shape index: {}]
  %s4 = inlined_call_operand.hbm [shape: f32[3,1,256], index: 4, kind: input, shape index: {}]
  %s5 = inlined_call_operand.hbm [shape: f32[3,1,256], index: 5, kind: input, shape index: {}]
  %s6 = inlined_call_operand.hbm [shape: bf16[3,256,256], index: 6, kind: input, shape index: {}]
  %s7 = inlined_call_operand.hbm [shape: f32[1,256], index: 7, kind: input, shape index: {}]
  %s8 = inlined_call_operand.hbm [shape: f32[48,256], index: 8, kind: input, shape index: {}]
  %s9 = inlined_call_operand.hbm [shape: bf16[4,16,256], index: 9, kind: output, shape index: {}]
  %s10 = sld [smem:[#allocation0]]
  $region82: #{tpu_custom_call.1} parent=0
    _
  %s12 = ssub.s32 1, %s10
  %s13 = scalar_select 0, %s12, %s10
  $region1: #{tpu_custom_call.1} parent=0
    #allocation5 [shape = 'u8[32768]{0}', space=vmem, size = 0x8000, scoped, tag = 'input window, operand 0, single buffered']
    #allocation6 [shape = 's32[1]{0}', space=sflag, size = 0x4, scoped, tag = 'scoped memory for tpu_custom_call.1']
    #allocation7 [shape = 's32[1]{0}', space=sflag, size = 0x4, scoped, tag = 'scoped memory for tpu_custom_call.1']
    #allocation8 [shape = 'u8[73728]{0}', space=vmem, size = 0x12000, scoped, tag = 'input window, operand 1, single buffered']
    #allocation9 [shape = 's32[1]{0}', space=sflag, size = 0x4, scoped, tag = 'scoped memory for tpu_custom_call.1']
    #allocation10 [shape = 'u8[1024]{0}', space=vmem, size = 0x400, scoped, tag = 'input window, operand 2, single buffered']
    #allocation11 [shape = 'u8[1179648]{0}', space=vmem, size = 0x120000, scoped, tag = 'input window, operand 3, single buffered']
    #allocation12 [shape = 's32[1]{0}', space=sflag, size = 0x4, scoped, tag = 'scoped memory for tpu_custom_call.1']
    #allocation13 [shape = 'u8[3072]{0}', space=vmem, size = 0xc00, scoped, tag = 'input window, operand 4, single buffered']
    #allocation14 [shape = 'u8[3072]{0}', space=vmem, size = 0xc00, scoped, tag = 'input window, operand 5, single buffered']
    #allocation15 [shape = 's32[1]{0}', space=sflag, size = 0x4, scoped, tag = 'scoped memory for tpu_custom_call.1']
    #allocation16 [shape = 'u8[393216]{0}', space=vmem, size = 0x60000, scoped, tag = 'input window, operand 6, single buffered']
    #allocation17 [shape = 'u8[1024]{0}', space=vmem, size = 0x400, scoped, tag = 'input window, operand 7, single buffered']
    #allocation18 [shape = 's32[1]{0}', space=sflag, size = 0x4, scoped, tag = 'scoped memory for tpu_custom_call.1']
    #allocation19 [shape = 'u8[49152]{0}', space=vmem, size = 0xc000, scoped, tag = 'input window, operand 8, single buffered']
    #allocation20 [shape = 'u8[32768]{0}', space=vmem, size = 0x8000, scoped, tag = 'output window, operand 0, single buffered']
    %14 = vsyncpa [#allocation6], 0
    %15 = vsyncpa [#allocation9], 0
    %16 = vsyncpa [#allocation12], 0
    %17 = vsyncpa [#allocation15], 0
    %18 = vsyncpa [#allocation18], 0
    %19 = vsyncpa [#allocation7], 0
    // Predicated region
    $region2: #{tpu_custom_call.1} parent=1 // pred_check
      _
    $region3: #{tpu_custom_call.1} parent=1 // pred_check_branch
      %21 = sbr.rel (0) target = $region5
    $region4: #{tpu_custom_call.1} parent=1 // pred_region
      %s23 = ssub.s32 1024, 1024
      %24 = vsyncadd [#allocation6], %s23
      %s25 = sshll.u32 [#allocation5], 4
      %s26 = int_to_ptr.vmem [resolvable:$true] %s25
      %31 = dma.hbm_to_vmem [thread:$0]  %s0, 1024, %s26, [#allocation6], 128, 128, 8
    $region5: #{tpu_custom_call.1} parent=1 // pred_fallthru
      _
    // Predicated region
    $region6: #{tpu_custom_call.1} parent=1 // pred_check
      _
    $region7: #{tpu_custom_call.1} parent=1 // pred_check_branch
      %33 = sbr.rel (0) target = $region9
    $region8: #{tpu_custom_call.1} parent=1 // pred_region
      %s35 = ssub.s32 2304, 2304
      %36 = vsyncadd [#allocation9], %s35
      %s37 = sshll.u32 [#allocation8], 4
      %s38 = int_to_ptr.vmem [resolvable:$true] %s37
      %43 = dma.hbm_to_vmem [thread:$0]  %s1, 2304, %s38, [#allocation9], 128, 128, 8
    $region9: #{tpu_custom_call.1} parent=1 // pred_fallthru
      _
    // Predicated region
    $region10: #{tpu_custom_call.1} parent=1 // pred_check
      _
    $region11: #{tpu_custom_call.1} parent=1 // pred_check_branch
      %45 = sbr.rel (0) target = $region13
    $region12: #{tpu_custom_call.1} parent=1 // pred_region
      %s47 = ssub.s32 32, 32
      %48 = vsyncadd [#allocation9], %s47
      %s50 = sshll.u32 [#allocation10], 4
      %s51 = int_to_ptr.vmem [resolvable:$true] %s50
      %53 = dma.hbm_to_vmem [thread:$0]  %s2, 32, %s51, [#allocation9]
    $region13: #{tpu_custom_call.1} parent=1 // pred_fallthru
      _
    // Predicated region
    $region14: #{tpu_custom_call.1} parent=1 // pred_check
      _
    $region15: #{tpu_custom_call.1} parent=1 // pred_check_branch
      %55 = sbr.rel (0) target = $region17
    $region16: #{tpu_custom_call.1} parent=1 // pred_region
      %s57 = ssub.s32 36864, 36864
      %58 = vsyncadd [#allocation12], %s57
      %s59 = sshll.u32 [#allocation11], 4
      %s60 = int_to_ptr.vmem [resolvable:$true] %s59
      %65 = dma.hbm_to_vmem [thread:$0]  %s3, 36864, %s60, [#allocation12], 128, 128, 8
    $region17: #{tpu_custom_call.1} parent=1 // pred_fallthru
      _
    // Predicated region
    $region18: #{tpu_custom_call.1} parent=1 // pred_check
      _
    $region19: #{tpu_custom_call.1} parent=1 // pred_check_branch
      %67 = sbr.rel (0) target = $region21
    $region20: #{tpu_custom_call.1} parent=1 // pred_region
      %s69 = ssub.s32 96, 96
      %70 = vsyncadd [#allocation12], %s69
      %s71 = sshll.u32 [#allocation13], 4
      %s72 = int_to_ptr.vmem [resolvable:$true] %s71
      %77 = dma.hbm_to_vmem [thread:$0]  %s4, 96, %s72, [#allocation12], 32, 32, 2
    $region21: #{tpu_custom_call.1} parent=1 // pred_fallthru
      _
    // Predicated region
    $region22: #{tpu_custom_call.1} parent=1 // pred_check
      _
    $region23: #{tpu_custom_call.1} parent=1 // pred_check_branch
      %79 = sbr.rel (0) target = $region25
    $region24: #{tpu_custom_call.1} parent=1 // pred_region
      %s81 = ssub.s32 96, 96
      %82 = vsyncadd [#allocation15], %s81
      %s83 = sshll.u32 [#allocation14], 4
      %s84 = int_to_ptr.vmem [resolvable:$true] %s83
      %89 = dma.hbm_to_vmem [thread:$0]  %s5, 96, %s84, [#allocation15], 32, 32, 2
    $region25: #{tpu_custom_call.1} parent=1 // pred_fallthru
      _
    // Predicated region
    $region26: #{tpu_custom_call.1} parent=1 // pred_check
      _
    $region27: #{tpu_custom_call.1} parent=1 // pred_check_branch
      %91 = sbr.rel (0) target = $region29
    $region28: #{tpu_custom_call.1} parent=1 // pred_region
      %s93 = ssub.s32 12288, 12288
      %94 = vsyncadd [#allocation15], %s93
      %s95 = sshll.u32 [#allocation16], 4
      %s96 = int_to_ptr.vmem [resolvable:$true] %s95
      %101 = dma.hbm_to_vmem [thread:$0]  %s6, 12288, %s96, [#allocation15], 128, 128, 8
    $region29: #{tpu_custom_call.1} parent=1 // pred_fallthru
      _
    // Predicated region
    $region30: #{tpu_custom_call.1} parent=1 // pred_check
      _
    $region31: #{tpu_custom_call.1} parent=1 // pred_check_branch
      %103 = sbr.rel (0) target = $region33
    $region32: #{tpu_custom_call.1} parent=1 // pred_region
      %s105 = ssub.s32 32, 32
      %106 = vsyncadd [#allocation18], %s105
      %s108 = sshll.u32 [#allocation17], 4
      %s109 = int_to_ptr.vmem [resolvable:$true] %s108
      %111 = dma.hbm_to_vmem [thread:$0]  %s7, 32, %s109, [#allocation18]
    $region33: #{tpu_custom_call.1} parent=1 // pred_fallthru
      _
    // Predicated region
    $region34: #{tpu_custom_call.1} parent=1 // pred_check
      _
    $region35: #{tpu_custom_call.1} parent=1 // pred_check_branch
      %113 = sbr.rel (0) target = $region37
    $region36: #{tpu_custom_call.1} parent=1 // pred_region
      %s115 = ssub.s32 1536, 1536
      %116 = vsyncadd [#allocation18], %s115
      %s117 = sshll.u32 [#allocation19], 4
      %s118 = int_to_ptr.vmem [resolvable:$true] %s117
      %123 = dma.hbm_to_vmem [thread:$0]  %s8, 1536, %s118, [#allocation18], 256, 256, 16
    $region37: #{tpu_custom_call.1} parent=1 // pred_fallthru
      _
    // Predicated region
    $region38: #{tpu_custom_call.1} parent=1 // pred_check
      _
    $region39: #{tpu_custom_call.1} parent=1 // pred_check_branch
      %125 = sbr.rel (0) target = $region41
    $region40: #{tpu_custom_call.1} parent=1 // pred_region
      %126 = dma.done [#allocation6], 1024
    $region41: #{tpu_custom_call.1} parent=1 // pred_fallthru
      _
    // Predicated region
    $region42: #{tpu_custom_call.1} parent=1 // pred_check
      _
    $region43: #{tpu_custom_call.1} parent=1 // pred_check_branch
      %128 = sbr.rel (0) target = $region45
    $region44: #{tpu_custom_call.1} parent=1 // pred_region
      %129 = dma.done [#allocation9], 2304
    $region45: #{tpu_custom_call.1} parent=1 // pred_fallthru
      _
    // Predicated region
    $region46: #{tpu_custom_call.1} parent=1 // pred_check
      _
    $region47: #{tpu_custom_call.1} parent=1 // pred_check_branch
      %131 = sbr.rel (0) target = $region49
    $region48: #{tpu_custom_call.1} parent=1 // pred_region
      %132 = dma.done [#allocation9], 32
    $region49: #{tpu_custom_call.1} parent=1 // pred_fallthru
      _
    // Predicated region
    $region50: #{tpu_custom_call.1} parent=1 // pred_check
      _
    $region51: #{tpu_custom_call.1} parent=1 // pred_check_branch
      %134 = sbr.rel (0) target = $region53
    $region52: #{tpu_custom_call.1} parent=1 // pred_region
      %135 = dma.done [#allocation12], 36864
    $region53: #{tpu_custom_call.1} parent=1 // pred_fallthru
      _
    // Predicated region
    $region54: #{tpu_custom_call.1} parent=1 // pred_check
      _
    $region55: #{tpu_custom_call.1} parent=1 // pred_check_branch
      %137 = sbr.rel (0) target = $region57
    $region56: #{tpu_custom_call.1} parent=1 // pred_region
      %138 = dma.done [#allocation12], 96
    $region57: #{tpu_custom_call.1} parent=1 // pred_fallthru
      _
    // Predicated region
    $region58: #{tpu_custom_call.1} parent=1 // pred_check
      _
    $region59: #{tpu_custom_call.1} parent=1 // pred_check_branch
      %140 = sbr.rel (0) target = $region61
    $region60: #{tpu_custom_call.1} parent=1 // pred_region
      %141 = dma.done [#allocation15], 96
    $region61: #{tpu_custom_call.1} parent=1 // pred_fallthru
      _
    // Predicated region
    $region62: #{tpu_custom_call.1} parent=1 // pred_check
      _
    $region63: #{tpu_custom_call.1} parent=1 // pred_check_branch
      %143 = sbr.rel (0) target = $region65
    $region64: #{tpu_custom_call.1} parent=1 // pred_region
      %144 = dma.done [#allocation15], 12288
    $region65: #{tpu_custom_call.1} parent=1 // pred_fallthru
      _
    // Predicated region
    $region66: #{tpu_custom_call.1} parent=1 // pred_check
      _
    $region67: #{tpu_custom_call.1} parent=1 // pred_check_branch
      %146 = sbr.rel (0) target = $region69
    $region68: #{tpu_custom_call.1} parent=1 // pred_region
      %147 = dma.done [#allocation18], 32
    $region69: #{tpu_custom_call.1} parent=1 // pred_fallthru
      _
    // Predicated region
    $region70: #{tpu_custom_call.1} parent=1 // pred_check
      _
    $region71: #{tpu_custom_call.1} parent=1 // pred_check_branch
      %149 = sbr.rel (0) target = $region73
    $region72: #{tpu_custom_call.1} parent=1 // pred_region
      %150 = dma.done [#allocation18], 1536
    $region73: #{tpu_custom_call.1} parent=1 // pred_fallthru
      _
    %vm152 = vcmask 385024
    %153 = vst.msk [vmem:[#allocation2] sm:$0x1] %vm152, 0.0
    %154 = vst.msk [vmem:[#allocation2 + $0x18] sm:$0x1] %vm152, 0.0
    %155 = vst.msk [vmem:[#allocation2 + $0x30] sm:$0x1] %vm152, 0.0
    %156 = vst.msk [vmem:[#allocation2 + $0x48] sm:$0x1] %vm152, 0.0
    %157 = vst.msk [vmem:[#allocation2 + $0x11] sm:$0x1] %vm152, 0.0
    %158 = vst.msk [vmem:[#allocation2 + $0x29] sm:$0x1] %vm152, 0.0
    %159 = vst.msk [vmem:[#allocation2 + $0x41] sm:$0x1] %vm152, 0.0
    %160 = vst.msk [vmem:[#allocation2 + $0x59] sm:$0x1] %vm152, 0.0
    %v161 = vlaneseq
    %vm162 = vcmp.ge.s32.totalorder %v161, 0
    %vm163 = vcmp.lt.s32.totalorder %v161, 256
    %vm164 = vmand %vm162, %vm163
    %165 = vst.msk [vmem:[#allocation3] ss:$8 sm:$0x3] %vm164, 0.0
    %166 = vst.msk [vmem:[#allocation3] ss:$8 sm:$0x0] %vm164, 0.0
    %s167 = scalar_lea.vmem [#allocation3], 48
    %168 = vst.msk [vmem:[%s167] ss:$8 sm:$0x3] %vm164, 0.0
    %169 = vst.msk [vmem:[%s167] ss:$8 sm:$0x0] %vm164, 0.0
    %s170 = scalar_lea.vmem [#allocation3], 96
    %171 = vst.msk [vmem:[%s170] ss:$8 sm:$0x3] %vm164, 0.0
    %172 = vst.msk [vmem:[%s170] ss:$8 sm:$0x0] %vm164, 0.0
    %s173 = scalar_lea.vmem [#allocation3], 144
    %174 = vst.msk [vmem:[%s173] ss:$8 sm:$0x3] %vm164, 0.0
    %175 = vst.msk [vmem:[%s173] ss:$8 sm:$0x0] %vm164, 0.0
    %s176 = scalar_lea.vmem [#allocation3], 33
    %177 = vst.msk [vmem:[%s176] ss:$8 sm:$0x3] %vm164, 0.0
    %178 = vst.msk [vmem:[%s176] ss:$8 sm:$0x0] %vm164, 0.0
    %s179 = scalar_lea.vmem [#allocation3], 81
    %180 = vst.msk [vmem:[%s179] ss:$8 sm:$0x3] %vm164, 0.0
    %181 = vst.msk [vmem:[%s179] ss:$8 sm:$0x0] %vm164, 0.0
    %s182 = scalar_lea.vmem [#allocation3], 129
    %183 = vst.msk [vmem:[%s182] ss:$8 sm:$0x3] %vm164, 0.0
    %184 = vst.msk [vmem:[%s182] ss:$8 sm:$0x0] %vm164, 0.0
    %s185 = scalar_lea.vmem [#allocation3], 177
    %186 = vst.msk [vmem:[%s185] ss:$8 sm:$0x3] %vm164, 0.0
    %187 = vst.msk [vmem:[%s185] ss:$8 sm:$0x0] %vm164, 0.0
    %v188 = vld [vmem:[#allocation5] sm:$0xff]
    %v189 = vld [vmem:[#allocation5 + $0x8] sm:$0xff]
    %v190 = vld [vmem:[#allocation5 + $0x10] sm:$0xff]
    %v191 = vld [vmem:[#allocation5 + $0x18] sm:$0xff]
    %v192 = vld [vmem:[#allocation5 + $0x20] sm:$0xff]
    %v193 = vld [vmem:[#allocation5 + $0x28] sm:$0xff]
    %v194 = vld [vmem:[#allocation5 + $0x30] sm:$0xff]
    %v195 = vld [vmem:[#allocation5 + $0x38] sm:$0xff]
    %vm196 = vcmask 392192
    %197 = vst.msk [vmem:[#allocation2 + $0x1] sm:$0xff] %vm196, %v188
    %198 = vst.msk [vmem:[#allocation2 + $0x9] sm:$0xff] %vm196, %v189
    %199 = vst.msk [vmem:[#allocation2 + $0x19] sm:$0xff] %vm196, %v190
    %200 = vst.msk [vmem:[#allocation2 + $0x21] sm:$0xff] %vm196, %v191
    %201 = vst.msk [vmem:[#allocation2 + $0x31] sm:$0xff] %vm196, %v192
    %202 = vst.msk [vmem:[#allocation2 + $0x39] sm:$0xff] %vm196, %v193
    %203 = vst.msk [vmem:[#allocation2 + $0x49] sm:$0xff] %vm196, %v194
    %204 = vst.msk [vmem:[#allocation2 + $0x51] sm:$0xff] %vm196, %v195
    %v205 = vld [vmem:[#allocation2] sm:$0xff]
    %v206 = vld [vmem:[#allocation2 + $0x8] sm:$0xff]
    %v207 = vld [vmem:[#allocation2 + $0x18] sm:$0xff]
    %v208 = vld [vmem:[#allocation2 + $0x20] sm:$0xff]
    %v209 = vld [vmem:[#allocation2 + $0x30] sm:$0xff]
    %v210 = vld [vmem:[#allocation2 + $0x38] sm:$0xff]
    %v211 = vld [vmem:[#allocation2 + $0x48] sm:$0xff]
    %v212 = vld [vmem:[#allocation2 + $0x50] sm:$0xff]
    %v213 = vpack.c.bf16 %v206, %v205
    %v214 = vpack.c.bf16 %v208, %v207
    %v215 = vpack.c.bf16 %v210, %v209
    %v216 = vpack.c.bf16 %v212, %v211
    %v217 = vld [vmem:[#allocation8] sm:$0xff]
    %v218 = vld [vmem:[#allocation8 + $0x8] sm:$0xff]
    %v219 = vld [vmem:[#allocation8 + $0x10] sm:$0xff]
    %v220 = vld [vmem:[#allocation8 + $0x18] sm:$0xff]
    %v221 = vld [vmem:[#allocation8 + $0x20] sm:$0xff]
    %v222 = vld [vmem:[#allocation8 + $0x28] sm:$0xff]
    %v223 = vld [vmem:[#allocation2 + $0x1] sm:$0xff]
    %v224 = vld [vmem:[#allocation2 + $0x9] sm:$0xff]
    %v225 = vld [vmem:[#allocation2 + $0x19] sm:$0xff]
    %v226 = vld [vmem:[#allocation2 + $0x21] sm:$0xff]
    %v227 = vld [vmem:[#allocation2 + $0x31] sm:$0xff]
    %v228 = vld [vmem:[#allocation2 + $0x39] sm:$0xff]
    %v229 = vld [vmem:[#allocation2 + $0x49] sm:$0xff]
    %v230 = vld [vmem:[#allocation2 + $0x51] sm:$0xff]
    %v231 = vpack.c.bf16 %v224, %v223
    %v232 = vpack.c.bf16 %v226, %v225
    %v233 = vpack.c.bf16 %v228, %v227
    %v234 = vpack.c.bf16 %v230, %v229
    %s235 = scalar_lea.vmem [#allocation8], 48
    %v236 = vld [vmem:[%s235] sm:$0xff]
    %v237 = vld [vmem:[%s235 + $0x8] sm:$0xff]
    %v238 = vld [vmem:[%s235 + $0x10] sm:$0xff]
    %v239 = vld [vmem:[%s235 + $0x18] sm:$0xff]
    %v240 = vld [vmem:[%s235 + $0x20] sm:$0xff]
    %v241 = vld [vmem:[%s235 + $0x28] sm:$0xff]
    %v248 = vunpack.c.l.b16 %v236
    %v249 = vunpack.c.h.b16 %v236
    %v250 = vunpack.c.l.b16 %v237
    %v251 = vunpack.c.h.b16 %v237
    %v252 = vunpack.c.l.b16 %v238
    %v253 = vunpack.c.h.b16 %v238
    %v254 = vunpack.c.l.b16 %v239
    %v255 = vunpack.c.h.b16 %v239
    %v256 = vunpack.c.l.b16 %v240
    %v257 = vunpack.c.h.b16 %v240
    %v258 = vunpack.c.l.b16 %v241
    %v259 = vunpack.c.h.b16 %v241
    %v260 = vpack.c.b16 %v250, %v248
    %v261 = vpack.c.b16 %v251, %v249
    %v262 = vpack.c.b16 %v254, %v252
    %v263 = vpack.c.b16 %v255, %v253
    %v264 = vpack.c.b16 %v258, %v256
    %v265 = vpack.c.b16 %v259, %v257
    %v273 = vsel %vm196, %v231, 0
    %v276 = vsel %vm196, %v232, 0
    %v279 = vsel %vm196, %v233, 0
    %v282 = vsel %vm196, %v234, 0
    %284 = vmatprep.subr.bf16.mxu0 %v261
    %285 = vmatpush1.bf16.msra.mxu0 %v260
    %286 = vmatprep.subr.bf16.mxu0 %v263
    %287 = vmatpush1.bf16.msra.mxu0 %v262
    %288 = vmatprep.subr.bf16.mxu0 %v265
    %289 = vmatpush1.bf16.msra.mxu0 %v264
    %290 = vmatprep.subr.bf16.mxu0 0
    %291 = vmatpush1.bf16.msra.mxu0 0
    %292 = vmatprep.subr.bf16.mxu0 0
    %293 = vmatpush1.bf16.msra.mxu0 0
    %294 = vmatprep.subr.bf16.mxu0 0
    %295 = vmatpush1.bf16.msra.mxu0 0
    %296 = vmatprep.subr.bf16.mxu0 0
    %297 = vmatpush1.bf16.msra.mxu0 0
    %298 = vmatprep.subr.bf16.mxu0 0
    %299 = vmatpush1.bf16.msra.mxu0 0
    %300 = vmatprep.subr.bf16.mxu0 0
    %301 = vmatpush1.bf16.msra.mxu0 0
    %302 = vmatprep.subr.bf16.mxu0 0
    %303 = vmatpush1.bf16.msra.mxu0 0
    %304 = vmatprep.subr.bf16.mxu0 0
    %305 = vmatpush1.bf16.msra.mxu0 0
    %306 = vmatprep.subr.bf16.mxu0 0
    %307 = vmatpush1.bf16.msra.mxu0 0
    %308 = vmatprep.subr.bf16.mxu0 0
    %309 = vmatpush1.bf16.msra.mxu0 0
    %310 = vmatprep.subr.bf16.mxu0 0
    %311 = vmatpush1.bf16.msra.mxu0 0
    %312 = vmatprep.subr.bf16.mxu0 0
    %313 = vmatpush1.bf16.msra.mxu0 0
    %314 = vmatprep.subr.bf16.mxu0 0
    %315 = vmatpush1.bf16.msra.mxu0 0
    %316 = vmatprep.mubr.bf16.mxu0 0
    %317 = vmatmul.mubr.bf16.gmra.mrb[0].mxu0 %v273
    %v318 = vpop.f32.mrb[0].mxu0
    %v319 = vadd.f32 0.0, %v318
    %v320 = vpop.f32.mrb[0].mxu0
    %v321 = vadd.f32 0.0, %v320
    %v322 = vpop.f32.mrb[0].mxu0
    %v323 = vadd.f32 0.0, %v322
    %v324 = vpop.f32.mrb[0].mxu0
    %v325 = vadd.f32 0.0, %v324
    %326 = vmatprep.mubr.bf16.mxu0 0
    %327 = vmatmul.mubr.bf16.gmra.mrb[0].mxu0 %v276
    %v328 = vpop.f32.mrb[0].mxu0
    %v329 = vadd.f32 0.0, %v328
    %v330 = vpop.f32.mrb[0].mxu0
    %v331 = vadd.f32 0.0, %v330
    %v332 = vpop.f32.mrb[0].mxu0
    %v333 = vadd.f32 0.0, %v332
    %v334 = vpop.f32.mrb[0].mxu0
    %v335 = vadd.f32 0.0, %v334
    %336 = vmatprep.mubr.bf16.mxu0 0
    %337 = vmatmul.mubr.bf16.gmra.mrb[0].mxu0 %v279
    %v338 = vpop.f32.mrb[0].mxu0
    %v339 = vadd.f32 0.0, %v338
    %v340 = vpop.f32.mrb[0].mxu0
    %v341 = vadd.f32 0.0, %v340
    %v342 = vpop.f32.mrb[0].mxu0
    %v343 = vadd.f32 0.0, %v342
    %v344 = vpop.f32.mrb[0].mxu0
    %v345 = vadd.f32 0.0, %v344
    %346 = vmatprep.mubr.bf16.mxu0 0
    %347 = vmatmul.mubr.bf16.gmra.mrb[0].mxu0 %v282
    %v348 = vpop.f32.mrb[0].mxu0
    %v349 = vadd.f32 0.0, %v348
    %v350 = vpop.f32.mrb[0].mxu0
    %v351 = vadd.f32 0.0, %v350
    %v352 = vpop.f32.mrb[0].mxu0
    %v353 = vadd.f32 0.0, %v352
    %v354 = vpop.f32.mrb[0].mxu0
    %v355 = vadd.f32 0.0, %v354
    %356 = vdwg.mxu0
    %v363 = vunpack.c.l.b16 %v217
    %v364 = vunpack.c.h.b16 %v217
    %v365 = vunpack.c.l.b16 %v218
    %v366 = vunpack.c.h.b16 %v218
    %v367 = vunpack.c.l.b16 %v219
    %v368 = vunpack.c.h.b16 %v219
    %v369 = vunpack.c.l.b16 %v220
    %v370 = vunpack.c.h.b16 %v220
    %v371 = vunpack.c.l.b16 %v221
    %v372 = vunpack.c.h.b16 %v221
    %v373 = vunpack.c.l.b16 %v222
    %v374 = vunpack.c.h.b16 %v222
    %v375 = vpack.c.b16 %v365, %v363
    %v376 = vpack.c.b16 %v366, %v364
    %v377 = vpack.c.b16 %v369, %v367
    %v378 = vpack.c.b16 %v370, %v368
    %v379 = vpack.c.b16 %v373, %v371
    %v380 = vpack.c.b16 %v374, %v372
    %v388 = vsel %vm196, %v213, 0
    %v391 = vsel %vm196, %v214, 0
    %v394 = vsel %vm196, %v215, 0
    %v397 = vsel %vm196, %v216, 0
    %399 = vmatprep.subr.bf16.mxu0 %v376
    %400 = vmatpush1.bf16.msra.mxu0 %v375
    %401 = vmatprep.subr.bf16.mxu0 %v378
    %402 = vmatpush1.bf16.msra.mxu0 %v377
    %403 = vmatprep.subr.bf16.mxu0 %v380
    %404 = vmatpush1.bf16.msra.mxu0 %v379
    %405 = vmatprep.subr.bf16.mxu0 0
    %406 = vmatpush1.bf16.msra.mxu0 0
    %407 = vmatprep.subr.bf16.mxu0 0
    %408 = vmatpush1.bf16.msra.mxu0 0
    %409 = vmatprep.subr.bf16.mxu0 0
    %410 = vmatpush1.bf16.msra.mxu0 0
    %411 = vmatprep.subr.bf16.mxu0 0
    %412 = vmatpush1.bf16.msra.mxu0 0
    %413 = vmatprep.subr.bf16.mxu0 0
    %414 = vmatpush1.bf16.msra.mxu0 0
    %415 = vmatprep.subr.bf16.mxu0 0
    %416 = vmatpush1.bf16.msra.mxu0 0
    %417 = vmatprep.subr.bf16.mxu0 0
    %418 = vmatpush1.bf16.msra.mxu0 0
    %419 = vmatprep.subr.bf16.mxu0 0
    %420 = vmatpush1.bf16.msra.mxu0 0
    %421 = vmatprep.subr.bf16.mxu0 0
    %422 = vmatpush1.bf16.msra.mxu0 0
    %423 = vmatprep.subr.bf16.mxu0 0
    %424 = vmatpush1.bf16.msra.mxu0 0
    %425 = vmatprep.subr.bf16.mxu0 0
    %426 = vmatpush1.bf16.msra.mxu0 0
    %427 = vmatprep.subr.bf16.mxu0 0
    %428 = vmatpush1.bf16.msra.mxu0 0
    %429 = vmatprep.subr.bf16.mxu0 0
    %430 = vmatpush1.bf16.msra.mxu0 0
    %431 = vmatprep.mubr.bf16.mxu0 0
    %432 = vmatmul.mubr.bf16.gmra.mrb[0].mxu0 %v388
    %v433 = vpop.f32.mrb[0].mxu0
    %v434 = vadd.f32 %v319, %v433
    %v435 = vpop.f32.mrb[0].mxu0
    %v436 = vadd.f32 %v321, %v435
    %v437 = vpop.f32.mrb[0].mxu0
    %v438 = vadd.f32 %v323, %v437
    %v439 = vpop.f32.mrb[0].mxu0
    %v440 = vadd.f32 %v325, %v439
    %441 = vmatprep.mubr.bf16.mxu0 0
    %442 = vmatmul.mubr.bf16.gmra.mrb[0].mxu0 %v391
    %v443 = vpop.f32.mrb[0].mxu0
    %v444 = vadd.f32 %v329, %v443
    %v445 = vpop.f32.mrb[0].mxu0
    %v446 = vadd.f32 %v331, %v445
    %v447 = vpop.f32.mrb[0].mxu0
    %v448 = vadd.f32 %v333, %v447
    %v449 = vpop.f32.mrb[0].mxu0
    %v450 = vadd.f32 %v335, %v449
    %451 = vmatprep.mubr.bf16.mxu0 0
    %452 = vmatmul.mubr.bf16.gmra.mrb[0].mxu0 %v394
    %v453 = vpop.f32.mrb[0].mxu0
    %v454 = vadd.f32 %v339, %v453
    %v455 = vpop.f32.mrb[0].mxu0
    %v456 = vadd.f32 %v341, %v455
    %v457 = vpop.f32.mrb[0].mxu0
    %v458 = vadd.f32 %v343, %v457
    %v459 = vpop.f32.mrb[0].mxu0
    %v460 = vadd.f32 %v345, %v459
    %461 = vmatprep.mubr.bf16.mxu0 0
    %462 = vmatmul.mubr.bf16.gmra.mrb[0].mxu0 %v397
    %v463 = vpop.f32.mrb[0].mxu0
    %v464 = vadd.f32 %v349, %v463
    %v465 = vpop.f32.mrb[0].mxu0
    %v466 = vadd.f32 %v351, %v465
    %v467 = vpop.f32.mrb[0].mxu0
    %v468 = vadd.f32 %v353, %v467
    %v469 = vpop.f32.mrb[0].mxu0
    %v470 = vadd.f32 %v355, %v469
    %471 = vdwg.mxu0
    %v472 = vld [vmem:[#allocation2 + $0x2] sm:$0xff]
    %v473 = vld [vmem:[#allocation2 + $0xa] sm:$0xff]
    %v474 = vld [vmem:[#allocation2 + $0x1a] sm:$0xff]
    %v475 = vld [vmem:[#allocation2 + $0x22] sm:$0xff]
    %v476 = vld [vmem:[#allocation2 + $0x32] sm:$0xff]
    %v477 = vld [vmem:[#allocation2 + $0x3a] sm:$0xff]
    %v478 = vld [vmem:[#allocation2 + $0x4a] sm:$0xff]
    %v479 = vld [vmem:[#allocation2 + $0x52] sm:$0xff]
    %v480 = vpack.c.bf16 %v473, %v472
    %v481 = vpack.c.bf16 %v475, %v474
    %v482 = vpack.c.bf16 %v477, %v476
    %v483 = vpack.c.bf16 %v479, %v478
    %s484 = scalar_lea.vmem [#allocation8], 96
    %v485 = vld [vmem:[%s484] sm:$0xff]
    %v486 = vld [vmem:[%s484 + $0x8] sm:$0xff]
    %v487 = vld [vmem:[%s484 + $0x10] sm:$0xff]
    %v488 = vld [vmem:[%s484 + $0x18] sm:$0xff]
    %v489 = vld [vmem:[%s484 + $0x20] sm:$0xff]
    %v490 = vld [vmem:[%s484 + $0x28] sm:$0xff]
    %v497 = vunpack.c.l.b16 %v485
    %v498 = vunpack.c.h.b16 %v485
    %v499 = vunpack.c.l.b16 %v486
    %v500 = vunpack.c.h.b16 %v486
    %v501 = vunpack.c.l.b16 %v487
    %v502 = vunpack.c.h.b16 %v487
    %v503 = vunpack.c.l.b16 %v488
    %v504 = vunpack.c.h.b16 %v488
    %v505 = vunpack.c.l.b16 %v489
    %v506 = vunpack.c.h.b16 %v489
    %v507 = vunpack.c.l.b16 %v490
    %v508 = vunpack.c.h.b16 %v490
    %v509 = vpack.c.b16 %v499, %v497
    %v510 = vpack.c.b16 %v500, %v498
    %v511 = vpack.c.b16 %v503, %v501
    %v512 = vpack.c.b16 %v504, %v502
    %v513 = vpack.c.b16 %v507, %v505
    %v514 = vpack.c.b16 %v508, %v506
    %v522 = vsel %vm196, %v480, 0
    %v525 = vsel %vm196, %v481, 0
    %v528 = vsel %vm196, %v482, 0
    %v531 = vsel %vm196, %v483, 0
    %533 = vmatprep.subr.bf16.mxu0 %v510
    %534 = vmatpush1.bf16.msra.mxu0 %v509
    %535 = vmatprep.subr.bf16.mxu0 %v512
    %536 = vmatpush1.bf16.msra.mxu0 %v511
    %537 = vmatprep.subr.bf16.mxu0 %v514
    %538 = vmatpush1.bf16.msra.mxu0 %v513
    %539 = vmatprep.subr.bf16.mxu0 0
    %540 = vmatpush1.bf16.msra.mxu0 0
    %541 = vmatprep.subr.bf16.mxu0 0
    %542 = vmatpush1.bf16.msra.mxu0 0
    %543 = vmatprep.subr.bf16.mxu0 0
    %544 = vmatpush1.bf16.msra.mxu0 0
    %545 = vmatprep.subr.bf16.mxu0 0
    %546 = vmatpush1.bf16.msra.mxu0 0
    %547 = vmatprep.subr.bf16.mxu0 0
    %548 = vmatpush1.bf16.msra.mxu0 0
    %549 = vmatprep.subr.bf16.mxu0 0
    %550 = vmatpush1.bf16.msra.mxu0 0
    %551 = vmatprep.subr.bf16.mxu0 0
    %552 = vmatpush1.bf16.msra.mxu0 0
    %553 = vmatprep.subr.bf16.mxu0 0
    %554 = vmatpush1.bf16.msra.mxu0 0
    %555 = vmatprep.subr.bf16.mxu0 0
    %556 = vmatpush1.bf16.msra.mxu0 0
    %557 = vmatprep.subr.bf16.mxu0 0
    %558 = vmatpush1.bf16.msra.mxu0 0
    %559 = vmatprep.subr.bf16.mxu0 0
    %560 = vmatpush1.bf16.msra.mxu0 0
    %561 = vmatprep.subr.bf16.mxu0 0
    %562 = vmatpush1.bf16.msra.mxu0 0
    %563 = vmatprep.subr.bf16.mxu0 0
    %564 = vmatpush1.bf16.msra.mxu0 0
    %565 = vmatprep.mubr.bf16.mxu0 0
    %566 = vmatmul.mubr.bf16.gmra.mrb[0].mxu0 %v522
    %v567 = vpop.f32.mrb[0].mxu0
    %v568 = vadd.f32 0.0, %v567
    %v569 = vpop.f32.mrb[0].mxu0
    %v570 = vadd.f32 0.0, %v569
    %v571 = vpop.f32.mrb[0].mxu0
    %v572 = vadd.f32 0.0, %v571
    %v573 = vpop.f32.mrb[0].mxu0
    %v574 = vadd.f32 0.0, %v573
    %575 = vmatprep.mubr.bf16.mxu0 0
    %576 = vmatmul.mubr.bf16.gmra.mrb[0].mxu0 %v525
    %v577 = vpop.f32.mrb[0].mxu0
    %v578 = vadd.f32 0.0, %v577
    %v579 = vpop.f32.mrb[0].mxu0
    %v580 = vadd.f32 0.0, %v579
    %v581 = vpop.f32.mrb[0].mxu0
    %v582 = vadd.f32 0.0, %v581
    %v583 = vpop.f32.mrb[0].mxu0
    %v584 = vadd.f32 0.0, %v583
    %585 = vmatprep.mubr.bf16.mxu0 0
    %586 = vmatmul.mubr.bf16.gmra.mrb[0].mxu0 %v528
    %v587 = vpop.f32.mrb[0].mxu0
    %v588 = vadd.f32 0.0, %v587
    %v589 = vpop.f32.mrb[0].mxu0
    %v590 = vadd.f32 0.0, %v589
    %v591 = vpop.f32.mrb[0].mxu0
    %v592 = vadd.f32 0.0, %v591
    %v593 = vpop.f32.mrb[0].mxu0
    %v594 = vadd.f32 0.0, %v593
    %595 = vmatprep.mubr.bf16.mxu0 0
    %596 = vmatmul.mubr.bf16.gmra.mrb[0].mxu0 %v531
    %v597 = vpop.f32.mrb[0].mxu0
    %v598 = vadd.f32 0.0, %v597
    %v599 = vpop.f32.mrb[0].mxu0
    %v600 = vadd.f32 0.0, %v599
    %v601 = vpop.f32.mrb[0].mxu0
    %v602 = vadd.f32 0.0, %v601
    %v603 = vpop.f32.mrb[0].mxu0
    %v604 = vadd.f32 0.0, %v603
    %605 = vdwg.mxu0
    %v606 = vadd.f32 %v434, %v568
    %v607 = vadd.f32 %v436, %v570
    %v608 = vadd.f32 %v438, %v572
    %v609 = vadd.f32 %v440, %v574
    %v610 = vadd.f32 %v444, %v578
    %v611 = vadd.f32 %v446, %v580
    %v612 = vadd.f32 %v448, %v582
    %v613 = vadd.f32 %v450, %v584
    %v614 = vadd.f32 %v454, %v588
    %v615 = vadd.f32 %v456, %v590
    %v616 = vadd.f32 %v458, %v592
    %v617 = vadd.f32 %v460, %v594
    %v618 = vadd.f32 %v464, %v598
    %v619 = vadd.f32 %v466, %v600
    %v620 = vadd.f32 %v468, %v602
    %v621 = vadd.f32 %v470, %v604
    %v622 = vld [vmem:[#allocation10] sm:$0x3]
    %v624 = vlaneseq
    %v625 = vshrl.u32 %v624, 7
    %v626 = vsub.s32 0, %v625
    %v627 = vrot.slane %v622, %v626
    %v628 = vlaneseq
    %v629 = vshrl.u32 %v628, 7
    %v630 = vsub.s32 1, %v629
    %v631 = vrot.slane %v622, %v630
    %v634 = vadd.f32 %v606, %v627
    %v635 = vadd.f32 %v607, %v631
    %v636 = vadd.f32 %v608, %v627
    %v637 = vadd.f32 %v609, %v631
    %v638 = vadd.f32 %v610, %v627
    %v639 = vadd.f32 %v611, %v631
    %v640 = vadd.f32 %v612, %v627
    %v641 = vadd.f32 %v613, %v631
    %v642 = vadd.f32 %v614, %v627
    %v643 = vadd.f32 %v615, %v631
    %v644 = vadd.f32 %v616, %v627
    %v645 = vadd.f32 %v617, %v631
    %v646 = vadd.f32 %v618, %v627
    %v647 = vadd.f32 %v619, %v631
    %v648 = vadd.f32 %v620, %v627
    %v649 = vadd.f32 %v621, %v631
    %650 = vst [vmem:[#allocation4] sm:$0xff] %v634
    %651 = vst [vmem:[#allocation4 + $0x8] sm:$0xff] %v635
    %652 = vst [vmem:[#allocation4 + $0x10] sm:$0xff] %v636
    %653 = vst [vmem:[#allocation4 + $0x18] sm:$0xff] %v637
    %654 = vst [vmem:[#allocation4 + $0x20] sm:$0xff] %v638
    %655 = vst [vmem:[#allocation4 + $0x28] sm:$0xff] %v639
    %656 = vst [vmem:[#allocation4 + $0x30] sm:$0xff] %v640
    %657 = vst [vmem:[#allocation4 + $0x38] sm:$0xff] %v641
    %658 = vst [vmem:[#allocation4 + $0x40] sm:$0xff] %v642
    %659 = vst [vmem:[#allocation4 + $0x48] sm:$0xff] %v643
    %660 = vst [vmem:[#allocation4 + $0x50] sm:$0xff] %v644
    %661 = vst [vmem:[#allocation4 + $0x58] sm:$0xff] %v645
    %662 = vst [vmem:[#allocation4 + $0x60] sm:$0xff] %v646
    %663 = vst [vmem:[#allocation4 + $0x68] sm:$0xff] %v647
    %664 = vst [vmem:[#allocation4 + $0x70] sm:$0xff] %v648
    %665 = vst [vmem:[#allocation4 + $0x78] sm:$0xff] %v649
    %vm682 = vcmask 1040384
    %v683 = vrot.slane %v634, 7
    %v684 = vrot.slane %v635, 7
    %v685 = vrot.slane %v636, 7
    %v686 = vsel %vm682, %v683, %v685
    %v687 = vrot.slane %v637, 7
    %v688 = vsel %vm682, %v684, %v687
    %v689 = vrot.slane %v638, 7
    %v690 = vrot.slane %v639, 7
    %v691 = vrot.slane %v640, 7
    %v692 = vsel %vm682, %v689, %v691
    %v693 = vrot.slane %v641, 7
    %v694 = vsel %vm682, %v690, %v693
    %v695 = vrot.slane %v642, 7
    %v696 = vrot.slane %v643, 7
    %v697 = vrot.slane %v644, 7
    %v698 = vsel %vm682, %v695, %v697
    %v699 = vrot.slane %v645, 7
    %v700 = vsel %vm682, %v696, %v699
    %v701 = vrot.slane %v646, 7
    %v702 = vrot.slane %v647, 7
    %v703 = vrot.slane %v648, 7
    %v704 = vsel %vm682, %v701, %v703
    %v705 = vrot.slane %v649, 7
    %v706 = vsel %vm682, %v702, %v705
    %731 = vst [vmem:[#allocation3] sm:$0xfe] %v683
    %732 = vst [vmem:[#allocation3 + $0x8] sm:$0xfe] %v684
    %733 = vst [vmem:[#allocation3 + $0x10] sm:$0xff] %v686
    %734 = vst [vmem:[#allocation3 + $0x18] sm:$0xff] %v688
    %735 = vst [vmem:[#allocation3 + $0x20] sm:$0x1] %v685
    %736 = vst [vmem:[#allocation3 + $0x28] sm:$0x1] %v687
    %737 = vst [vmem:[#allocation3 + $0x30] sm:$0xfe] %v689
    %738 = vst [vmem:[#allocation3 + $0x38] sm:$0xfe] %v690
    %739 = vst [vmem:[#allocation3 + $0x40] sm:$0xff] %v692
    %740 = vst [vmem:[#allocation3 + $0x48] sm:$0xff] %v694
    %741 = vst [vmem:[#allocation3 + $0x50] sm:$0x1] %v691
    %742 = vst [vmem:[#allocation3 + $0x58] sm:$0x1] %v693
    %743 = vst [vmem:[#allocation3 + $0x60] sm:$0xfe] %v695
    %744 = vst [vmem:[#allocation3 + $0x68] sm:$0xfe] %v696
    %745 = vst [vmem:[#allocation3 + $0x70] sm:$0xff] %v698
    %746 = vst [vmem:[#allocation3 + $0x78] sm:$0xff] %v700
    %747 = vst [vmem:[#allocation3 + $0x80] sm:$0x1] %v697
    %748 = vst [vmem:[#allocation3 + $0x88] sm:$0x1] %v699
    %749 = vst [vmem:[#allocation3 + $0x90] sm:$0xfe] %v701
    %750 = vst [vmem:[#allocation3 + $0x98] sm:$0xfe] %v702
    %751 = vst [vmem:[#allocation3 + $0xa0] sm:$0xff] %v704
    %752 = vst [vmem:[#allocation3 + $0xa8] sm:$0xff] %v706
    %753 = vst [vmem:[#allocation3 + $0xb0] sm:$0x1] %v703
    %754 = vst [vmem:[#allocation3 + $0xb8] sm:$0x1] %v705
    %v755 = vld [vmem:[#allocation3] sm:$0xff]
    %v756 = vld [vmem:[#allocation3 + $0x8] sm:$0xff]
    %v757 = vld [vmem:[#allocation3 + $0x10] sm:$0xff]
    %v758 = vld [vmem:[#allocation3 + $0x18] sm:$0xff]
    %v759 = vld [vmem:[#allocation3 + $0x30] sm:$0xff]
    %v760 = vld [vmem:[#allocation3 + $0x38] sm:$0xff]
    %v761 = vld [vmem:[#allocation3 + $0x40] sm:$0xff]
    %v762 = vld [vmem:[#allocation3 + $0x48] sm:$0xff]
    %v763 = vld [vmem:[#allocation3 + $0x60] sm:$0xff]
    %v764 = vld [vmem:[#allocation3 + $0x68] sm:$0xff]
    %v765 = vld [vmem:[#allocation3 + $0x70] sm:$0xff]
    %v766 = vld [vmem:[#allocation3 + $0x78] sm:$0xff]
    %v767 = vld [vmem:[#allocation3 + $0x90] sm:$0xff]
    %v768 = vld [vmem:[#allocation3 + $0x98] sm:$0xff]
    %v769 = vld [vmem:[#allocation3 + $0xa0] sm:$0xff]
    %v770 = vld [vmem:[#allocation3 + $0xa8] sm:$0xff]
    %v771 = vpack.c.bf16 %v757, %v755
    %v772 = vpack.c.bf16 %v758, %v756
    %v773 = vpack.c.bf16 %v761, %v759
    %v774 = vpack.c.bf16 %v762, %v760
    %v775 = vpack.c.bf16 %v765, %v763
    %v776 = vpack.c.bf16 %v766, %v764
    %v777 = vpack.c.bf16 %v769, %v767
    %v778 = vpack.c.bf16 %v770, %v768
    %v779 = vld [vmem:[#allocation11] sm:$0xff]
    %v780 = vld [vmem:[#allocation11 + $0x8] sm:$0xff]
    %v781 = vld [vmem:[#allocation11 + $0x10] sm:$0xff]
    %v782 = vld [vmem:[#allocation11 + $0x18] sm:$0xff]
    %v783 = vld [vmem:[#allocation11 + $0x20] sm:$0xff]
    %v784 = vld [vmem:[#allocation11 + $0x28] sm:$0xff]
    %v785 = vld [vmem:[#allocation11 + $0x30] sm:$0xff]
    %v786 = vld [vmem:[#allocation11 + $0x38] sm:$0xff]
    %v787 = vld [vmem:[#allocation11 + $0x40] sm:$0xff]
    %v788 = vld [vmem:[#allocation11 + $0x48] sm:$0xff]
    %v789 = vld [vmem:[#allocation11 + $0x50] sm:$0xff]
    %v790 = vld [vmem:[#allocation11 + $0x58] sm:$0xff]
    %v791 = vld [vmem:[#allocation11 + $0x60] sm:$0xff]
    %v792 = vld [vmem:[#allocation11 + $0x68] sm:$0xff]
    %v793 = vld [vmem:[#allocation11 + $0x70] sm:$0xff]
    %v794 = vld [vmem:[#allocation11 + $0x78] sm:$0xff]
    %v795 = vld [vmem:[#allocation11 + $0x80] sm:$0xff]
    %v796 = vld [vmem:[#allocation11 + $0x88] sm:$0xff]
    %v797 = vld [vmem:[#allocation11 + $0x90] sm:$0xff]
    %v798 = vld [vmem:[#allocation11 + $0x98] sm:$0xff]
    %v799 = vld [vmem:[#allocation11 + $0xa0] sm:$0xff]
    %v800 = vld [vmem:[#allocation11 + $0xa8] sm:$0xff]
    %v801 = vld [vmem:[#allocation11 + $0xb0] sm:$0xff]
    %v802 = vld [vmem:[#allocation11 + $0xb8] sm:$0xff]
    %v803 = vld [vmem:[#allocation11 + $0xc0] sm:$0xff]
    %v804 = vld [vmem:[#allocation11 + $0xc8] sm:$0xff]
    %v805 = vld [vmem:[#allocation11 + $0xd0] sm:$0xff]
    %v806 = vld [vmem:[#allocation11 + $0xd8] sm:$0xff]
    %v807 = vld [vmem:[#allocation11 + $0xe0] sm:$0xff]
    %v808 = vld [vmem:[#allocation11 + $0xe8] sm:$0xff]
    %v809 = vld [vmem:[#allocation11 + $0xf0] sm:$0xff]
    %v810 = vld [vmem:[#allocation11 + $0xf8] sm:$0xff]
    %v811 = vld [vmem:[#allocation3] sm:$0xfe]
    %v812 = vld [vmem:[#allocation3 + $0x8] sm:$0xfe]
    %v813 = vld [vmem:[#allocation3 + $0x20] sm:$0x1]
    %v814 = vld [vmem:[#allocation3 + $0x28] sm:$0x1]
    %v815 = vld [vmem:[#allocation3 + $0x30] sm:$0xfe]
    %v816 = vld [vmem:[#allocation3 + $0x38] sm:$0xfe]
    %v817 = vld [vmem:[#allocation3 + $0x50] sm:$0x1]
    %v818 = vld [vmem:[#allocation3 + $0x58] sm:$0x1]
    %v819 = vld [vmem:[#allocation3 + $0x60] sm:$0xfe]
    %v820 = vld [vmem:[#allocation3 + $0x68] sm:$0xfe]
    %v821 = vld [vmem:[#allocation3 + $0x80] sm:$0x1]
    %v822 = vld [vmem:[#allocation3 + $0x88] sm:$0x1]
    %v823 = vld [vmem:[#allocation3 + $0x90] sm:$0xfe]
    %v824 = vld [vmem:[#allocation3 + $0x98] sm:$0xfe]
    %v825 = vld [vmem:[#allocation3 + $0xb0] sm:$0x1]
    %v826 = vld [vmem:[#allocation3 + $0xb8] sm:$0x1]
    %vm851 = vcmask 1046528
    %v852 = vrot.slane %v811, 1
    %v853 = vrot.slane %v757, 1
    %v854 = vsel %vm851, %v852, %v853
    %v855 = vrot.slane %v812, 1
    %v856 = vrot.slane %v758, 1
    %v857 = vsel %vm851, %v855, %v856
    %v858 = vrot.slane %v813, 1
    %v859 = vsel %vm851, %v853, %v858
    %v860 = vrot.slane %v814, 1
    %v861 = vsel %vm851, %v856, %v860
    %v862 = vrot.slane %v815, 1
    %v863 = vrot.slane %v761, 1
    %v864 = vsel %vm851, %v862, %v863
    %v865 = vrot.slane %v816, 1
    %v866 = vrot.slane %v762, 1
    %v867 = vsel %vm851, %v865, %v866
    %v868 = vrot.slane %v817, 1
    %v869 = vsel %vm851, %v863, %v868
    %v870 = vrot.slane %v818, 1
    %v871 = vsel %vm851, %v866, %v870
    %v872 = vrot.slane %v819, 1
    %v873 = vrot.slane %v765, 1
    %v874 = vsel %vm851, %v872, %v873
    %v875 = vrot.slane %v820, 1
    %v876 = vrot.slane %v766, 1
    %v877 = vsel %vm851, %v875, %v876
    %v878 = vrot.slane %v821, 1
    %v879 = vsel %vm851, %v873, %v878
    %v880 = vrot.slane %v822, 1
    %v881 = vsel %vm851, %v876, %v880
    %v882 = vrot.slane %v823, 1
    %v883 = vrot.slane %v769, 1
    %v884 = vsel %vm851, %v882, %v883
    %v885 = vrot.slane %v824, 1
    %v886 = vrot.slane %v770, 1
    %v887 = vsel %vm851, %v885, %v886
    %v888 = vrot.slane %v825, 1
    %v889 = vsel %vm851, %v883, %v888
    %v890 = vrot.slane %v826, 1
    %v891 = vsel %vm851, %v886, %v890
    %v908 = vpack.c.bf16 %v859, %v854
    %v909 = vpack.c.bf16 %v861, %v857
    %v910 = vpack.c.bf16 %v869, %v864
    %v911 = vpack.c.bf16 %v871, %v867
    %v912 = vpack.c.bf16 %v879, %v874
    %v913 = vpack.c.bf16 %v881, %v877
    %v914 = vpack.c.bf16 %v889, %v884
    %v915 = vpack.c.bf16 %v891, %v887
    %s916 = scalar_lea.vmem [#allocation11], 256
    %v917 = vld [vmem:[%s916] sm:$0xff]
    %v918 = vld [vmem:[%s916 + $0x8] sm:$0xff]
    %v919 = vld [vmem:[%s916 + $0x10] sm:$0xff]
    %v920 = vld [vmem:[%s916 + $0x18] sm:$0xff]
    %v921 = vld [vmem:[%s916 + $0x20] sm:$0xff]
    %v922 = vld [vmem:[%s916 + $0x28] sm:$0xff]
    %v923 = vld [vmem:[%s916 + $0x30] sm:$0xff]
    %v924 = vld [vmem:[%s916 + $0x38] sm:$0xff]
    %v925 = vld [vmem:[%s916 + $0x40] sm:$0xff]
    %v926 = vld [vmem:[%s916 + $0x48] sm:$0xff]
    %v927 = vld [vmem:[%s916 + $0x50] sm:$0xff]
    %v928 = vld [vmem:[%s916 + $0x58] sm:$0xff]
    %v929 = vld [vmem:[%s916 + $0x60] sm:$0xff]
    %v930 = vld [vmem:[%s916 + $0x68] sm:$0xff]
    %v931 = vld [vmem:[%s916 + $0x70] sm:$0xff]
    %v932 = vld [vmem:[%s916 + $0x78] sm:$0xff]
    %v933 = vld [vmem:[%s916 + $0x80] sm:$0xff]
    %v934 = vld [vmem:[%s916 + $0x88] sm:$0xff]
    %v935 = vld [vmem:[%s916 + $0x90] sm:$0xff]
    %v936 = vld [vmem:[%s916 + $0x98] sm:$0xff]
    %v937 = vld [vmem:[%s916 + $0xa0] sm:$0xff]
    %v938 = vld [vmem:[%s916 + $0xa8] sm:$0xff]
    %v939 = vld [vmem:[%s916 + $0xb0] sm:$0xff]
    %v940 = vld [vmem:[%s916 + $0xb8] sm:$0xff]
    %v941 = vld [vmem:[%s916 + $0xc0] sm:$0xff]
    %v942 = vld [vmem:[%s916 + $0xc8] sm:$0xff]
    %v943 = vld [vmem:[%s916 + $0xd0] sm:$0xff]
    %v944 = vld [vmem:[%s916 + $0xd8] sm:$0xff]
    %v945 = vld [vmem:[%s916 + $0xe0] sm:$0xff]
    %v946 = vld [vmem:[%s916 + $0xe8] sm:$0xff]
    %v947 = vld [vmem:[%s916 + $0xf0] sm:$0xff]
    %v948 = vld [vmem:[%s916 + $0xf8] sm:$0xff]
    %v981 = vunpack.c.l.b16 %v917
    %v982 = vunpack.c.h.b16 %v917
    %v983 = vunpack.c.l.b16 %v918
    %v984 = vunpack.c.h.b16 %v918
    %v985 = vunpack.c.l.b16 %v919
    %v986 = vunpack.c.h.b16 %v919
    %v987 = vunpack.c.l.b16 %v920
    %v988 = vunpack.c.h.b16 %v920
    %v989 = vunpack.c.l.b16 %v921
    %v990 = vunpack.c.h.b16 %v921
    %v991 = vunpack.c.l.b16 %v922
    %v992 = vunpack.c.h.b16 %v922
    %v993 = vunpack.c.l.b16 %v923
    %v994 = vunpack.c.h.b16 %v923
    %v995 = vunpack.c.l.b16 %v924
    %v996 = vunpack.c.h.b16 %v924
    %v997 = vunpack.c.l.b16 %v925
    %v998 = vunpack.c.h.b16 %v925
    %v999 = vunpack.c.l.b16 %v926
    %v1000 = vunpack.c.h.b16 %v926
    %v1001 = vunpack.c.l.b16 %v927
    %v1002 = vunpack.c.h.b16 %v927
    %v1003 = vunpack.c.l.b16 %v928
    %v1004 = vunpack.c.h.b16 %v928
    %v1005 = vunpack.c.l.b16 %v929
    %v1006 = vunpack.c.h.b16 %v929
    %v1007 = vunpack.c.l.b16 %v930
    %v1008 = vunpack.c.h.b16 %v930
    %v1009 = vunpack.c.l.b16 %v931
    %v1010 = vunpack.c.h.b16 %v931
    %v1011 = vunpack.c.l.b16 %v932
    %v1012 = vunpack.c.h.b16 %v932
    %v1013 = vunpack.c.l.b16 %v933
    %v1014 = vunpack.c.h.b16 %v933
    %v1015 = vunpack.c.l.b16 %v934
    %v1016 = vunpack.c.h.b16 %v934
    %v1017 = vunpack.c.l.b16 %v935
    %v1018 = vunpack.c.h.b16 %v935
    %v1019 = vunpack.c.l.b16 %v936
    %v1020 = vunpack.c.h.b16 %v936
    %v1021 = vunpack.c.l.b16 %v937
    %v1022 = vunpack.c.h.b16 %v937
    %v1023 = vunpack.c.l.b16 %v938
    %v1024 = vunpack.c.h.b16 %v938
    %v1025 = vunpack.c.l.b16 %v939
    %v1026 = vunpack.c.h.b16 %v939
    %v1027 = vunpack.c.l.b16 %v940
    %v1028 = vunpack.c.h.b16 %v940
    %v1029 = vunpack.c.l.b16 %v941
    %v1030 = vunpack.c.h.b16 %v941
    %v1031 = vunpack.c.l.b16 %v942
    %v1032 = vunpack.c.h.b16 %v942
    %v1033 = vunpack.c.l.b16 %v943
    %v1034 = vunpack.c.h.b16 %v943
    %v1035 = vunpack.c.l.b16 %v944
    %v1036 = vunpack.c.h.b16 %v944
    %v1037 = vunpack.c.l.b16 %v945
    %v1038 = vunpack.c.h.b16 %v945
    %v1039 = vunpack.c.l.b16 %v946
    %v1040 = vunpack.c.h.b16 %v946
    %v1041 = vunpack.c.l.b16 %v947
    %v1042 = vunpack.c.h.b16 %v947
    %v1043 = vunpack.c.l.b16 %v948
    %v1044 = vunpack.c.h.b16 %v948
    %v1045 = vpack.c.b16 %v983, %v981
    %v1046 = vpack.c.b16 %v984, %v982
    %v1047 = vpack.c.b16 %v987, %v985
    %v1048 = vpack.c.b16 %v988, %v986
    %v1049 = vpack.c.b16 %v991, %v989
    %v1050 = vpack.c.b16 %v992, %v990
    %v1051 = vpack.c.b16 %v995, %v993
    %v1052 = vpack.c.b16 %v996, %v994
    %v1053 = vpack.c.b16 %v999, %v997
    %v1054 = vpack.c.b16 %v1000, %v998
    %v1055 = vpack.c.b16 %v1003, %v1001
    %v1056 = vpack.c.b16 %v1004, %v1002
    %v1057 = vpack.c.b16 %v1007, %v1005
    %v1058 = vpack.c.b16 %v1008, %v1006
    %v1059 = vpack.c.b16 %v1011, %v1009
    %v1060 = vpack.c.b16 %v1012, %v1010
    %v1061 = vpack.c.b16 %v1015, %v1013
    %v1062 = vpack.c.b16 %v1016, %v1014
    %v1063 = vpack.c.b16 %v1019, %v1017
    %v1064 = vpack.c.b16 %v1020, %v1018
    %v1065 = vpack.c.b16 %v1023, %v1021
    %v1066 = vpack.c.b16 %v1024, %v1022
    %v1067 = vpack.c.b16 %v1027, %v1025
    %v1068 = vpack.c.b16 %v1028, %v1026
    %v1069 = vpack.c.b16 %v1031, %v1029
    %v1070 = vpack.c.b16 %v1032, %v1030
    %v1071 = vpack.c.b16 %v1035, %v1033
    %v1072 = vpack.c.b16 %v1036, %v1034
    %v1073 = vpack.c.b16 %v1039, %v1037
    %v1074 = vpack.c.b16 %v1040, %v1038
    %v1075 = vpack.c.b16 %v1043, %v1041
    %v1076 = vpack.c.b16 %v1044, %v1042
    %1109 = vmatprep.subr.bf16.mxu0 %v1046
    %1110 = vmatpush1.bf16.msra.mxu0 %v1045
    %1111 = vmatprep.subr.bf16.mxu0 %v1048
    %1112 = vmatpush1.bf16.msra.mxu0 %v1047
    %1113 = vmatprep.subr.bf16.mxu0 %v1050
    %1114 = vmatpush1.bf16.msra.mxu0 %v1049
    %1115 = vmatprep.subr.bf16.mxu0 %v1052
    %1116 = vmatpush1.bf16.msra.mxu0 %v1051
    %1117 = vmatprep.subr.bf16.mxu0 %v1054
    %1118 = vmatpush1.bf16.msra.mxu0 %v1053
    %1119 = vmatprep.subr.bf16.mxu0 %v1056
    %1120 = vmatpush1.bf16.msra.mxu0 %v1055
    %1121 = vmatprep.subr.bf16.mxu0 %v1058
    %1122 = vmatpush1.bf16.msra.mxu0 %v1057
    %1123 = vmatprep.subr.bf16.mxu0 %v1060
    %1124 = vmatpush1.bf16.msra.mxu0 %v1059
    %1125 = vmatprep.subr.bf16.mxu0 %v1062
    %1126 = vmatpush1.bf16.msra.mxu0 %v1061
    %1127 = vmatprep.subr.bf16.mxu0 %v1064
    %1128 = vmatpush1.bf16.msra.mxu0 %v1063
    %1129 = vmatprep.subr.bf16.mxu0 %v1066
    %1130 = vmatpush1.bf16.msra.mxu0 %v1065
    %1131 = vmatprep.subr.bf16.mxu0 %v1068
    %1132 = vmatpush1.bf16.msra.mxu0 %v1067
    %1133 = vmatprep.subr.bf16.mxu0 %v1070
    %1134 = vmatpush1.bf16.msra.mxu0 %v1069
    %1135 = vmatprep.subr.bf16.mxu0 %v1072
    %1136 = vmatpush1.bf16.msra.mxu0 %v1071
    %1137 = vmatprep.subr.bf16.mxu0 %v1074
    %1138 = vmatpush1.bf16.msra.mxu0 %v1073
    %1139 = vmatprep.subr.bf16.mxu0 %v1076
    %1140 = vmatpush1.bf16.msra.mxu0 %v1075
    %1141 = vmatprep.mubr.bf16.mxu0 %v909
    %1142 = vmatmul.mubr.bf16.gmra.mrb[0].mxu0 %v908
    %v1143 = vpop.f32.mrb[0].mxu0
    %v1144 = vadd.f32 0.0, %v1143
    %v1145 = vpop.f32.mrb[0].mxu0
    %v1146 = vadd.f32 0.0, %v1145
    %v1147 = vpop.f32.mrb[0].mxu0
    %v1148 = vadd.f32 0.0, %v1147
    %v1149 = vpop.f32.mrb[0].mxu0
    %v1150 = vadd.f32 0.0, %v1149
    %1151 = vmatprep.mubr.bf16.mxu0 %v911
    %1152 = vmatmul.mubr.bf16.gmra.mrb[0].mxu0 %v910
    %v1153 = vpop.f32.mrb[0].mxu0
    %v1154 = vadd.f32 0.0, %v1153
    %v1155 = vpop.f32.mrb[0].mxu0
    %v1156 = vadd.f32 0.0, %v1155
    %v1157 = vpop.f32.mrb[0].mxu0
    %v1158 = vadd.f32 0.0, %v1157
    %v1159 = vpop.f32.mrb[0].mxu0
    %v1160 = vadd.f32 0.0, %v1159
    %1161 = vmatprep.mubr.bf16.mxu0 %v913
    %1162 = vmatmul.mubr.bf16.gmra.mrb[0].mxu0 %v912
    %v1163 = vpop.f32.mrb[0].mxu0
    %v1164 = vadd.f32 0.0, %v1163
    %v1165 = vpop.f32.mrb[0].mxu0
    %v1166 = vadd.f32 0.0, %v1165
    %v1167 = vpop.f32.mrb[0].mxu0
    %v1168 = vadd.f32 0.0, %v1167
    %v1169 = vpop.f32.mrb[0].mxu0
    %v1170 = vadd.f32 0.0, %v1169
    %1171 = vmatprep.mubr.bf16.mxu0 %v915
    %1172 = vmatmul.mubr.bf16.gmra.mrb[0].mxu0 %v914
    %v1173 = vpop.f32.mrb[0].mxu0
    %v1174 = vadd.f32 0.0, %v1173
    %v1175 = vpop.f32.mrb[0].mxu0
    %v1176 = vadd.f32 0.0, %v1175
    %v1177 = vpop.f32.mrb[0].mxu0
    %v1178 = vadd.f32 0.0, %v1177
    %v1179 = vpop.f32.mrb[0].mxu0
    %v1180 = vadd.f32 0.0, %v1179
    %1181 = vdwg.mxu0
    %v1214 = vunpack.c.l.b16 %v779
    %v1215 = vunpack.c.h.b16 %v779
    %v1216 = vunpack.c.l.b16 %v780
    %v1217 = vunpack.c.h.b16 %v780
    %v1218 = vunpack.c.l.b16 %v781
    %v1219 = vunpack.c.h.b16 %v781
    %v1220 = vunpack.c.l.b16 %v782
    %v1221 = vunpack.c.h.b16 %v782
    %v1222 = vunpack.c.l.b16 %v783
    %v1223 = vunpack.c.h.b16 %v783
    %v1224 = vunpack.c.l.b16 %v784
    %v1225 = vunpack.c.h.b16 %v784
    %v1226 = vunpack.c.l.b16 %v785
    %v1227 = vunpack.c.h.b16 %v785
    %v1228 = vunpack.c.l.b16 %v786
    %v1229 = vunpack.c.h.b16 %v786
    %v1230 = vunpack.c.l.b16 %v787
    %v1231 = vunpack.c.h.b16 %v787
    %v1232 = vunpack.c.l.b16 %v788
    %v1233 = vunpack.c.h.b16 %v788
    %v1234 = vunpack.c.l.b16 %v789
    %v1235 = vunpack.c.h.b16 %v789
    %v1236 = vunpack.c.l.b16 %v790
    %v1237 = vunpack.c.h.b16 %v790
    %v1238 = vunpack.c.l.b16 %v791
    %v1239 = vunpack.c.h.b16 %v791
    %v1240 = vunpack.c.l.b16 %v792
    %v1241 = vunpack.c.h.b16 %v792
    %v1242 = vunpack.c.l.b16 %v793
    %v1243 = vunpack.c.h.b16 %v793
    %v1244 = vunpack.c.l.b16 %v794
    %v1245 = vunpack.c.h.b16 %v794
    %v1246 = vunpack.c.l.b16 %v795
    %v1247 = vunpack.c.h.b16 %v795
    %v1248 = vunpack.c.l.b16 %v796
    %v1249 = vunpack.c.h.b16 %v796
    %v1250 = vunpack.c.l.b16 %v797
    %v1251 = vunpack.c.h.b16 %v797
    %v1252 = vunpack.c.l.b16 %v798
    %v1253 = vunpack.c.h.b16 %v798
    %v1254 = vunpack.c.l.b16 %v799
    %v1255 = vunpack.c.h.b16 %v799
    %v1256 = vunpack.c.l.b16 %v800
    %v1257 = vunpack.c.h.b16 %v800
    %v1258 = vunpack.c.l.b16 %v801
    %v1259 = vunpack.c.h.b16 %v801
    %v1260 = vunpack.c.l.b16 %v802
    %v1261 = vunpack.c.h.b16 %v802
    %v1262 = vunpack.c.l.b16 %v803
    %v1263 = vunpack.c.h.b16 %v803
    %v1264 = vunpack.c.l.b16 %v804
    %v1265 = vunpack.c.h.b16 %v804
    %v1266 = vunpack.c.l.b16 %v805
    %v1267 = vunpack.c.h.b16 %v805
    %v1268 = vunpack.c.l.b16 %v806
    %v1269 = vunpack.c.h.b16 %v806
    %v1270 = vunpack.c.l.b16 %v807
    %v1271 = vunpack.c.h.b16 %v807
    %v1272 = vunpack.c.l.b16 %v808
    %v1273 = vunpack.c.h.b16 %v808
    %v1274 = vunpack.c.l.b16 %v809
    %v1275 = vunpack.c.h.b16 %v809
    %v1276 = vunpack.c.l.b16 %v810
    %v1277 = vunpack.c.h.b16 %v810
    %v1278 = vpack.c.b16 %v1216, %v1214
    %v1279 = vpack.c.b16 %v1217, %v1215
    %v1280 = vpack.c.b16 %v1220, %v1218
    %v1281 = vpack.c.b16 %v1221, %v1219
    %v1282 = vpack.c.b16 %v1224, %v1222
    %v1283 = vpack.c.b16 %v1225, %v1223
    %v1284 = vpack.c.b16 %v1228, %v1226
    %v1285 = vpack.c.b16 %v1229, %v1227
    %v1286 = vpack.c.b16 %v1232, %v1230
    %v1287 = vpack.c.b16 %v1233, %v1231
    %v1288 = vpack.c.b16 %v1236, %v1234
    %v1289 = vpack.c.b16 %v1237, %v1235
    %v1290 = vpack.c.b16 %v1240, %v1238
    %v1291 = vpack.c.b16 %v1241, %v1239
    %v1292 = vpack.c.b16 %v1244, %v1242
    %v1293 = vpack.c.b16 %v1245, %v1243
    %v1294 = vpack.c.b16 %v1248, %v1246
    %v1295 = vpack.c.b16 %v1249, %v1247
    %v1296 = vpack.c.b16 %v1252, %v1250
    %v1297 = vpack.c.b16 %v1253, %v1251
    %v1298 = vpack.c.b16 %v1256, %v1254
    %v1299 = vpack.c.b16 %v1257, %v1255
    %v1300 = vpack.c.b16 %v1260, %v1258
    %v1301 = vpack.c.b16 %v1261, %v1259
    %v1302 = vpack.c.b16 %v1264, %v1262
    %v1303 = vpack.c.b16 %v1265, %v1263
    %v1304 = vpack.c.b16 %v1268, %v1266
    %v1305 = vpack.c.b16 %v1269, %v1267
    %v1306 = vpack.c.b16 %v1272, %v1270
    %v1307 = vpack.c.b16 %v1273, %v1271
    %v1308 = vpack.c.b16 %v1276, %v1274
    %v1309 = vpack.c.b16 %v1277, %v1275
    %1342 = vmatprep.subr.bf16.mxu0 %v1279
    %1343 = vmatpush1.bf16.msra.mxu0 %v1278
    %1344 = vmatprep.subr.bf16.mxu0 %v1281
    %1345 = vmatpush1.bf16.msra.mxu0 %v1280
    %1346 = vmatprep.subr.bf16.mxu0 %v1283
    %1347 = vmatpush1.bf16.msra.mxu0 %v1282
    %1348 = vmatprep.subr.bf16.mxu0 %v1285
    %1349 = vmatpush1.bf16.msra.mxu0 %v1284
    %1350 = vmatprep.subr.bf16.mxu0 %v1287
    %1351 = vmatpush1.bf16.msra.mxu0 %v1286
    %1352 = vmatprep.subr.bf16.mxu0 %v1289
    %1353 = vmatpush1.bf16.msra.mxu0 %v1288
    %1354 = vmatprep.subr.bf16.mxu0 %v1291
    %1355 = vmatpush1.bf16.msra.mxu0 %v1290
    %1356 = vmatprep.subr.bf16.mxu0 %v1293
    %1357 = vmatpush1.bf16.msra.mxu0 %v1292
    %1358 = vmatprep.subr.bf16.mxu0 %v1295
    %1359 = vmatpush1.bf16.msra.mxu0 %v1294
    %1360 = vmatprep.subr.bf16.mxu0 %v1297
    %1361 = vmatpush1.bf16.msra.mxu0 %v1296
    %1362 = vmatprep.subr.bf16.mxu0 %v1299
    %1363 = vmatpush1.bf16.msra.mxu0 %v1298
    %1364 = vmatprep.subr.bf16.mxu0 %v1301
    %1365 = vmatpush1.bf16.msra.mxu0 %v1300
    %1366 = vmatprep.subr.bf16.mxu0 %v1303
    %1367 = vmatpush1.bf16.msra.mxu0 %v1302
    %1368 = vmatprep.subr.bf16.mxu0 %v1305
    %1369 = vmatpush1.bf16.msra.mxu0 %v1304
    %1370 = vmatprep.subr.bf16.mxu0 %v1307
    %1371 = vmatpush1.bf16.msra.mxu0 %v1306
    %1372 = vmatprep.subr.bf16.mxu0 %v1309
    %1373 = vmatpush1.bf16.msra.mxu0 %v1308
    %1374 = vmatprep.mubr.bf16.mxu0 %v772
    %1375 = vmatmul.mubr.bf16.gmra.mrb[0].mxu0 %v771
    %v1376 = vpop.f32.mrb[0].mxu0
    %v1377 = vadd.f32 %v1144, %v1376
    %v1378 = vpop.f32.mrb[0].mxu0
    %v1379 = vadd.f32 %v1146, %v1378
    %v1380 = vpop.f32.mrb[0].mxu0
    %v1381 = vadd.f32 %v1148, %v1380
    %v1382 = vpop.f32.mrb[0].mxu0
    %v1383 = vadd.f32 %v1150, %v1382
    %1384 = vmatprep.mubr.bf16.mxu0 %v774
    %1385 = vmatmul.mubr.bf16.gmra.mrb[0].mxu0 %v773
    %v1386 = vpop.f32.mrb[0].mxu0
    %v1387 = vadd.f32 %v1154, %v1386
    %v1388 = vpop.f32.mrb[0].mxu0
    %v1389 = vadd.f32 %v1156, %v1388
    %v1390 = vpop.f32.mrb[0].mxu0
    %v1391 = vadd.f32 %v1158, %v1390
    %v1392 = vpop.f32.mrb[0].mxu0
    %v1393 = vadd.f32 %v1160, %v1392
    %1394 = vmatprep.mubr.bf16.mxu0 %v776
    %1395 = vmatmul.mubr.bf16.gmra.mrb[0].mxu0 %v775
    %v1396 = vpop.f32.mrb[0].mxu0
    %v1397 = vadd.f32 %v1164, %v1396
    %v1398 = vpop.f32.mrb[0].mxu0
    %v1399 = vadd.f32 %v1166, %v1398
    %v1400 = vpop.f32.mrb[0].mxu0
    %v1401 = vadd.f32 %v1168, %v1400
    %v1402 = vpop.f32.mrb[0].mxu0
    %v1403 = vadd.f32 %v1170, %v1402
    %1404 = vmatprep.mubr.bf16.mxu0 %v778
    %1405 = vmatmul.mubr.bf16.gmra.mrb[0].mxu0 %v777
    %v1406 = vpop.f32.mrb[0].mxu0
    %v1407 = vadd.f32 %v1174, %v1406
    %v1408 = vpop.f32.mrb[0].mxu0
    %v1409 = vadd.f32 %v1176, %v1408
    %v1410 = vpop.f32.mrb[0].mxu0
    %v1411 = vadd.f32 %v1178, %v1410
    %v1412 = vpop.f32.mrb[0].mxu0
    %v1413 = vadd.f32 %v1180, %v1412
    %1414 = vdwg.mxu0
    %v1415 = vld [vmem:[#allocation3] sm:$0xfc]
    %v1416 = vld [vmem:[#allocation3 + $0x8] sm:$0xfc]
    %v1417 = vld [vmem:[#allocation3 + $0x20] sm:$0x3]
    %v1418 = vld [vmem:[#allocation3 + $0x28] sm:$0x3]
    %v1419 = vld [vmem:[#allocation3 + $0x30] sm:$0xfc]
    %v1420 = vld [vmem:[#allocation3 + $0x38] sm:$0xfc]
    %v1421 = vld [vmem:[#allocation3 + $0x50] sm:$0x3]
    %v1422 = vld [vmem:[#allocation3 + $0x58] sm:$0x3]
    %v1423 = vld [vmem:[#allocation3 + $0x60] sm:$0xfc]
    %v1424 = vld [vmem:[#allocation3 + $0x68] sm:$0xfc]
    %v1425 = vld [vmem:[#allocation3 + $0x80] sm:$0x3]
    %v1426 = vld [vmem:[#allocation3 + $0x88] sm:$0x3]
    %v1427 = vld [vmem:[#allocation3 + $0x90] sm:$0xfc]
    %v1428 = vld [vmem:[#allocation3 + $0x98] sm:$0xfc]
    %v1429 = vld [vmem:[#allocation3 + $0xb0] sm:$0x3]
    %v1430 = vld [vmem:[#allocation3 + $0xb8] sm:$0x3]
    %vm1447 = vcmask 1045504
    %v1448 = vrot.slane %v1415, 2
    %v1449 = vrot.slane %v757, 2
    %v1450 = vsel %vm1447, %v1448, %v1449
    %v1451 = vrot.slane %v1416, 2
    %v1452 = vrot.slane %v758, 2
    %v1453 = vsel %vm1447, %v1451, %v1452
    %v1454 = vrot.slane %v1417, 2
    %v1455 = vsel %vm1447, %v1449, %v1454
    %v1456 = vrot.slane %v1418, 2
    %v1457 = vsel %vm1447, %v1452, %v1456
    %v1458 = vrot.slane %v1419, 2
    %v1459 = vrot.slane %v761, 2
    %v1460 = vsel %vm1447, %v1458, %v1459
    %v1461 = vrot.slane %v1420, 2
    %v1462 = vrot.slane %v762, 2
    %v1463 = vsel %vm1447, %v1461, %v1462
    %v1464 = vrot.slane %v1421, 2
    %v1465 = vsel %vm1447, %v1459, %v1464
    %v1466 = vrot.slane %v1422, 2
    %v1467 = vsel %vm1447, %v1462, %v1466
    %v1468 = vrot.slane %v1423, 2
    %v1469 = vrot.slane %v765, 2
    %v1470 = vsel %vm1447, %v1468, %v1469
    %v1471 = vrot.slane %v1424, 2
    %v1472 = vrot.slane %v766, 2
    %v1473 = vsel %vm1447, %v1471, %v1472
    %v1474 = vrot.slane %v1425, 2
    %v1475 = vsel %vm1447, %v1469, %v1474
    %v1476 = vrot.slane %v1426, 2
    %v1477 = vsel %vm1447, %v1472, %v1476
    %v1478 = vrot.slane %v1427, 2
    %v1479 = vrot.slane %v769, 2
    %v1480 = vsel %vm1447, %v1478, %v1479
    %v1481 = vrot.slane %v1428, 2
    %v1482 = vrot.slane %v770, 2
    %v1483 = vsel %vm1447, %v1481, %v1482
    %v1484 = vrot.slane %v1429, 2
    %v1485 = vsel %vm1447, %v1479, %v1484
    %v1486 = vrot.slane %v1430, 2
    %v1487 = vsel %vm1447, %v1482, %v1486
    %v1504 = vpack.c.bf16 %v1455, %v1450
    %v1505 = vpack.c.bf16 %v1457, %v1453
    %v1506 = vpack.c.bf16 %v1465, %v1460
    %v1507 = vpack.c.bf16 %v1467, %v1463
    %v1508 = vpack.c.bf16 %v1475, %v1470
    %v1509 = vpack.c.bf16 %v1477, %v1473
    %v1510 = vpack.c.bf16 %v1485, %v1480
    %v1511 = vpack.c.bf16 %v1487, %v1483
    %s1512 = scalar_lea.vmem [#allocation11], 512
    %v1513 = vld [vmem:[%s1512] sm:$0xff]
    %v1514 = vld [vmem:[%s1512 + $0x8] sm:$0xff]
    %v1515 = vld [vmem:[%s1512 + $0x10] sm:$0xff]
    %v1516 = vld [vmem:[%s1512 + $0x18] sm:$0xff]
    %v1517 = vld [vmem:[%s1512 + $0x20] sm:$0xff]
    %v1518 = vld [vmem:[%s1512 + $0x28] sm:$0xff]
    %v1519 = vld [vmem:[%s1512 + $0x30] sm:$0xff]
    %v1520 = vld [vmem:[%s1512 + $0x38] sm:$0xff]
    %v1521 = vld [vmem:[%s1512 + $0x40] sm:$0xff]
    %v1522 = vld [vmem:[%s1512 + $0x48] sm:$0xff]
    %v1523 = vld [vmem:[%s1512 + $0x50] sm:$0xff]
    %v1524 = vld [vmem:[%s1512 + $0x58] sm:$0xff]
    %v1525 = vld [vmem:[%s1512 + $0x60] sm:$0xff]
    %v1526 = vld [vmem:[%s1512 + $0x68] sm:$0xff]
    %v1527 = vld [vmem:[%s1512 + $0x70] sm:$0xff]
    %v1528 = vld [vmem:[%s1512 + $0x78] sm:$0xff]
    %v1529 = vld [vmem:[%s1512 + $0x80] sm:$0xff]
    %v1530 = vld [vmem:[%s1512 + $0x88] sm:$0xff]
    %v1531 = vld [vmem:[%s1512 + $0x90] sm:$0xff]
    %v1532 = vld [vmem:[%s1512 + $0x98] sm:$0xff]
    %v1533 = vld [vmem:[%s1512 + $0xa0] sm:$0xff]
    %v1534 = vld [vmem:[%s1512 + $0xa8] sm:$0xff]
    %v1535 = vld [vmem:[%s1512 + $0xb0] sm:$0xff]
    %v1536 = vld [vmem:[%s1512 + $0xb8] sm:$0xff]
    %v1537 = vld [vmem:[%s1512 + $0xc0] sm:$0xff]
    %v1538 = vld [vmem:[%s1512 + $0xc8] sm:$0xff]
    %v1539 = vld [vmem:[%s1512 + $0xd0] sm:$0xff]
    %v1540 = vld [vmem:[%s1512 + $0xd8] sm:$0xff]
    %v1541 = vld [vmem:[%s1512 + $0xe0] sm:$0xff]
    %v1542 = vld [vmem:[%s1512 + $0xe8] sm:$0xff]
    %v1543 = vld [vmem:[%s1512 + $0xf0] sm:$0xff]
    %v1544 = vld [vmem:[%s1512 + $0xf8] sm:$0xff]
    %v1577 = vunpack.c.l.b16 %v1513
    %v1578 = vunpack.c.h.b16 %v1513
    %v1579 = vunpack.c.l.b16 %v1514
    %v1580 = vunpack.c.h.b16 %v1514
    %v1581 = vunpack.c.l.b16 %v1515
    %v1582 = vunpack.c.h.b16 %v1515
    %v1583 = vunpack.c.l.b16 %v1516
    %v1584 = vunpack.c.h.b16 %v1516
    %v1585 = vunpack.c.l.b16 %v1517
    %v1586 = vunpack.c.h.b16 %v1517
    %v1587 = vunpack.c.l.b16 %v1518
    %v1588 = vunpack.c.h.b16 %v1518
    %v1589 = vunpack.c.l.b16 %v1519
    %v1590 = vunpack.c.h.b16 %v1519
    %v1591 = vunpack.c.l.b16 %v1520
    %v1592 = vunpack.c.h.b16 %v1520
    %v1593 = vunpack.c.l.b16 %v1521
    %v1594 = vunpack.c.h.b16 %v1521
    %v1595 = vunpack.c.l.b16 %v1522
    %v1596 = vunpack.c.h.b16 %v1522
    %v1597 = vunpack.c.l.b16 %v1523
    %v1598 = vunpack.c.h.b16 %v1523
    %v1599 = vunpack.c.l.b16 %v1524
    %v1600 = vunpack.c.h.b16 %v1524
    %v1601 = vunpack.c.l.b16 %v1525
    %v1602 = vunpack.c.h.b16 %v1525
    %v1603 = vunpack.c.l.b16 %v1526
    %v1604 = vunpack.c.h.b16 %v1526
    %v1605 = vunpack.c.l.b16 %v1527
    %v1606 = vunpack.c.h.b16 %v1527
    %v1607 = vunpack.c.l.b16 %v1528
    %v1608 = vunpack.c.h.b16 %v1528
    %v1609 = vunpack.c.l.b16 %v1529
    %v1610 = vunpack.c.h.b16 %v1529
    %v1611 = vunpack.c.l.b16 %v1530
    %v1612 = vunpack.c.h.b16 %v1530
    %v1613 = vunpack.c.l.b16 %v1531
    %v1614 = vunpack.c.h.b16 %v1531
    %v1615 = vunpack.c.l.b16 %v1532
    %v1616 = vunpack.c.h.b16 %v1532
    %v1617 = vunpack.c.l.b16 %v1533
    %v1618 = vunpack.c.h.b16 %v1533
    %v1619 = vunpack.c.l.b16 %v1534
    %v1620 = vunpack.c.h.b16 %v1534
    %v1621 = vunpack.c.l.b16 %v1535
    %v1622 = vunpack.c.h.b16 %v1535
    %v1623 = vunpack.c.l.b16 %v1536
    %v1624 = vunpack.c.h.b16 %v1536
    %v1625 = vunpack.c.l.b16 %v1537
    %v1626 = vunpack.c.h.b16 %v1537
    %v1627 = vunpack.c.l.b16 %v1538
    %v1628 = vunpack.c.h.b16 %v1538
    %v1629 = vunpack.c.l.b16 %v1539
    %v1630 = vunpack.c.h.b16 %v1539
    %v1631 = vunpack.c.l.b16 %v1540
    %v1632 = vunpack.c.h.b16 %v1540
    %v1633 = vunpack.c.l.b16 %v1541
    %v1634 = vunpack.c.h.b16 %v1541
    %v1635 = vunpack.c.l.b16 %v1542
    %v1636 = vunpack.c.h.b16 %v1542
    %v1637 = vunpack.c.l.b16 %v1543
    %v1638 = vunpack.c.h.b16 %v1543
    %v1639 = vunpack.c.l.b16 %v1544
    %v1640 = vunpack.c.h.b16 %v1544
    %v1641 = vpack.c.b16 %v1579, %v1577
    %v1642 = vpack.c.b16 %v1580, %v1578
    %v1643 = vpack.c.b16 %v1583, %v1581
    %v1644 = vpack.c.b16 %v1584, %v1582
    %v1645 = vpack.c.b16 %v1587, %v1585
    %v1646 = vpack.c.b16 %v1588, %v1586
    %v1647 = vpack.c.b16 %v1591, %v1589
    %v1648 = vpack.c.b16 %v1592, %v1590
    %v1649 = vpack.c.b16 %v1595, %v1593
    %v1650 = vpack.c.b16 %v1596, %v1594
    %v1651 = vpack.c.b16 %v1599, %v1597
    %v1652 = vpack.c.b16 %v1600, %v1598
    %v1653 = vpack.c.b16 %v1603, %v1601
    %v1654 = vpack.c.b16 %v1604, %v1602
    %v1655 = vpack.c.b16 %v1607, %v1605
    %v1656 = vpack.c.b16 %v1608, %v1606
    %v1657 = vpack.c.b16 %v1611, %v1609
    %v1658 = vpack.c.b16 %v1612, %v1610
    %v1659 = vpack.c.b16 %v1615, %v1613
    %v1660 = vpack.c.b16 %v1616, %v1614
    %v1661 = vpack.c.b16 %v1619, %v1617
    %v1662 = vpack.c.b16 %v1620, %v1618
    %v1663 = vpack.c.b16 %v1623, %v1621
    %v1664 = vpack.c.b16 %v1624, %v1622
    %v1665 = vpack.c.b16 %v1627, %v1625
    %v1666 = vpack.c.b16 %v1628, %v1626
    %v1667 = vpack.c.b16 %v1631, %v1629
    %v1668 = vpack.c.b16 %v1632, %v1630
    %v1669 = vpack.c.b16 %v1635, %v1633
    %v1670 = vpack.c.b16 %v1636, %v1634
    %v1671 = vpack.c.b16 %v1639, %v1637
    %v1672 = vpack.c.b16 %v1640, %v1638
    %1705 = vmatprep.subr.bf16.mxu0 %v1642
    %1706 = vmatpush1.bf16.msra.mxu0 %v1641
    %1707 = vmatprep.subr.bf16.mxu0 %v1644
    %1708 = vmatpush1.bf16.msra.mxu0 %v1643
    %1709 = vmatprep.subr.bf16.mxu0 %v1646
    %1710 = vmatpush1.bf16.msra.mxu0 %v1645
    %1711 = vmatprep.subr.bf16.mxu0 %v1648
    %1712 = vmatpush1.bf16.msra.mxu0 %v1647
    %1713 = vmatprep.subr.bf16.mxu0 %v1650
    %1714 = vmatpush1.bf16.msra.mxu0 %v1649
    %1715 = vmatprep.subr.bf16.mxu0 %v1652
    %1716 = vmatpush1.bf16.msra.mxu0 %v1651
    %1717 = vmatprep.subr.bf16.mxu0 %v1654
    %1718 = vmatpush1.bf16.msra.mxu0 %v1653
    %1719 = vmatprep.subr.bf16.mxu0 %v1656
    %1720 = vmatpush1.bf16.msra.mxu0 %v1655
    %1721 = vmatprep.subr.bf16.mxu0 %v1658
    %1722 = vmatpush1.bf16.msra.mxu0 %v1657
    %1723 = vmatprep.subr.bf16.mxu0 %v1660
    %1724 = vmatpush1.bf16.msra.mxu0 %v1659
    %1725 = vmatprep.subr.bf16.mxu0 %v1662
    %1726 = vmatpush1.bf16.msra.mxu0 %v1661
    %1727 = vmatprep.subr.bf16.mxu0 %v1664
    %1728 = vmatpush1.bf16.msra.mxu0 %v1663
    %1729 = vmatprep.subr.bf16.mxu0 %v1666
    %1730 = vmatpush1.bf16.msra.mxu0 %v1665
    %1731 = vmatprep.subr.bf16.mxu0 %v1668
    %1732 = vmatpush1.bf16.msra.mxu0 %v1667
    %1733 = vmatprep.subr.bf16.mxu0 %v1670
    %1734 = vmatpush1.bf16.msra.mxu0 %v1669
    %1735 = vmatprep.subr.bf16.mxu0 %v1672
    %1736 = vmatpush1.bf16.msra.mxu0 %v1671
    %1737 = vmatprep.mubr.bf16.mxu0 %v1505
    %1738 = vmatmul.mubr.bf16.gmra.mrb[0].mxu0 %v1504
    %v1739 = vpop.f32.mrb[0].mxu0
    %v1740 = vadd.f32 0.0, %v1739
    %v1741 = vpop.f32.mrb[0].mxu0
    %v1742 = vadd.f32 0.0, %v1741
    %v1743 = vpop.f32.mrb[0].mxu0
    %v1744 = vadd.f32 0.0, %v1743
    %v1745 = vpop.f32.mrb[0].mxu0
    %v1746 = vadd.f32 0.0, %v1745
    %1747 = vmatprep.mubr.bf16.mxu0 %v1507
    %1748 = vmatmul.mubr.bf16.gmra.mrb[0].mxu0 %v1506
    %v1749 = vpop.f32.mrb[0].mxu0
    %v1750 = vadd.f32 0.0, %v1749
    %v1751 = vpop.f32.mrb[0].mxu0
    %v1752 = vadd.f32 0.0, %v1751
    %v1753 = vpop.f32.mrb[0].mxu0
    %v1754 = vadd.f32 0.0, %v1753
    %v1755 = vpop.f32.mrb[0].mxu0
    %v1756 = vadd.f32 0.0, %v1755
    %1757 = vmatprep.mubr.bf16.mxu0 %v1509
    %1758 = vmatmul.mubr.bf16.gmra.mrb[0].mxu0 %v1508
    %v1759 = vpop.f32.mrb[0].mxu0
    %v1760 = vadd.f32 0.0, %v1759
    %v1761 = vpop.f32.mrb[0].mxu0
    %v1762 = vadd.f32 0.0, %v1761
    %v1763 = vpop.f32.mrb[0].mxu0
    %v1764 = vadd.f32 0.0, %v1763
    %v1765 = vpop.f32.mrb[0].mxu0
    %v1766 = vadd.f32 0.0, %v1765
    %1767 = vmatprep.mubr.bf16.mxu0 %v1511
    %1768 = vmatmul.mubr.bf16.gmra.mrb[0].mxu0 %v1510
    %v1769 = vpop.f32.mrb[0].mxu0
    %v1770 = vadd.f32 0.0, %v1769
    %v1771 = vpop.f32.mrb[0].mxu0
    %v1772 = vadd.f32 0.0, %v1771
    %v1773 = vpop.f32.mrb[0].mxu0
    %v1774 = vadd.f32 0.0, %v1773
    %v1775 = vpop.f32.mrb[0].mxu0
    %v1776 = vadd.f32 0.0, %v1775
    %1777 = vdwg.mxu0
    %v1778 = vadd.f32 %v1377, %v1740
    %v1779 = vadd.f32 %v1379, %v1742
    %v1780 = vadd.f32 %v1381, %v1744
    %v1781 = vadd.f32 %v1383, %v1746
    %v1782 = vadd.f32 %v1387, %v1750
    %v1783 = vadd.f32 %v1389, %v1752
    %v1784 = vadd.f32 %v1391, %v1754
    %v1785 = vadd.f32 %v1393, %v1756
    %v1786 = vadd.f32 %v1397, %v1760
    %v1787 = vadd.f32 %v1399, %v1762
    %v1788 = vadd.f32 %v1401, %v1764
    %v1789 = vadd.f32 %v1403, %v1766
    %v1790 = vadd.f32 %v1407, %v1770
    %v1791 = vadd.f32 %v1409, %v1772
    %v1792 = vadd.f32 %v1411, %v1774
    %v1793 = vadd.f32 %v1413, %v1776
    %v1794 = vld [vmem:[#allocation13] sm:$0x3]
    %v1796 = vlaneseq
    %v1797 = vshrl.u32 %v1796, 7
    %v1798 = vsub.s32 0, %v1797
    %v1799 = vrot.slane %v1794, %v1798
    %v1800 = vlaneseq
    %v1801 = vshrl.u32 %v1800, 7
    %v1802 = vsub.s32 1, %v1801
    %v1803 = vrot.slane %v1794, %v1802
    %v1806 = vadd.f32 %v1778, %v1799
    %v1807 = vadd.f32 %v1779, %v1803
    %v1808 = vadd.f32 %v1780, %v1799
    %v1809 = vadd.f32 %v1781, %v1803
    %v1810 = vadd.f32 %v1782, %v1799
    %v1811 = vadd.f32 %v1783, %v1803
    %v1812 = vadd.f32 %v1784, %v1799
    %v1813 = vadd.f32 %v1785, %v1803
    %v1814 = vadd.f32 %v1786, %v1799
    %v1815 = vadd.f32 %v1787, %v1803
    %v1816 = vadd.f32 %v1788, %v1799
    %v1817 = vadd.f32 %v1789, %v1803
    %v1818 = vadd.f32 %v1790, %v1799
    %v1819 = vadd.f32 %v1791, %v1803
    %v1820 = vadd.f32 %v1792, %v1799
    %v1821 = vadd.f32 %v1793, %v1803
    %vm1822 = vcmp.gt.f32.partialorder %v1806, 0.0
    %vm1823 = vcmp.gt.f32.partialorder %v1807, 0.0
    %vm1824 = vcmp.gt.f32.partialorder %v1808, 0.0
    %vm1825 = vcmp.gt.f32.partialorder %v1809, 0.0
    %vm1826 = vcmp.gt.f32.partialorder %v1810, 0.0
    %vm1827 = vcmp.gt.f32.partialorder %v1811, 0.0
    %vm1828 = vcmp.gt.f32.partialorder %v1812, 0.0
    %vm1829 = vcmp.gt.f32.partialorder %v1813, 0.0
    %vm1830 = vcmp.gt.f32.partialorder %v1814, 0.0
    %vm1831 = vcmp.gt.f32.partialorder %v1815, 0.0
    %vm1832 = vcmp.gt.f32.partialorder %v1816, 0.0
    %vm1833 = vcmp.gt.f32.partialorder %v1817, 0.0
    %vm1834 = vcmp.gt.f32.partialorder %v1818, 0.0
    %vm1835 = vcmp.gt.f32.partialorder %v1819, 0.0
    %vm1836 = vcmp.gt.f32.partialorder %v1820, 0.0
    %vm1837 = vcmp.gt.f32.partialorder %v1821, 0.0
    %v1838 = vld [vmem:[#allocation14] sm:$0x3]
    %v1840 = vlaneseq
    %v1841 = vshrl.u32 %v1840, 7
    %v1842 = vsub.s32 0, %v1841
    %v1843 = vrot.slane %v1838, %v1842
    %v1844 = vlaneseq
    %v1845 = vshrl.u32 %v1844, 7
    %v1846 = vsub.s32 1, %v1845
    %v1847 = vrot.slane %v1838, %v1846
    %v1850 = vmul.f32 %v1843, %v1806
    %v1851 = vmul.f32 %v1847, %v1807
    %v1852 = vmul.f32 %v1843, %v1808
    %v1853 = vmul.f32 %v1847, %v1809
    %v1854 = vmul.f32 %v1843, %v1810
    %v1855 = vmul.f32 %v1847, %v1811
    %v1856 = vmul.f32 %v1843, %v1812
    %v1857 = vmul.f32 %v1847, %v1813
    %v1858 = vmul.f32 %v1843, %v1814
    %v1859 = vmul.f32 %v1847, %v1815
    %v1860 = vmul.f32 %v1843, %v1816
    %v1861 = vmul.f32 %v1847, %v1817
    %v1862 = vmul.f32 %v1843, %v1818
    %v1863 = vmul.f32 %v1847, %v1819
    %v1864 = vmul.f32 %v1843, %v1820
    %v1865 = vmul.f32 %v1847, %v1821
    %v1866 = vsel %vm1822, %v1806, %v1850
    %v1867 = vsel %vm1823, %v1807, %v1851
    %v1868 = vsel %vm1824, %v1808, %v1852
    %v1869 = vsel %vm1825, %v1809, %v1853
    %v1870 = vsel %vm1826, %v1810, %v1854
    %v1871 = vsel %vm1827, %v1811, %v1855
    %v1872 = vsel %vm1828, %v1812, %v1856
    %v1873 = vsel %vm1829, %v1813, %v1857
    %v1874 = vsel %vm1830, %v1814, %v1858
    %v1875 = vsel %vm1831, %v1815, %v1859
    %v1876 = vsel %vm1832, %v1816, %v1860
    %v1877 = vsel %vm1833, %v1817, %v1861
    %v1878 = vsel %vm1834, %v1818, %v1862
    %v1879 = vsel %vm1835, %v1819, %v1863
    %v1880 = vsel %vm1836, %v1820, %v1864
    %v1881 = vsel %vm1837, %v1821, %v1865
    %v1898 = vrot.slane %v1866, 7
    %v1899 = vrot.slane %v1867, 7
    %v1900 = vrot.slane %v1868, 7
    %v1901 = vsel %vm682, %v1898, %v1900
    %v1902 = vrot.slane %v1869, 7
    %v1903 = vsel %vm682, %v1899, %v1902
    %v1904 = vrot.slane %v1870, 7
    %v1905 = vrot.slane %v1871, 7
    %v1906 = vrot.slane %v1872, 7
    %v1907 = vsel %vm682, %v1904, %v1906
    %v1908 = vrot.slane %v1873, 7
    %v1909 = vsel %vm682, %v1905, %v1908
    %v1910 = vrot.slane %v1874, 7
    %v1911 = vrot.slane %v1875, 7
    %v1912 = vrot.slane %v1876, 7
    %v1913 = vsel %vm682, %v1910, %v1912
    %v1914 = vrot.slane %v1877, 7
    %v1915 = vsel %vm682, %v1911, %v1914
    %v1916 = vrot.slane %v1878, 7
    %v1917 = vrot.slane %v1879, 7
    %v1918 = vrot.slane %v1880, 7
    %v1919 = vsel %vm682, %v1916, %v1918
    %v1920 = vrot.slane %v1881, 7
    %v1921 = vsel %vm682, %v1917, %v1920
    %1946 = vst [vmem:[#allocation3] sm:$0xfe] %v1898
    %1947 = vst [vmem:[#allocation3 + $0x8] sm:$0xfe] %v1899
    %1948 = vst [vmem:[#allocation3 + $0x10] sm:$0xff] %v1901
    %1949 = vst [vmem:[#allocation3 + $0x18] sm:$0xff] %v1903
    %1950 = vst [vmem:[#allocation3 + $0x20] sm:$0x1] %v1900
    %1951 = vst [vmem:[#allocation3 + $0x28] sm:$0x1] %v1902
    %1952 = vst [vmem:[#allocation3 + $0x30] sm:$0xfe] %v1904
    %1953 = vst [vmem:[#allocation3 + $0x38] sm:$0xfe] %v1905
    %1954 = vst [vmem:[#allocation3 + $0x40] sm:$0xff] %v1907
    %1955 = vst [vmem:[#allocation3 + $0x48] sm:$0xff] %v1909
    %1956 = vst [vmem:[#allocation3 + $0x50] sm:$0x1] %v1906
    %1957 = vst [vmem:[#allocation3 + $0x58] sm:$0x1] %v1908
    %1958 = vst [vmem:[#allocation3 + $0x60] sm:$0xfe] %v1910
    %1959 = vst [vmem:[#allocation3 + $0x68] sm:$0xfe] %v1911
    %1960 = vst [vmem:[#allocation3 + $0x70] sm:$0xff] %v1913
    %1961 = vst [vmem:[#allocation3 + $0x78] sm:$0xff] %v1915
    %1962 = vst [vmem:[#allocation3 + $0x80] sm:$0x1] %v1912
    %1963 = vst [vmem:[#allocation3 + $0x88] sm:$0x1] %v1914
    %1964 = vst [vmem:[#allocation3 + $0x90] sm:$0xfe] %v1916
    %1965 = vst [vmem:[#allocation3 + $0x98] sm:$0xfe] %v1917
    %1966 = vst [vmem:[#allocation3 + $0xa0] sm:$0xff] %v1919
    %1967 = vst [vmem:[#allocation3 + $0xa8] sm:$0xff] %v1921
    %1968 = vst [vmem:[#allocation3 + $0xb0] sm:$0x1] %v1918
    %1969 = vst [vmem:[#allocation3 + $0xb8] sm:$0x1] %v1920
    %v1970 = vld [vmem:[#allocation3] sm:$0xff]
    %v1971 = vld [vmem:[#allocation3 + $0x8] sm:$0xff]
    %v1972 = vld [vmem:[#allocation3 + $0x10] sm:$0xff]
    %v1973 = vld [vmem:[#allocation3 + $0x18] sm:$0xff]
    %v1974 = vld [vmem:[#allocation3 + $0x30] sm:$0xff]
    %v1975 = vld [vmem:[#allocation3 + $0x38] sm:$0xff]
    %v1976 = vld [vmem:[#allocation3 + $0x40] sm:$0xff]
    %v1977 = vld [vmem:[#allocation3 + $0x48] sm:$0xff]
    %v1978 = vld [vmem:[#allocation3 + $0x60] sm:$0xff]
    %v1979 = vld [vmem:[#allocation3 + $0x68] sm:$0xff]
    %v1980 = vld [vmem:[#allocation3 + $0x70] sm:$0xff]
    %v1981 = vld [vmem:[#allocation3 + $0x78] sm:$0xff]
    %v1982 = vld [vmem:[#allocation3 + $0x90] sm:$0xff]
    %v1983 = vld [vmem:[#allocation3 + $0x98] sm:$0xff]
    %v1984 = vld [vmem:[#allocation3 + $0xa0] sm:$0xff]
    %v1985 = vld [vmem:[#allocation3 + $0xa8] sm:$0xff]
    %v1986 = vpack.c.bf16 %v1972, %v1970
    %v1987 = vpack.c.bf16 %v1973, %v1971
    %v1988 = vpack.c.bf16 %v1976, %v1974
    %v1989 = vpack.c.bf16 %v1977, %v1975
    %v1990 = vpack.c.bf16 %v1980, %v1978
    %v1991 = vpack.c.bf16 %v1981, %v1979
    %v1992 = vpack.c.bf16 %v1984, %v1982
    %v1993 = vpack.c.bf16 %v1985, %v1983
    %s1994 = scalar_lea.vmem [#allocation11], 768
    %v1995 = vld [vmem:[%s1994] sm:$0xff]
    %v1996 = vld [vmem:[%s1994 + $0x8] sm:$0xff]
    %v1997 = vld [vmem:[%s1994 + $0x10] sm:$0xff]
    %v1998 = vld [vmem:[%s1994 + $0x18] sm:$0xff]
    %v1999 = vld [vmem:[%s1994 + $0x20] sm:$0xff]
    %v2000 = vld [vmem:[%s1994 + $0x28] sm:$0xff]
    %v2001 = vld [vmem:[%s1994 + $0x30] sm:$0xff]
    %v2002 = vld [vmem:[%s1994 + $0x38] sm:$0xff]
    %v2003 = vld [vmem:[%s1994 + $0x40] sm:$0xff]
    %v2004 = vld [vmem:[%s1994 + $0x48] sm:$0xff]
    %v2005 = vld [vmem:[%s1994 + $0x50] sm:$0xff]
    %v2006 = vld [vmem:[%s1994 + $0x58] sm:$0xff]
    %v2007 = vld [vmem:[%s1994 + $0x60] sm:$0xff]
    %v2008 = vld [vmem:[%s1994 + $0x68] sm:$0xff]
    %v2009 = vld [vmem:[%s1994 + $0x70] sm:$0xff]
    %v2010 = vld [vmem:[%s1994 + $0x78] sm:$0xff]
    %v2011 = vld [vmem:[%s1994 + $0x80] sm:$0xff]
    %v2012 = vld [vmem:[%s1994 + $0x88] sm:$0xff]
    %v2013 = vld [vmem:[%s1994 + $0x90] sm:$0xff]
    %v2014 = vld [vmem:[%s1994 + $0x98] sm:$0xff]
    %v2015 = vld [vmem:[%s1994 + $0xa0] sm:$0xff]
    %v2016 = vld [vmem:[%s1994 + $0xa8] sm:$0xff]
    %v2017 = vld [vmem:[%s1994 + $0xb0] sm:$0xff]
    %v2018 = vld [vmem:[%s1994 + $0xb8] sm:$0xff]
    %v2019 = vld [vmem:[%s1994 + $0xc0] sm:$0xff]
    %v2020 = vld [vmem:[%s1994 + $0xc8] sm:$0xff]
    %v2021 = vld [vmem:[%s1994 + $0xd0] sm:$0xff]
    %v2022 = vld [vmem:[%s1994 + $0xd8] sm:$0xff]
    %v2023 = vld [vmem:[%s1994 + $0xe0] sm:$0xff]
    %v2024 = vld [vmem:[%s1994 + $0xe8] sm:$0xff]
    %v2025 = vld [vmem:[%s1994 + $0xf0] sm:$0xff]
    %v2026 = vld [vmem:[%s1994 + $0xf8] sm:$0xff]
    %v2027 = vld [vmem:[#allocation3] sm:$0xfe]
    %v2028 = vld [vmem:[#allocation3 + $0x8] sm:$0xfe]
    %v2029 = vld [vmem:[#allocation3 + $0x20] sm:$0x1]
    %v2030 = vld [vmem:[#allocation3 + $0x28] sm:$0x1]
    %v2031 = vld [vmem:[#allocation3 + $0x30] sm:$0xfe]
    %v2032 = vld [vmem:[#allocation3 + $0x38] sm:$0xfe]
    %v2033 = vld [vmem:[#allocation3 + $0x50] sm:$0x1]
    %v2034 = vld [vmem:[#allocation3 + $0x58] sm:$0x1]
    %v2035 = vld [vmem:[#allocation3 + $0x60] sm:$0xfe]
    %v2036 = vld [vmem:[#allocation3 + $0x68] sm:$0xfe]
    %v2037 = vld [vmem:[#allocation3 + $0x80] sm:$0x1]
    %v2038 = vld [vmem:[#allocation3 + $0x88] sm:$0x1]
    %v2039 = vld [vmem:[#allocation3 + $0x90] sm:$0xfe]
    %v2040 = vld [vmem:[#allocation3 + $0x98] sm:$0xfe]
    %v2041 = vld [vmem:[#allocation3 + $0xb0] sm:$0x1]
    %v2042 = vld [vmem:[#allocation3 + $0xb8] sm:$0x1]
    %v2067 = vrot.slane %v2027, 1
    %v2068 = vrot.slane %v1972, 1
    %v2069 = vsel %vm851, %v2067, %v2068
    %v2070 = vrot.slane %v2028, 1
    %v2071 = vrot.slane %v1973, 1
    %v2072 = vsel %vm851, %v2070, %v2071
    %v2073 = vrot.slane %v2029, 1
    %v2074 = vsel %vm851, %v2068, %v2073
    %v2075 = vrot.slane %v2030, 1
    %v2076 = vsel %vm851, %v2071, %v2075
    %v2077 = vrot.slane %v2031, 1
    %v2078 = vrot.slane %v1976, 1
    %v2079 = vsel %vm851, %v2077, %v2078
    %v2080 = vrot.slane %v2032, 1
    %v2081 = vrot.slane %v1977, 1
    %v2082 = vsel %vm851, %v2080, %v2081
    %v2083 = vrot.slane %v2033, 1
    %v2084 = vsel %vm851, %v2078, %v2083
    %v2085 = vrot.slane %v2034, 1
    %v2086 = vsel %vm851, %v2081, %v2085
    %v2087 = vrot.slane %v2035, 1
    %v2088 = vrot.slane %v1980, 1
    %v2089 = vsel %vm851, %v2087, %v2088
    %v2090 = vrot.slane %v2036, 1
    %v2091 = vrot.slane %v1981, 1
    %v2092 = vsel %vm851, %v2090, %v2091
    %v2093 = vrot.slane %v2037, 1
    %v2094 = vsel %vm851, %v2088, %v2093
    %v2095 = vrot.slane %v2038, 1
    %v2096 = vsel %vm851, %v2091, %v2095
    %v2097 = vrot.slane %v2039, 1
    %v2098 = vrot.slane %v1984, 1
    %v2099 = vsel %vm851, %v2097, %v2098
    %v2100 = vrot.slane %v2040, 1
    %v2101 = vrot.slane %v1985, 1
    %v2102 = vsel %vm851, %v2100, %v2101
    %v2103 = vrot.slane %v2041, 1
    %v2104 = vsel %vm851, %v2098, %v2103
    %v2105 = vrot.slane %v2042, 1
    %v2106 = vsel %vm851, %v2101, %v2105
    %v2123 = vpack.c.bf16 %v2074, %v2069
    %v2124 = vpack.c.bf16 %v2076, %v2072
    %v2125 = vpack.c.bf16 %v2084, %v2079
    %v2126 = vpack.c.bf16 %v2086, %v2082
    %v2127 = vpack.c.bf16 %v2094, %v2089
    %v2128 = vpack.c.bf16 %v2096, %v2092
    %v2129 = vpack.c.bf16 %v2104, %v2099
    %v2130 = vpack.c.bf16 %v2106, %v2102
    %s2131 = scalar_lea.vmem [#allocation11], 1024
    %v2132 = vld [vmem:[%s2131] sm:$0xff]
    %v2133 = vld [vmem:[%s2131 + $0x8] sm:$0xff]
    %v2134 = vld [vmem:[%s2131 + $0x10] sm:$0xff]
    %v2135 = vld [vmem:[%s2131 + $0x18] sm:$0xff]
    %v2136 = vld [vmem:[%s2131 + $0x20] sm:$0xff]
    %v2137 = vld [vmem:[%s2131 + $0x28] sm:$0xff]
    %v2138 = vld [vmem:[%s2131 + $0x30] sm:$0xff]
    %v2139 = vld [vmem:[%s2131 + $0x38] sm:$0xff]
    %v2140 = vld [vmem:[%s2131 + $0x40] sm:$0xff]
    %v2141 = vld [vmem:[%s2131 + $0x48] sm:$0xff]
    %v2142 = vld [vmem:[%s2131 + $0x50] sm:$0xff]
    %v2143 = vld [vmem:[%s2131 + $0x58] sm:$0xff]
    %v2144 = vld [vmem:[%s2131 + $0x60] sm:$0xff]
    %v2145 = vld [vmem:[%s2131 + $0x68] sm:$0xff]
    %v2146 = vld [vmem:[%s2131 + $0x70] sm:$0xff]
    %v2147 = vld [vmem:[%s2131 + $0x78] sm:$0xff]
    %v2148 = vld [vmem:[%s2131 + $0x80] sm:$0xff]
    %v2149 = vld [vmem:[%s2131 + $0x88] sm:$0xff]
    %v2150 = vld [vmem:[%s2131 + $0x90] sm:$0xff]
    %v2151 = vld [vmem:[%s2131 + $0x98] sm:$0xff]
    %v2152 = vld [vmem:[%s2131 + $0xa0] sm:$0xff]
    %v2153 = vld [vmem:[%s2131 + $0xa8] sm:$0xff]
    %v2154 = vld [vmem:[%s2131 + $0xb0] sm:$0xff]
    %v2155 = vld [vmem:[%s2131 + $0xb8] sm:$0xff]
    %v2156 = vld [vmem:[%s2131 + $0xc0] sm:$0xff]
    %v2157 = vld [vmem:[%s2131 + $0xc8] sm:$0xff]
    %v2158 = vld [vmem:[%s2131 + $0xd0] sm:$0xff]
    %v2159 = vld [vmem:[%s2131 + $0xd8] sm:$0xff]
    %v2160 = vld [vmem:[%s2131 + $0xe0] sm:$0xff]
    %v2161 = vld [vmem:[%s2131 + $0xe8] sm:$0xff]
    %v2162 = vld [vmem:[%s2131 + $0xf0] sm:$0xff]
    %v2163 = vld [vmem:[%s2131 + $0xf8] sm:$0xff]
    %v2196 = vunpack.c.l.b16 %v2132
    %v2197 = vunpack.c.h.b16 %v2132
    %v2198 = vunpack.c.l.b16 %v2133
    %v2199 = vunpack.c.h.b16 %v2133
    %v2200 = vunpack.c.l.b16 %v2134
    %v2201 = vunpack.c.h.b16 %v2134
    %v2202 = vunpack.c.l.b16 %v2135
    %v2203 = vunpack.c.h.b16 %v2135
    %v2204 = vunpack.c.l.b16 %v2136
    %v2205 = vunpack.c.h.b16 %v2136
    %v2206 = vunpack.c.l.b16 %v2137
    %v2207 = vunpack.c.h.b16 %v2137
    %v2208 = vunpack.c.l.b16 %v2138
    %v2209 = vunpack.c.h.b16 %v2138
    %v2210 = vunpack.c.l.b16 %v2139
    %v2211 = vunpack.c.h.b16 %v2139
    %v2212 = vunpack.c.l.b16 %v2140
    %v2213 = vunpack.c.h.b16 %v2140
    %v2214 = vunpack.c.l.b16 %v2141
    %v2215 = vunpack.c.h.b16 %v2141
    %v2216 = vunpack.c.l.b16 %v2142
    %v2217 = vunpack.c.h.b16 %v2142
    %v2218 = vunpack.c.l.b16 %v2143
    %v2219 = vunpack.c.h.b16 %v2143
    %v2220 = vunpack.c.l.b16 %v2144
    %v2221 = vunpack.c.h.b16 %v2144
    %v2222 = vunpack.c.l.b16 %v2145
    %v2223 = vunpack.c.h.b16 %v2145
    %v2224 = vunpack.c.l.b16 %v2146
    %v2225 = vunpack.c.h.b16 %v2146
    %v2226 = vunpack.c.l.b16 %v2147
    %v2227 = vunpack.c.h.b16 %v2147
    %v2228 = vunpack.c.l.b16 %v2148
    %v2229 = vunpack.c.h.b16 %v2148
    %v2230 = vunpack.c.l.b16 %v2149
    %v2231 = vunpack.c.h.b16 %v2149
    %v2232 = vunpack.c.l.b16 %v2150
    %v2233 = vunpack.c.h.b16 %v2150
    %v2234 = vunpack.c.l.b16 %v2151
    %v2235 = vunpack.c.h.b16 %v2151
    %v2236 = vunpack.c.l.b16 %v2152
    %v2237 = vunpack.c.h.b16 %v2152
    %v2238 = vunpack.c.l.b16 %v2153
    %v2239 = vunpack.c.h.b16 %v2153
    %v2240 = vunpack.c.l.b16 %v2154
    %v2241 = vunpack.c.h.b16 %v2154
    %v2242 = vunpack.c.l.b16 %v2155
    %v2243 = vunpack.c.h.b16 %v2155
    %v2244 = vunpack.c.l.b16 %v2156
    %v2245 = vunpack.c.h.b16 %v2156
    %v2246 = vunpack.c.l.b16 %v2157
    %v2247 = vunpack.c.h.b16 %v2157
    %v2248 = vunpack.c.l.b16 %v2158
    %v2249 = vunpack.c.h.b16 %v2158
    %v2250 = vunpack.c.l.b16 %v2159
    %v2251 = vunpack.c.h.b16 %v2159
    %v2252 = vunpack.c.l.b16 %v2160
    %v2253 = vunpack.c.h.b16 %v2160
    %v2254 = vunpack.c.l.b16 %v2161
    %v2255 = vunpack.c.h.b16 %v2161
    %v2256 = vunpack.c.l.b16 %v2162
    %v2257 = vunpack.c.h.b16 %v2162
    %v2258 = vunpack.c.l.b16 %v2163
    %v2259 = vunpack.c.h.b16 %v2163
    %v2260 = vpack.c.b16 %v2198, %v2196
    %v2261 = vpack.c.b16 %v2199, %v2197
    %v2262 = vpack.c.b16 %v2202, %v2200
    %v2263 = vpack.c.b16 %v2203, %v2201
    %v2264 = vpack.c.b16 %v2206, %v2204
    %v2265 = vpack.c.b16 %v2207, %v2205
    %v2266 = vpack.c.b16 %v2210, %v2208
    %v2267 = vpack.c.b16 %v2211, %v2209
    %v2268 = vpack.c.b16 %v2214, %v2212
    %v2269 = vpack.c.b16 %v2215, %v2213
    %v2270 = vpack.c.b16 %v2218, %v2216
    %v2271 = vpack.c.b16 %v2219, %v2217
    %v2272 = vpack.c.b16 %v2222, %v2220
    %v2273 = vpack.c.b16 %v2223, %v2221
    %v2274 = vpack.c.b16 %v2226, %v2224
    %v2275 = vpack.c.b16 %v2227, %v2225
    %v2276 = vpack.c.b16 %v2230, %v2228
    %v2277 = vpack.c.b16 %v2231, %v2229
    %v2278 = vpack.c.b16 %v2234, %v2232
    %v2279 = vpack.c.b16 %v2235, %v2233
    %v2280 = vpack.c.b16 %v2238, %v2236
    %v2281 = vpack.c.b16 %v2239, %v2237
    %v2282 = vpack.c.b16 %v2242, %v2240
    %v2283 = vpack.c.b16 %v2243, %v2241
    %v2284 = vpack.c.b16 %v2246, %v2244
    %v2285 = vpack.c.b16 %v2247, %v2245
    %v2286 = vpack.c.b16 %v2250, %v2248
    %v2287 = vpack.c.b16 %v2251, %v2249
    %v2288 = vpack.c.b16 %v2254, %v2252
    %v2289 = vpack.c.b16 %v2255, %v2253
    %v2290 = vpack.c.b16 %v2258, %v2256
    %v2291 = vpack.c.b16 %v2259, %v2257
    %2324 = vmatprep.subr.bf16.mxu0 %v2261
    %2325 = vmatpush1.bf16.msra.mxu0 %v2260
    %2326 = vmatprep.subr.bf16.mxu0 %v2263
    %2327 = vmatpush1.bf16.msra.mxu0 %v2262
    %2328 = vmatprep.subr.bf16.mxu0 %v2265
    %2329 = vmatpush1.bf16.msra.mxu0 %v2264
    %2330 = vmatprep.subr.bf16.mxu0 %v2267
    %2331 = vmatpush1.bf16.msra.mxu0 %v2266
    %2332 = vmatprep.subr.bf16.mxu0 %v2269
    %2333 = vmatpush1.bf16.msra.mxu0 %v2268
    %2334 = vmatprep.subr.bf16.mxu0 %v2271
    %2335 = vmatpush1.bf16.msra.mxu0 %v2270
    %2336 = vmatprep.subr.bf16.mxu0 %v2273
    %2337 = vmatpush1.bf16.msra.mxu0 %v2272
    %2338 = vmatprep.subr.bf16.mxu0 %v2275
    %2339 = vmatpush1.bf16.msra.mxu0 %v2274
    %2340 = vmatprep.subr.bf16.mxu0 %v2277
    %2341 = vmatpush1.bf16.msra.mxu0 %v2276
    %2342 = vmatprep.subr.bf16.mxu0 %v2279
    %2343 = vmatpush1.bf16.msra.mxu0 %v2278
    %2344 = vmatprep.subr.bf16.mxu0 %v2281
    %2345 = vmatpush1.bf16.msra.mxu0 %v2280
    %2346 = vmatprep.subr.bf16.mxu0 %v2283
    %2347 = vmatpush1.bf16.msra.mxu0 %v2282
    %2348 = vmatprep.subr.bf16.mxu0 %v2285
    %2349 = vmatpush1.bf16.msra.mxu0 %v2284
    %2350 = vmatprep.subr.bf16.mxu0 %v2287
    %2351 = vmatpush1.bf16.msra.mxu0 %v2286
    %2352 = vmatprep.subr.bf16.mxu0 %v2289
    %2353 = vmatpush1.bf16.msra.mxu0 %v2288
    %2354 = vmatprep.subr.bf16.mxu0 %v2291
    %2355 = vmatpush1.bf16.msra.mxu0 %v2290
    %2356 = vmatprep.mubr.bf16.mxu0 %v2124
    %2357 = vmatmul.mubr.bf16.gmra.mrb[0].mxu0 %v2123
    %v2358 = vpop.f32.mrb[0].mxu0
    %v2359 = vadd.f32 0.0, %v2358
    %v2360 = vpop.f32.mrb[0].mxu0
    %v2361 = vadd.f32 0.0, %v2360
    %v2362 = vpop.f32.mrb[0].mxu0
    %v2363 = vadd.f32 0.0, %v2362
    %v2364 = vpop.f32.mrb[0].mxu0
    %v2365 = vadd.f32 0.0, %v2364
    %2366 = vmatprep.mubr.bf16.mxu0 %v2126
    %2367 = vmatmul.mubr.bf16.gmra.mrb[0].mxu0 %v2125
    %v2368 = vpop.f32.mrb[0].mxu0
    %v2369 = vadd.f32 0.0, %v2368
    %v2370 = vpop.f32.mrb[0].mxu0
    %v2371 = vadd.f32 0.0, %v2370
    %v2372 = vpop.f32.mrb[0].mxu0
    %v2373 = vadd.f32 0.0, %v2372
    %v2374 = vpop.f32.mrb[0].mxu0
    %v2375 = vadd.f32 0.0, %v2374
    %2376 = vmatprep.mubr.bf16.mxu0 %v2128
    %2377 = vmatmul.mubr.bf16.gmra.mrb[0].mxu0 %v2127
    %v2378 = vpop.f32.mrb[0].mxu0
    %v2379 = vadd.f32 0.0, %v2378
    %v2380 = vpop.f32.mrb[0].mxu0
    %v2381 = vadd.f32 0.0, %v2380
    %v2382 = vpop.f32.mrb[0].mxu0
    %v2383 = vadd.f32 0.0, %v2382
    %v2384 = vpop.f32.mrb[0].mxu0
    %v2385 = vadd.f32 0.0, %v2384
    %2386 = vmatprep.mubr.bf16.mxu0 %v2130
    %2387 = vmatmul.mubr.bf16.gmra.mrb[0].mxu0 %v2129
    %v2388 = vpop.f32.mrb[0].mxu0
    %v2389 = vadd.f32 0.0, %v2388
    %v2390 = vpop.f32.mrb[0].mxu0
    %v2391 = vadd.f32 0.0, %v2390
    %v2392 = vpop.f32.mrb[0].mxu0
    %v2393 = vadd.f32 0.0, %v2392
    %v2394 = vpop.f32.mrb[0].mxu0
    %v2395 = vadd.f32 0.0, %v2394
    %2396 = vdwg.mxu0
    %v2429 = vunpack.c.l.b16 %v1995
    %v2430 = vunpack.c.h.b16 %v1995
    %v2431 = vunpack.c.l.b16 %v1996
    %v2432 = vunpack.c.h.b16 %v1996
    %v2433 = vunpack.c.l.b16 %v1997
    %v2434 = vunpack.c.h.b16 %v1997
    %v2435 = vunpack.c.l.b16 %v1998
    %v2436 = vunpack.c.h.b16 %v1998
    %v2437 = vunpack.c.l.b16 %v1999
    %v2438 = vunpack.c.h.b16 %v1999
    %v2439 = vunpack.c.l.b16 %v2000
    %v2440 = vunpack.c.h.b16 %v2000
    %v2441 = vunpack.c.l.b16 %v2001
    %v2442 = vunpack.c.h.b16 %v2001
    %v2443 = vunpack.c.l.b16 %v2002
    %v2444 = vunpack.c.h.b16 %v2002
    %v2445 = vunpack.c.l.b16 %v2003
    %v2446 = vunpack.c.h.b16 %v2003
    %v2447 = vunpack.c.l.b16 %v2004
    %v2448 = vunpack.c.h.b16 %v2004
    %v2449 = vunpack.c.l.b16 %v2005
    %v2450 = vunpack.c.h.b16 %v2005
    %v2451 = vunpack.c.l.b16 %v2006
    %v2452 = vunpack.c.h.b16 %v2006
    %v2453 = vunpack.c.l.b16 %v2007
    %v2454 = vunpack.c.h.b16 %v2007
    %v2455 = vunpack.c.l.b16 %v2008
    %v2456 = vunpack.c.h.b16 %v2008
    %v2457 = vunpack.c.l.b16 %v2009
    %v2458 = vunpack.c.h.b16 %v2009
    %v2459 = vunpack.c.l.b16 %v2010
    %v2460 = vunpack.c.h.b16 %v2010
    %v2461 = vunpack.c.l.b16 %v2011
    %v2462 = vunpack.c.h.b16 %v2011
    %v2463 = vunpack.c.l.b16 %v2012
    %v2464 = vunpack.c.h.b16 %v2012
    %v2465 = vunpack.c.l.b16 %v2013
    %v2466 = vunpack.c.h.b16 %v2013
    %v2467 = vunpack.c.l.b16 %v2014
    %v2468 = vunpack.c.h.b16 %v2014
    %v2469 = vunpack.c.l.b16 %v2015
    %v2470 = vunpack.c.h.b16 %v2015
    %v2471 = vunpack.c.l.b16 %v2016
    %v2472 = vunpack.c.h.b16 %v2016
    %v2473 = vunpack.c.l.b16 %v2017
    %v2474 = vunpack.c.h.b16 %v2017
    %v2475 = vunpack.c.l.b16 %v2018
    %v2476 = vunpack.c.h.b16 %v2018
    %v2477 = vunpack.c.l.b16 %v2019
    %v2478 = vunpack.c.h.b16 %v2019
    %v2479 = vunpack.c.l.b16 %v2020
    %v2480 = vunpack.c.h.b16 %v2020
    %v2481 = vunpack.c.l.b16 %v2021
    %v2482 = vunpack.c.h.b16 %v2021
    %v2483 = vunpack.c.l.b16 %v2022
    %v2484 = vunpack.c.h.b16 %v2022
    %v2485 = vunpack.c.l.b16 %v2023
    %v2486 = vunpack.c.h.b16 %v2023
    %v2487 = vunpack.c.l.b16 %v2024
    %v2488 = vunpack.c.h.b16 %v2024
    %v2489 = vunpack.c.l.b16 %v2025
    %v2490 = vunpack.c.h.b16 %v2025
    %v2491 = vunpack.c.l.b16 %v2026
    %v2492 = vunpack.c.h.b16 %v2026
    %v2493 = vpack.c.b16 %v2431, %v2429
    %v2494 = vpack.c.b16 %v2432, %v2430
    %v2495 = vpack.c.b16 %v2435, %v2433
    %v2496 = vpack.c.b16 %v2436, %v2434
    %v2497 = vpack.c.b16 %v2439, %v2437
    %v2498 = vpack.c.b16 %v2440, %v2438
    %v2499 = vpack.c.b16 %v2443, %v2441
    %v2500 = vpack.c.b16 %v2444, %v2442
    %v2501 = vpack.c.b16 %v2447, %v2445
    %v2502 = vpack.c.b16 %v2448, %v2446
    %v2503 = vpack.c.b16 %v2451, %v2449
    %v2504 = vpack.c.b16 %v2452, %v2450
    %v2505 = vpack.c.b16 %v2455, %v2453
    %v2506 = vpack.c.b16 %v2456, %v2454
    %v2507 = vpack.c.b16 %v2459, %v2457
    %v2508 = vpack.c.b16 %v2460, %v2458
    %v2509 = vpack.c.b16 %v2463, %v2461
    %v2510 = vpack.c.b16 %v2464, %v2462
    %v2511 = vpack.c.b16 %v2467, %v2465
    %v2512 = vpack.c.b16 %v2468, %v2466
    %v2513 = vpack.c.b16 %v2471, %v2469
    %v2514 = vpack.c.b16 %v2472, %v2470
    %v2515 = vpack.c.b16 %v2475, %v2473
    %v2516 = vpack.c.b16 %v2476, %v2474
    %v2517 = vpack.c.b16 %v2479, %v2477
    %v2518 = vpack.c.b16 %v2480, %v2478
    %v2519 = vpack.c.b16 %v2483, %v2481
    %v2520 = vpack.c.b16 %v2484, %v2482
    %v2521 = vpack.c.b16 %v2487, %v2485
    %v2522 = vpack.c.b16 %v2488, %v2486
    %v2523 = vpack.c.b16 %v2491, %v2489
    %v2524 = vpack.c.b16 %v2492, %v2490
    %2557 = vmatprep.subr.bf16.mxu0 %v2494
    %2558 = vmatpush1.bf16.msra.mxu0 %v2493
    %2559 = vmatprep.subr.bf16.mxu0 %v2496
    %2560 = vmatpush1.bf16.msra.mxu0 %v2495
    %2561 = vmatprep.subr.bf16.mxu0 %v2498
    %2562 = vmatpush1.bf16.msra.mxu0 %v2497
    %2563 = vmatprep.subr.bf16.mxu0 %v2500
    %2564 = vmatpush1.bf16.msra.mxu0 %v2499
    %2565 = vmatprep.subr.bf16.mxu0 %v2502
    %2566 = vmatpush1.bf16.msra.mxu0 %v2501
    %2567 = vmatprep.subr.bf16.mxu0 %v2504
    %2568 = vmatpush1.bf16.msra.mxu0 %v2503
    %2569 = vmatprep.subr.bf16.mxu0 %v2506
    %2570 = vmatpush1.bf16.msra.mxu0 %v2505
    %2571 = vmatprep.subr.bf16.mxu0 %v2508
    %2572 = vmatpush1.bf16.msra.mxu0 %v2507
    %2573 = vmatprep.subr.bf16.mxu0 %v2510
    %2574 = vmatpush1.bf16.msra.mxu0 %v2509
    %2575 = vmatprep.subr.bf16.mxu0 %v2512
    %2576 = vmatpush1.bf16.msra.mxu0 %v2511
    %2577 = vmatprep.subr.bf16.mxu0 %v2514
    %2578 = vmatpush1.bf16.msra.mxu0 %v2513
    %2579 = vmatprep.subr.bf16.mxu0 %v2516
    %2580 = vmatpush1.bf16.msra.mxu0 %v2515
    %2581 = vmatprep.subr.bf16.mxu0 %v2518
    %2582 = vmatpush1.bf16.msra.mxu0 %v2517
    %2583 = vmatprep.subr.bf16.mxu0 %v2520
    %2584 = vmatpush1.bf16.msra.mxu0 %v2519
    %2585 = vmatprep.subr.bf16.mxu0 %v2522
    %2586 = vmatpush1.bf16.msra.mxu0 %v2521
    %2587 = vmatprep.subr.bf16.mxu0 %v2524
    %2588 = vmatpush1.bf16.msra.mxu0 %v2523
    %2589 = vmatprep.mubr.bf16.mxu0 %v1987
    %2590 = vmatmul.mubr.bf16.gmra.mrb[0].mxu0 %v1986
    %v2591 = vpop.f32.mrb[0].mxu0
    %v2592 = vadd.f32 %v2359, %v2591
    %v2593 = vpop.f32.mrb[0].mxu0
    %v2594 = vadd.f32 %v2361, %v2593
    %v2595 = vpop.f32.mrb[0].mxu0
    %v2596 = vadd.f32 %v2363, %v2595
    %v2597 = vpop.f32.mrb[0].mxu0
    %v2598 = vadd.f32 %v2365, %v2597
    %2599 = vmatprep.mubr.bf16.mxu0 %v1989
    %2600 = vmatmul.mubr.bf16.gmra.mrb[0].mxu0 %v1988
    %v2601 = vpop.f32.mrb[0].mxu0
    %v2602 = vadd.f32 %v2369, %v2601
    %v2603 = vpop.f32.mrb[0].mxu0
    %v2604 = vadd.f32 %v2371, %v2603
    %v2605 = vpop.f32.mrb[0].mxu0
    %v2606 = vadd.f32 %v2373, %v2605
    %v2607 = vpop.f32.mrb[0].mxu0
    %v2608 = vadd.f32 %v2375, %v2607
    %2609 = vmatprep.mubr.bf16.mxu0 %v1991
    %2610 = vmatmul.mubr.bf16.gmra.mrb[0].mxu0 %v1990
    %v2611 = vpop.f32.mrb[0].mxu0
    %v2612 = vadd.f32 %v2379, %v2611
    %v2613 = vpop.f32.mrb[0].mxu0
    %v2614 = vadd.f32 %v2381, %v2613
    %v2615 = vpop.f32.mrb[0].mxu0
    %v2616 = vadd.f32 %v2383, %v2615
    %v2617 = vpop.f32.mrb[0].mxu0
    %v2618 = vadd.f32 %v2385, %v2617
    %2619 = vmatprep.mubr.bf16.mxu0 %v1993
    %2620 = vmatmul.mubr.bf16.gmra.mrb[0].mxu0 %v1992
    %v2621 = vpop.f32.mrb[0].mxu0
    %v2622 = vadd.f32 %v2389, %v2621
    %v2623 = vpop.f32.mrb[0].mxu0
    %v2624 = vadd.f32 %v2391, %v2623
    %v2625 = vpop.f32.mrb[0].mxu0
    %v2626 = vadd.f32 %v2393, %v2625
    %v2627 = vpop.f32.mrb[0].mxu0
    %v2628 = vadd.f32 %v2395, %v2627
    %2629 = vdwg.mxu0
    %v2630 = vld [vmem:[#allocation3] sm:$0xfc]
    %v2631 = vld [vmem:[#allocation3 + $0x8] sm:$0xfc]
    %v2632 = vld [vmem:[#allocation3 + $0x20] sm:$0x3]
    %v2633 = vld [vmem:[#allocation3 + $0x28] sm:$0x3]
    %v2634 = vld [vmem:[#allocation3 + $0x30] sm:$0xfc]
    %v2635 = vld [vmem:[#allocation3 + $0x38] sm:$0xfc]
    %v2636 = vld [vmem:[#allocation3 + $0x50] sm:$0x3]
    %v2637 = vld [vmem:[#allocation3 + $0x58] sm:$0x3]
    %v2638 = vld [vmem:[#allocation3 + $0x60] sm:$0xfc]
    %v2639 = vld [vmem:[#allocation3 + $0x68] sm:$0xfc]
    %v2640 = vld [vmem:[#allocation3 + $0x80] sm:$0x3]
    %v2641 = vld [vmem:[#allocation3 + $0x88] sm:$0x3]
    %v2642 = vld [vmem:[#allocation3 + $0x90] sm:$0xfc]
    %v2643 = vld [vmem:[#allocation3 + $0x98] sm:$0xfc]
    %v2644 = vld [vmem:[#allocation3 + $0xb0] sm:$0x3]
    %v2645 = vld [vmem:[#allocation3 + $0xb8] sm:$0x3]
    %v2662 = vrot.slane %v2630, 2
    %v2663 = vrot.slane %v1972, 2
    %v2664 = vsel %vm1447, %v2662, %v2663
    %v2665 = vrot.slane %v2631, 2
    %v2666 = vrot.slane %v1973, 2
    %v2667 = vsel %vm1447, %v2665, %v2666
    %v2668 = vrot.slane %v2632, 2
    %v2669 = vsel %vm1447, %v2663, %v2668
    %v2670 = vrot.slane %v2633, 2
    %v2671 = vsel %vm1447, %v2666, %v2670
    %v2672 = vrot.slane %v2634, 2
    %v2673 = vrot.slane %v1976, 2
    %v2674 = vsel %vm1447, %v2672, %v2673
    %v2675 = vrot.slane %v2635, 2
    %v2676 = vrot.slane %v1977, 2
    %v2677 = vsel %vm1447, %v2675, %v2676
    %v2678 = vrot.slane %v2636, 2
    %v2679 = vsel %vm1447, %v2673, %v2678
    %v2680 = vrot.slane %v2637, 2
    %v2681 = vsel %vm1447, %v2676, %v2680
    %v2682 = vrot.slane %v2638, 2
    %v2683 = vrot.slane %v1980, 2
    %v2684 = vsel %vm1447, %v2682, %v2683
    %v2685 = vrot.slane %v2639, 2
    %v2686 = vrot.slane %v1981, 2
    %v2687 = vsel %vm1447, %v2685, %v2686
    %v2688 = vrot.slane %v2640, 2
    %v2689 = vsel %vm1447, %v2683, %v2688
    %v2690 = vrot.slane %v2641, 2
    %v2691 = vsel %vm1447, %v2686, %v2690
    %v2692 = vrot.slane %v2642, 2
    %v2693 = vrot.slane %v1984, 2
    %v2694 = vsel %vm1447, %v2692, %v2693
    %v2695 = vrot.slane %v2643, 2
    %v2696 = vrot.slane %v1985, 2
    %v2697 = vsel %vm1447, %v2695, %v2696
    %v2698 = vrot.slane %v2644, 2
    %v2699 = vsel %vm1447, %v2693, %v2698
    %v2700 = vrot.slane %v2645, 2
    %v2701 = vsel %vm1447, %v2696, %v2700
    %v2718 = vpack.c.bf16 %v2669, %v2664
    %v2719 = vpack.c.bf16 %v2671, %v2667
    %v2720 = vpack.c.bf16 %v2679, %v2674
    %v2721 = vpack.c.bf16 %v2681, %v2677
    %v2722 = vpack.c.bf16 %v2689, %v2684
    %v2723 = vpack.c.bf16 %v2691, %v2687
    %v2724 = vpack.c.bf16 %v2699, %v2694
    %v2725 = vpack.c.bf16 %v2701, %v2697
    %s2726 = scalar_lea.vmem [#allocation11], 1280
    %v2727 = vld [vmem:[%s2726] sm:$0xff]
    %v2728 = vld [vmem:[%s2726 + $0x8] sm:$0xff]
    %v2729 = vld [vmem:[%s2726 + $0x10] sm:$0xff]
    %v2730 = vld [vmem:[%s2726 + $0x18] sm:$0xff]
    %v2731 = vld [vmem:[%s2726 + $0x20] sm:$0xff]
    %v2732 = vld [vmem:[%s2726 + $0x28] sm:$0xff]
    %v2733 = vld [vmem:[%s2726 + $0x30] sm:$0xff]
    %v2734 = vld [vmem:[%s2726 + $0x38] sm:$0xff]
    %v2735 = vld [vmem:[%s2726 + $0x40] sm:$0xff]
    %v2736 = vld [vmem:[%s2726 + $0x48] sm:$0xff]
    %v2737 = vld [vmem:[%s2726 + $0x50] sm:$0xff]
    %v2738 = vld [vmem:[%s2726 + $0x58] sm:$0xff]
    %v2739 = vld [vmem:[%s2726 + $0x60] sm:$0xff]
    %v2740 = vld [vmem:[%s2726 + $0x68] sm:$0xff]
    %v2741 = vld [vmem:[%s2726 + $0x70] sm:$0xff]
    %v2742 = vld [vmem:[%s2726 + $0x78] sm:$0xff]
    %v2743 = vld [vmem:[%s2726 + $0x80] sm:$0xff]
    %v2744 = vld [vmem:[%s2726 + $0x88] sm:$0xff]
    %v2745 = vld [vmem:[%s2726 + $0x90] sm:$0xff]
    %v2746 = vld [vmem:[%s2726 + $0x98] sm:$0xff]
    %v2747 = vld [vmem:[%s2726 + $0xa0] sm:$0xff]
    %v2748 = vld [vmem:[%s2726 + $0xa8] sm:$0xff]
    %v2749 = vld [vmem:[%s2726 + $0xb0] sm:$0xff]
    %v2750 = vld [vmem:[%s2726 + $0xb8] sm:$0xff]
    %v2751 = vld [vmem:[%s2726 + $0xc0] sm:$0xff]
    %v2752 = vld [vmem:[%s2726 + $0xc8] sm:$0xff]
    %v2753 = vld [vmem:[%s2726 + $0xd0] sm:$0xff]
    %v2754 = vld [vmem:[%s2726 + $0xd8] sm:$0xff]
    %v2755 = vld [vmem:[%s2726 + $0xe0] sm:$0xff]
    %v2756 = vld [vmem:[%s2726 + $0xe8] sm:$0xff]
    %v2757 = vld [vmem:[%s2726 + $0xf0] sm:$0xff]
    %v2758 = vld [vmem:[%s2726 + $0xf8] sm:$0xff]
    %v2791 = vunpack.c.l.b16 %v2727
    %v2792 = vunpack.c.h.b16 %v2727
    %v2793 = vunpack.c.l.b16 %v2728
    %v2794 = vunpack.c.h.b16 %v2728
    %v2795 = vunpack.c.l.b16 %v2729
    %v2796 = vunpack.c.h.b16 %v2729
    %v2797 = vunpack.c.l.b16 %v2730
    %v2798 = vunpack.c.h.b16 %v2730
    %v2799 = vunpack.c.l.b16 %v2731
    %v2800 = vunpack.c.h.b16 %v2731
    %v2801 = vunpack.c.l.b16 %v2732
    %v2802 = vunpack.c.h.b16 %v2732
    %v2803 = vunpack.c.l.b16 %v2733
    %v2804 = vunpack.c.h.b16 %v2733
    %v2805 = vunpack.c.l.b16 %v2734
    %v2806 = vunpack.c.h.b16 %v2734
    %v2807 = vunpack.c.l.b16 %v2735
    %v2808 = vunpack.c.h.b16 %v2735
    %v2809 = vunpack.c.l.b16 %v2736
    %v2810 = vunpack.c.h.b16 %v2736
    %v2811 = vunpack.c.l.b16 %v2737
    %v2812 = vunpack.c.h.b16 %v2737
    %v2813 = vunpack.c.l.b16 %v2738
    %v2814 = vunpack.c.h.b16 %v2738
    %v2815 = vunpack.c.l.b16 %v2739
    %v2816 = vunpack.c.h.b16 %v2739
    %v2817 = vunpack.c.l.b16 %v2740
    %v2818 = vunpack.c.h.b16 %v2740
    %v2819 = vunpack.c.l.b16 %v2741
    %v2820 = vunpack.c.h.b16 %v2741
    %v2821 = vunpack.c.l.b16 %v2742
    %v2822 = vunpack.c.h.b16 %v2742
    %v2823 = vunpack.c.l.b16 %v2743
    %v2824 = vunpack.c.h.b16 %v2743
    %v2825 = vunpack.c.l.b16 %v2744
    %v2826 = vunpack.c.h.b16 %v2744
    %v2827 = vunpack.c.l.b16 %v2745
    %v2828 = vunpack.c.h.b16 %v2745
    %v2829 = vunpack.c.l.b16 %v2746
    %v2830 = vunpack.c.h.b16 %v2746
    %v2831 = vunpack.c.l.b16 %v2747
    %v2832 = vunpack.c.h.b16 %v2747
    %v2833 = vunpack.c.l.b16 %v2748
    %v2834 = vunpack.c.h.b16 %v2748
    %v2835 = vunpack.c.l.b16 %v2749
    %v2836 = vunpack.c.h.b16 %v2749
    %v2837 = vunpack.c.l.b16 %v2750
    %v2838 = vunpack.c.h.b16 %v2750
    %v2839 = vunpack.c.l.b16 %v2751
    %v2840 = vunpack.c.h.b16 %v2751
    %v2841 = vunpack.c.l.b16 %v2752
    %v2842 = vunpack.c.h.b16 %v2752
    %v2843 = vunpack.c.l.b16 %v2753
    %v2844 = vunpack.c.h.b16 %v2753
    %v2845 = vunpack.c.l.b16 %v2754
    %v2846 = vunpack.c.h.b16 %v2754
    %v2847 = vunpack.c.l.b16 %v2755
    %v2848 = vunpack.c.h.b16 %v2755
    %v2849 = vunpack.c.l.b16 %v2756
    %v2850 = vunpack.c.h.b16 %v2756
    %v2851 = vunpack.c.l.b16 %v2757
    %v2852 = vunpack.c.h.b16 %v2757
    %v2853 = vunpack.c.l.b16 %v2758
    %v2854 = vunpack.c.h.b16 %v2758
    %v2855 = vpack.c.b16 %v2793, %v2791
    %v2856 = vpack.c.b16 %v2794, %v2792
    %v2857 = vpack.c.b16 %v2797, %v2795
    %v2858 = vpack.c.b16 %v2798, %v2796
    %v2859 = vpack.c.b16 %v2801, %v2799
    %v2860 = vpack.c.b16 %v2802, %v2800
    %v2861 = vpack.c.b16 %v2805, %v2803
    %v2862 = vpack.c.b16 %v2806, %v2804
    %v2863 = vpack.c.b16 %v2809, %v2807
    %v2864 = vpack.c.b16 %v2810, %v2808
    %v2865 = vpack.c.b16 %v2813, %v2811
    %v2866 = vpack.c.b16 %v2814, %v2812
    %v2867 = vpack.c.b16 %v2817, %v2815
    %v2868 = vpack.c.b16 %v2818, %v2816
    %v2869 = vpack.c.b16 %v2821, %v2819
    %v2870 = vpack.c.b16 %v2822, %v2820
    %v2871 = vpack.c.b16 %v2825, %v2823
    %v2872 = vpack.c.b16 %v2826, %v2824
    %v2873 = vpack.c.b16 %v2829, %v2827
    %v2874 = vpack.c.b16 %v2830, %v2828
    %v2875 = vpack.c.b16 %v2833, %v2831
    %v2876 = vpack.c.b16 %v2834, %v2832
    %v2877 = vpack.c.b16 %v2837, %v2835
    %v2878 = vpack.c.b16 %v2838, %v2836
    %v2879 = vpack.c.b16 %v2841, %v2839
    %v2880 = vpack.c.b16 %v2842, %v2840
    %v2881 = vpack.c.b16 %v2845, %v2843
    %v2882 = vpack.c.b16 %v2846, %v2844
    %v2883 = vpack.c.b16 %v2849, %v2847
    %v2884 = vpack.c.b16 %v2850, %v2848
    %v2885 = vpack.c.b16 %v2853, %v2851
    %v2886 = vpack.c.b16 %v2854, %v2852
    %2919 = vmatprep.subr.bf16.mxu0 %v2856
    %2920 = vmatpush1.bf16.msra.mxu0 %v2855
    %2921 = vmatprep.subr.bf16.mxu0 %v2858
    %2922 = vmatpush1.bf16.msra.mxu0 %v2857
    %2923 = vmatprep.subr.bf16.mxu0 %v2860
    %2924 = vmatpush1.bf16.msra.mxu0 %v2859
    %2925 = vmatprep.subr.bf16.mxu0 %v2862
    %2926 = vmatpush1.bf16.msra.mxu0 %v2861
    %2927 = vmatprep.subr.bf16.mxu0 %v2864
    %2928 = vmatpush1.bf16.msra.mxu0 %v2863
    %2929 = vmatprep.subr.bf16.mxu0 %v2866
    %2930 = vmatpush1.bf16.msra.mxu0 %v2865
    %2931 = vmatprep.subr.bf16.mxu0 %v2868
    %2932 = vmatpush1.bf16.msra.mxu0 %v2867
    %2933 = vmatprep.subr.bf16.mxu0 %v2870
    %2934 = vmatpush1.bf16.msra.mxu0 %v2869
    %2935 = vmatprep.subr.bf16.mxu0 %v2872
    %2936 = vmatpush1.bf16.msra.mxu0 %v2871
    %2937 = vmatprep.subr.bf16.mxu0 %v2874
    %2938 = vmatpush1.bf16.msra.mxu0 %v2873
    %2939 = vmatprep.subr.bf16.mxu0 %v2876
    %2940 = vmatpush1.bf16.msra.mxu0 %v2875
    %2941 = vmatprep.subr.bf16.mxu0 %v2878
    %2942 = vmatpush1.bf16.msra.mxu0 %v2877
    %2943 = vmatprep.subr.bf16.mxu0 %v2880
    %2944 = vmatpush1.bf16.msra.mxu0 %v2879
    %2945 = vmatprep.subr.bf16.mxu0 %v2882
    %2946 = vmatpush1.bf16.msra.mxu0 %v2881
    %2947 = vmatprep.subr.bf16.mxu0 %v2884
    %2948 = vmatpush1.bf16.msra.mxu0 %v2883
    %2949 = vmatprep.subr.bf16.mxu0 %v2886
    %2950 = vmatpush1.bf16.msra.mxu0 %v2885
    %2951 = vmatprep.mubr.bf16.mxu0 %v2719
    %2952 = vmatmul.mubr.bf16.gmra.mrb[0].mxu0 %v2718
    %v2953 = vpop.f32.mrb[0].mxu0
    %v2954 = vadd.f32 0.0, %v2953
    %v2955 = vpop.f32.mrb[0].mxu0
    %v2956 = vadd.f32 0.0, %v2955
    %v2957 = vpop.f32.mrb[0].mxu0
    %v2958 = vadd.f32 0.0, %v2957
    %v2959 = vpop.f32.mrb[0].mxu0
    %v2960 = vadd.f32 0.0, %v2959
    %2961 = vmatprep.mubr.bf16.mxu0 %v2721
    %2962 = vmatmul.mubr.bf16.gmra.mrb[0].mxu0 %v2720
    %v2963 = vpop.f32.mrb[0].mxu0
    %v2964 = vadd.f32 0.0, %v2963
    %v2965 = vpop.f32.mrb[0].mxu0
    %v2966 = vadd.f32 0.0, %v2965
    %v2967 = vpop.f32.mrb[0].mxu0
    %v2968 = vadd.f32 0.0, %v2967
    %v2969 = vpop.f32.mrb[0].mxu0
    %v2970 = vadd.f32 0.0, %v2969
    %2971 = vmatprep.mubr.bf16.mxu0 %v2723
    %2972 = vmatmul.mubr.bf16.gmra.mrb[0].mxu0 %v2722
    %v2973 = vpop.f32.mrb[0].mxu0
    %v2974 = vadd.f32 0.0, %v2973
    %v2975 = vpop.f32.mrb[0].mxu0
    %v2976 = vadd.f32 0.0, %v2975
    %v2977 = vpop.f32.mrb[0].mxu0
    %v2978 = vadd.f32 0.0, %v2977
    %v2979 = vpop.f32.mrb[0].mxu0
    %v2980 = vadd.f32 0.0, %v2979
    %2981 = vmatprep.mubr.bf16.mxu0 %v2725
    %2982 = vmatmul.mubr.bf16.gmra.mrb[0].mxu0 %v2724
    %v2983 = vpop.f32.mrb[0].mxu0
    %v2984 = vadd.f32 0.0, %v2983
    %v2985 = vpop.f32.mrb[0].mxu0
    %v2986 = vadd.f32 0.0, %v2985
    %v2987 = vpop.f32.mrb[0].mxu0
    %v2988 = vadd.f32 0.0, %v2987
    %v2989 = vpop.f32.mrb[0].mxu0
    %v2990 = vadd.f32 0.0, %v2989
    %2991 = vdwg.mxu0
    %v2992 = vadd.f32 %v2592, %v2954
    %v2993 = vadd.f32 %v2594, %v2956
    %v2994 = vadd.f32 %v2596, %v2958
    %v2995 = vadd.f32 %v2598, %v2960
    %v2996 = vadd.f32 %v2602, %v2964
    %v2997 = vadd.f32 %v2604, %v2966
    %v2998 = vadd.f32 %v2606, %v2968
    %v2999 = vadd.f32 %v2608, %v2970
    %v3000 = vadd.f32 %v2612, %v2974
    %v3001 = vadd.f32 %v2614, %v2976
    %v3002 = vadd.f32 %v2616, %v2978
    %v3003 = vadd.f32 %v2618, %v2980
    %v3004 = vadd.f32 %v2622, %v2984
    %v3005 = vadd.f32 %v2624, %v2986
    %v3006 = vadd.f32 %v2626, %v2988
    %v3007 = vadd.f32 %v2628, %v2990
    %s3008 = scalar_lea.vmem [#allocation13], 2
    %v3009 = vld [vmem:[%s3008] sm:$0x3]
    %v3011 = vlaneseq
    %v3012 = vshrl.u32 %v3011, 7
    %v3013 = vsub.s32 0, %v3012
    %v3014 = vrot.slane %v3009, %v3013
    %v3015 = vlaneseq
    %v3016 = vshrl.u32 %v3015, 7
    %v3017 = vsub.s32 1, %v3016
    %v3018 = vrot.slane %v3009, %v3017
    %v3021 = vadd.f32 %v2992, %v3014
    %v3022 = vadd.f32 %v2993, %v3018
    %v3023 = vadd.f32 %v2994, %v3014
    %v3024 = vadd.f32 %v2995, %v3018
    %v3025 = vadd.f32 %v2996, %v3014
    %v3026 = vadd.f32 %v2997, %v3018
    %v3027 = vadd.f32 %v2998, %v3014
    %v3028 = vadd.f32 %v2999, %v3018
    %v3029 = vadd.f32 %v3000, %v3014
    %v3030 = vadd.f32 %v3001, %v3018
    %v3031 = vadd.f32 %v3002, %v3014
    %v3032 = vadd.f32 %v3003, %v3018
    %v3033 = vadd.f32 %v3004, %v3014
    %v3034 = vadd.f32 %v3005, %v3018
    %v3035 = vadd.f32 %v3006, %v3014
    %v3036 = vadd.f32 %v3007, %v3018
    %vm3037 = vcmp.gt.f32.partialorder %v3021, 0.0
    %vm3038 = vcmp.gt.f32.partialorder %v3022, 0.0
    %vm3039 = vcmp.gt.f32.partialorder %v3023, 0.0
    %vm3040 = vcmp.gt.f32.partialorder %v3024, 0.0
    %vm3041 = vcmp.gt.f32.partialorder %v3025, 0.0
    %vm3042 = vcmp.gt.f32.partialorder %v3026, 0.0
    %vm3043 = vcmp.gt.f32.partialorder %v3027, 0.0
    %vm3044 = vcmp.gt.f32.partialorder %v3028, 0.0
    %vm3045 = vcmp.gt.f32.partialorder %v3029, 0.0
    %vm3046 = vcmp.gt.f32.partialorder %v3030, 0.0
    %vm3047 = vcmp.gt.f32.partialorder %v3031, 0.0
    %vm3048 = vcmp.gt.f32.partialorder %v3032, 0.0
    %vm3049 = vcmp.gt.f32.partialorder %v3033, 0.0
    %vm3050 = vcmp.gt.f32.partialorder %v3034, 0.0
    %vm3051 = vcmp.gt.f32.partialorder %v3035, 0.0
    %vm3052 = vcmp.gt.f32.partialorder %v3036, 0.0
    %s3053 = scalar_lea.vmem [#allocation14], 2
    %v3054 = vld [vmem:[%s3053] sm:$0x3]
    %v3056 = vlaneseq
    %v3057 = vshrl.u32 %v3056, 7
    %v3058 = vsub.s32 0, %v3057
    %v3059 = vrot.slane %v3054, %v3058
    %v3060 = vlaneseq
    %v3061 = vshrl.u32 %v3060, 7
    %v3062 = vsub.s32 1, %v3061
    %v3063 = vrot.slane %v3054, %v3062
    %v3066 = vmul.f32 %v3059, %v3021
    %v3067 = vmul.f32 %v3063, %v3022
    %v3068 = vmul.f32 %v3059, %v3023
    %v3069 = vmul.f32 %v3063, %v3024
    %v3070 = vmul.f32 %v3059, %v3025
    %v3071 = vmul.f32 %v3063, %v3026
    %v3072 = vmul.f32 %v3059, %v3027
    %v3073 = vmul.f32 %v3063, %v3028
    %v3074 = vmul.f32 %v3059, %v3029
    %v3075 = vmul.f32 %v3063, %v3030
    %v3076 = vmul.f32 %v3059, %v3031
    %v3077 = vmul.f32 %v3063, %v3032
    %v3078 = vmul.f32 %v3059, %v3033
    %v3079 = vmul.f32 %v3063, %v3034
    %v3080 = vmul.f32 %v3059, %v3035
    %v3081 = vmul.f32 %v3063, %v3036
    %v3082 = vsel %vm3037, %v3021, %v3066
    %v3083 = vsel %vm3038, %v3022, %v3067
    %v3084 = vsel %vm3039, %v3023, %v3068
    %v3085 = vsel %vm3040, %v3024, %v3069
    %v3086 = vsel %vm3041, %v3025, %v3070
    %v3087 = vsel %vm3042, %v3026, %v3071
    %v3088 = vsel %vm3043, %v3027, %v3072
    %v3089 = vsel %vm3044, %v3028, %v3073
    %v3090 = vsel %vm3045, %v3029, %v3074
    %v3091 = vsel %vm3046, %v3030, %v3075
    %v3092 = vsel %vm3047, %v3031, %v3076
    %v3093 = vsel %vm3048, %v3032, %v3077
    %v3094 = vsel %vm3049, %v3033, %v3078
    %v3095 = vsel %vm3050, %v3034, %v3079
    %v3096 = vsel %vm3051, %v3035, %v3080
    %v3097 = vsel %vm3052, %v3036, %v3081
    %v3114 = vrot.slane %v3082, 7
    %v3115 = vrot.slane %v3083, 7
    %v3116 = vrot.slane %v3084, 7
    %v3117 = vsel %vm682, %v3114, %v3116
    %v3118 = vrot.slane %v3085, 7
    %v3119 = vsel %vm682, %v3115, %v3118
    %v3120 = vrot.slane %v3086, 7
    %v3121 = vrot.slane %v3087, 7
    %v3122 = vrot.slane %v3088, 7
    %v3123 = vsel %vm682, %v3120, %v3122
    %v3124 = vrot.slane %v3089, 7
    %v3125 = vsel %vm682, %v3121, %v3124
    %v3126 = vrot.slane %v3090, 7
    %v3127 = vrot.slane %v3091, 7
    %v3128 = vrot.slane %v3092, 7
    %v3129 = vsel %vm682, %v3126, %v3128
    %v3130 = vrot.slane %v3093, 7
    %v3131 = vsel %vm682, %v3127, %v3130
    %v3132 = vrot.slane %v3094, 7
    %v3133 = vrot.slane %v3095, 7
    %v3134 = vrot.slane %v3096, 7
    %v3135 = vsel %vm682, %v3132, %v3134
    %v3136 = vrot.slane %v3097, 7
    %v3137 = vsel %vm682, %v3133, %v3136
    %3162 = vst [vmem:[#allocation3] sm:$0xfe] %v3114
    %3163 = vst [vmem:[#allocation3 + $0x8] sm:$0xfe] %v3115
    %3164 = vst [vmem:[#allocation3 + $0x10] sm:$0xff] %v3117
    %3165 = vst [vmem:[#allocation3 + $0x18] sm:$0xff] %v3119
    %3166 = vst [vmem:[#allocation3 + $0x20] sm:$0x1] %v3116
    %3167 = vst [vmem:[#allocation3 + $0x28] sm:$0x1] %v3118
    %3168 = vst [vmem:[#allocation3 + $0x30] sm:$0xfe] %v3120
    %3169 = vst [vmem:[#allocation3 + $0x38] sm:$0xfe] %v3121
    %3170 = vst [vmem:[#allocation3 + $0x40] sm:$0xff] %v3123
    %3171 = vst [vmem:[#allocation3 + $0x48] sm:$0xff] %v3125
    %3172 = vst [vmem:[#allocation3 + $0x50] sm:$0x1] %v3122
    %3173 = vst [vmem:[#allocation3 + $0x58] sm:$0x1] %v3124
    %3174 = vst [vmem:[#allocation3 + $0x60] sm:$0xfe] %v3126
    %3175 = vst [vmem:[#allocation3 + $0x68] sm:$0xfe] %v3127
    %3176 = vst [vmem:[#allocation3 + $0x70] sm:$0xff] %v3129
    %3177 = vst [vmem:[#allocation3 + $0x78] sm:$0xff] %v3131
    %3178 = vst [vmem:[#allocation3 + $0x80] sm:$0x1] %v3128
    %3179 = vst [vmem:[#allocation3 + $0x88] sm:$0x1] %v3130
    %3180 = vst [vmem:[#allocation3 + $0x90] sm:$0xfe] %v3132
    %3181 = vst [vmem:[#allocation3 + $0x98] sm:$0xfe] %v3133
    %3182 = vst [vmem:[#allocation3 + $0xa0] sm:$0xff] %v3135
    %3183 = vst [vmem:[#allocation3 + $0xa8] sm:$0xff] %v3137
    %3184 = vst [vmem:[#allocation3 + $0xb0] sm:$0x1] %v3134
    %3185 = vst [vmem:[#allocation3 + $0xb8] sm:$0x1] %v3136
    %v3186 = vld [vmem:[#allocation3] sm:$0xff]
    %v3187 = vld [vmem:[#allocation3 + $0x8] sm:$0xff]
    %v3188 = vld [vmem:[#allocation3 + $0x10] sm:$0xff]
    %v3189 = vld [vmem:[#allocation3 + $0x18] sm:$0xff]
    %v3190 = vld [vmem:[#allocation3 + $0x30] sm:$0xff]
    %v3191 = vld [vmem:[#allocation3 + $0x38] sm:$0xff]
    %v3192 = vld [vmem:[#allocation3 + $0x40] sm:$0xff]
    %v3193 = vld [vmem:[#allocation3 + $0x48] sm:$0xff]
    %v3194 = vld [vmem:[#allocation3 + $0x60] sm:$0xff]
    %v3195 = vld [vmem:[#allocation3 + $0x68] sm:$0xff]
    %v3196 = vld [vmem:[#allocation3 + $0x70] sm:$0xff]
    %v3197 = vld [vmem:[#allocation3 + $0x78] sm:$0xff]
    %v3198 = vld [vmem:[#allocation3 + $0x90] sm:$0xff]
    %v3199 = vld [vmem:[#allocation3 + $0x98] sm:$0xff]
    %v3200 = vld [vmem:[#allocation3 + $0xa0] sm:$0xff]
    %v3201 = vld [vmem:[#allocation3 + $0xa8] sm:$0xff]
    %v3202 = vpack.c.bf16 %v3188, %v3186
    %v3203 = vpack.c.bf16 %v3189, %v3187
    %v3204 = vpack.c.bf16 %v3192, %v3190
    %v3205 = vpack.c.bf16 %v3193, %v3191
    %v3206 = vpack.c.bf16 %v3196, %v3194
    %v3207 = vpack.c.bf16 %v3197, %v3195
    %v3208 = vpack.c.bf16 %v3200, %v3198
    %v3209 = vpack.c.bf16 %v3201, %v3199
    %s3210 = scalar_lea.vmem [#allocation11], 1536
    %v3211 = vld [vmem:[%s3210] sm:$0xff]
    %v3212 = vld [vmem:[%s3210 + $0x8] sm:$0xff]
    %v3213 = vld [vmem:[%s3210 + $0x10] sm:$0xff]
    %v3214 = vld [vmem:[%s3210 + $0x18] sm:$0xff]
    %v3215 = vld [vmem:[%s3210 + $0x20] sm:$0xff]
    %v3216 = vld [vmem:[%s3210 + $0x28] sm:$0xff]
    %v3217 = vld [vmem:[%s3210 + $0x30] sm:$0xff]
    %v3218 = vld [vmem:[%s3210 + $0x38] sm:$0xff]
    %v3219 = vld [vmem:[%s3210 + $0x40] sm:$0xff]
    %v3220 = vld [vmem:[%s3210 + $0x48] sm:$0xff]
    %v3221 = vld [vmem:[%s3210 + $0x50] sm:$0xff]
    %v3222 = vld [vmem:[%s3210 + $0x58] sm:$0xff]
    %v3223 = vld [vmem:[%s3210 + $0x60] sm:$0xff]
    %v3224 = vld [vmem:[%s3210 + $0x68] sm:$0xff]
    %v3225 = vld [vmem:[%s3210 + $0x70] sm:$0xff]
    %v3226 = vld [vmem:[%s3210 + $0x78] sm:$0xff]
    %v3227 = vld [vmem:[%s3210 + $0x80] sm:$0xff]
    %v3228 = vld [vmem:[%s3210 + $0x88] sm:$0xff]
    %v3229 = vld [vmem:[%s3210 + $0x90] sm:$0xff]
    %v3230 = vld [vmem:[%s3210 + $0x98] sm:$0xff]
    %v3231 = vld [vmem:[%s3210 + $0xa0] sm:$0xff]
    %v3232 = vld [vmem:[%s3210 + $0xa8] sm:$0xff]
    %v3233 = vld [vmem:[%s3210 + $0xb0] sm:$0xff]
    %v3234 = vld [vmem:[%s3210 + $0xb8] sm:$0xff]
    %v3235 = vld [vmem:[%s3210 + $0xc0] sm:$0xff]
    %v3236 = vld [vmem:[%s3210 + $0xc8] sm:$0xff]
    %v3237 = vld [vmem:[%s3210 + $0xd0] sm:$0xff]
    %v3238 = vld [vmem:[%s3210 + $0xd8] sm:$0xff]
    %v3239 = vld [vmem:[%s3210 + $0xe0] sm:$0xff]
    %v3240 = vld [vmem:[%s3210 + $0xe8] sm:$0xff]
    %v3241 = vld [vmem:[%s3210 + $0xf0] sm:$0xff]
    %v3242 = vld [vmem:[%s3210 + $0xf8] sm:$0xff]
    %v3243 = vld [vmem:[#allocation3] sm:$0xfe]
    %v3244 = vld [vmem:[#allocation3 + $0x8] sm:$0xfe]
    %v3245 = vld [vmem:[#allocation3 + $0x20] sm:$0x1]
    %v3246 = vld [vmem:[#allocation3 + $0x28] sm:$0x1]
    %v3247 = vld [vmem:[#allocation3 + $0x30] sm:$0xfe]
    %v3248 = vld [vmem:[#allocation3 + $0x38] sm:$0xfe]
    %v3249 = vld [vmem:[#allocation3 + $0x50] sm:$0x1]
    %v3250 = vld [vmem:[#allocation3 + $0x58] sm:$0x1]
    %v3251 = vld [vmem:[#allocation3 + $0x60] sm:$0xfe]
    %v3252 = vld [vmem:[#allocation3 + $0x68] sm:$0xfe]
    %v3253 = vld [vmem:[#allocation3 + $0x80] sm:$0x1]
    %v3254 = vld [vmem:[#allocation3 + $0x88] sm:$0x1]
    %v3255 = vld [vmem:[#allocation3 + $0x90] sm:$0xfe]
    %v3256 = vld [vmem:[#allocation3 + $0x98] sm:$0xfe]
    %v3257 = vld [vmem:[#allocation3 + $0xb0] sm:$0x1]
    %v3258 = vld [vmem:[#allocation3 + $0xb8] sm:$0x1]
    %v3283 = vrot.slane %v3243, 1
    %v3284 = vrot.slane %v3188, 1
    %v3285 = vsel %vm851, %v3283, %v3284
    %v3286 = vrot.slane %v3244, 1
    %v3287 = vrot.slane %v3189, 1
    %v3288 = vsel %vm851, %v3286, %v3287
    %v3289 = vrot.slane %v3245, 1
    %v3290 = vsel %vm851, %v3284, %v3289
    %v3291 = vrot.slane %v3246, 1
    %v3292 = vsel %vm851, %v3287, %v3291
    %v3293 = vrot.slane %v3247, 1
    %v3294 = vrot.slane %v3192, 1
    %v3295 = vsel %vm851, %v3293, %v3294
    %v3296 = vrot.slane %v3248, 1
    %v3297 = vrot.slane %v3193, 1
    %v3298 = vsel %vm851, %v3296, %v3297
    %v3299 = vrot.slane %v3249, 1
    %v3300 = vsel %vm851, %v3294, %v3299
    %v3301 = vrot.slane %v3250, 1
    %v3302 = vsel %vm851, %v3297, %v3301
    %v3303 = vrot.slane %v3251, 1
    %v3304 = vrot.slane %v3196, 1
    %v3305 = vsel %vm851, %v3303, %v3304
    %v3306 = vrot.slane %v3252, 1
    %v3307 = vrot.slane %v3197, 1
    %v3308 = vsel %vm851, %v3306, %v3307
    %v3309 = vrot.slane %v3253, 1
    %v3310 = vsel %vm851, %v3304, %v3309
    %v3311 = vrot.slane %v3254, 1
    %v3312 = vsel %vm851, %v3307, %v3311
    %v3313 = vrot.slane %v3255, 1
    %v3314 = vrot.slane %v3200, 1
    %v3315 = vsel %vm851, %v3313, %v3314
    %v3316 = vrot.slane %v3256, 1
    %v3317 = vrot.slane %v3201, 1
    %v3318 = vsel %vm851, %v3316, %v3317
    %v3319 = vrot.slane %v3257, 1
    %v3320 = vsel %vm851, %v3314, %v3319
    %v3321 = vrot.slane %v3258, 1
    %v3322 = vsel %vm851, %v3317, %v3321
    %v3339 = vpack.c.bf16 %v3290, %v3285
    %v3340 = vpack.c.bf16 %v3292, %v3288
    %v3341 = vpack.c.bf16 %v3300, %v3295
    %v3342 = vpack.c.bf16 %v3302, %v3298
    %v3343 = vpack.c.bf16 %v3310, %v3305
    %v3344 = vpack.c.bf16 %v3312, %v3308
    %v3345 = vpack.c.bf16 %v3320, %v3315
    %v3346 = vpack.c.bf16 %v3322, %v3318
    %s3347 = scalar_lea.vmem [#allocation11], 1792
    %v3348 = vld [vmem:[%s3347] sm:$0xff]
    %v3349 = vld [vmem:[%s3347 + $0x8] sm:$0xff]
    %v3350 = vld [vmem:[%s3347 + $0x10] sm:$0xff]
    %v3351 = vld [vmem:[%s3347 + $0x18] sm:$0xff]
    %v3352 = vld [vmem:[%s3347 + $0x20] sm:$0xff]
    %v3353 = vld [vmem:[%s3347 + $0x28] sm:$0xff]
    %v3354 = vld [vmem:[%s3347 + $0x30] sm:$0xff]
    %v3355 = vld [vmem:[%s3347 + $0x38] sm:$0xff]
    %v3356 = vld [vmem:[%s3347 + $0x40] sm:$0xff]
    %v3357 = vld [vmem:[%s3347 + $0x48] sm:$0xff]
    %v3358 = vld [vmem:[%s3347 + $0x50] sm:$0xff]
    %v3359 = vld [vmem:[%s3347 + $0x58] sm:$0xff]
    %v3360 = vld [vmem:[%s3347 + $0x60] sm:$0xff]
    %v3361 = vld [vmem:[%s3347 + $0x68] sm:$0xff]
    %v3362 = vld [vmem:[%s3347 + $0x70] sm:$0xff]
    %v3363 = vld [vmem:[%s3347 + $0x78] sm:$0xff]
    %v3364 = vld [vmem:[%s3347 + $0x80] sm:$0xff]
    %v3365 = vld [vmem:[%s3347 + $0x88] sm:$0xff]
    %v3366 = vld [vmem:[%s3347 + $0x90] sm:$0xff]
    %v3367 = vld [vmem:[%s3347 + $0x98] sm:$0xff]
    %v3368 = vld [vmem:[%s3347 + $0xa0] sm:$0xff]
    %v3369 = vld [vmem:[%s3347 + $0xa8] sm:$0xff]
    %v3370 = vld [vmem:[%s3347 + $0xb0] sm:$0xff]
    %v3371 = vld [vmem:[%s3347 + $0xb8] sm:$0xff]
    %v3372 = vld [vmem:[%s3347 + $0xc0] sm:$0xff]
    %v3373 = vld [vmem:[%s3347 + $0xc8] sm:$0xff]
    %v3374 = vld [vmem:[%s3347 + $0xd0] sm:$0xff]
    %v3375 = vld [vmem:[%s3347 + $0xd8] sm:$0xff]
    %v3376 = vld [vmem:[%s3347 + $0xe0] sm:$0xff]
    %v3377 = vld [vmem:[%s3347 + $0xe8] sm:$0xff]
    %v3378 = vld [vmem:[%s3347 + $0xf0] sm:$0xff]
    %v3379 = vld [vmem:[%s3347 + $0xf8] sm:$0xff]
    %v3412 = vunpack.c.l.b16 %v3348
    %v3413 = vunpack.c.h.b16 %v3348
    %v3414 = vunpack.c.l.b16 %v3349
    %v3415 = vunpack.c.h.b16 %v3349
    %v3416 = vunpack.c.l.b16 %v3350
    %v3417 = vunpack.c.h.b16 %v3350
    %v3418 = vunpack.c.l.b16 %v3351
    %v3419 = vunpack.c.h.b16 %v3351
    %v3420 = vunpack.c.l.b16 %v3352
    %v3421 = vunpack.c.h.b16 %v3352
    %v3422 = vunpack.c.l.b16 %v3353
    %v3423 = vunpack.c.h.b16 %v3353
    %v3424 = vunpack.c.l.b16 %v3354
    %v3425 = vunpack.c.h.b16 %v3354
    %v3426 = vunpack.c.l.b16 %v3355
    %v3427 = vunpack.c.h.b16 %v3355
    %v3428 = vunpack.c.l.b16 %v3356
    %v3429 = vunpack.c.h.b16 %v3356
    %v3430 = vunpack.c.l.b16 %v3357
    %v3431 = vunpack.c.h.b16 %v3357
    %v3432 = vunpack.c.l.b16 %v3358
    %v3433 = vunpack.c.h.b16 %v3358
    %v3434 = vunpack.c.l.b16 %v3359
    %v3435 = vunpack.c.h.b16 %v3359
    %v3436 = vunpack.c.l.b16 %v3360
    %v3437 = vunpack.c.h.b16 %v3360
    %v3438 = vunpack.c.l.b16 %v3361
    %v3439 = vunpack.c.h.b16 %v3361
    %v3440 = vunpack.c.l.b16 %v3362
    %v3441 = vunpack.c.h.b16 %v3362
    %v3442 = vunpack.c.l.b16 %v3363
    %v3443 = vunpack.c.h.b16 %v3363
    %v3444 = vunpack.c.l.b16 %v3364
    %v3445 = vunpack.c.h.b16 %v3364
    %v3446 = vunpack.c.l.b16 %v3365
    %v3447 = vunpack.c.h.b16 %v3365
    %v3448 = vunpack.c.l.b16 %v3366
    %v3449 = vunpack.c.h.b16 %v3366
    %v3450 = vunpack.c.l.b16 %v3367
    %v3451 = vunpack.c.h.b16 %v3367
    %v3452 = vunpack.c.l.b16 %v3368
    %v3453 = vunpack.c.h.b16 %v3368
    %v3454 = vunpack.c.l.b16 %v3369
    %v3455 = vunpack.c.h.b16 %v3369
    %v3456 = vunpack.c.l.b16 %v3370
    %v3457 = vunpack.c.h.b16 %v3370
    %v3458 = vunpack.c.l.b16 %v3371
    %v3459 = vunpack.c.h.b16 %v3371
    %v3460 = vunpack.c.l.b16 %v3372
    %v3461 = vunpack.c.h.b16 %v3372
    %v3462 = vunpack.c.l.b16 %v3373
    %v3463 = vunpack.c.h.b16 %v3373
    %v3464 = vunpack.c.l.b16 %v3374
    %v3465 = vunpack.c.h.b16 %v3374
    %v3466 = vunpack.c.l.b16 %v3375
    %v3467 = vunpack.c.h.b16 %v3375
    %v3468 = vunpack.c.l.b16 %v3376
    %v3469 = vunpack.c.h.b16 %v3376
    %v3470 = vunpack.c.l.b16 %v3377
    %v3471 = vunpack.c.h.b16 %v3377
    %v3472 = vunpack.c.l.b16 %v3378
    %v3473 = vunpack.c.h.b16 %v3378
    %v3474 = vunpack.c.l.b16 %v3379
    %v3475 = vunpack.c.h.b16 %v3379
    %v3476 = vpack.c.b16 %v3414, %v3412
    %v3477 = vpack.c.b16 %v3415, %v3413
    %v3478 = vpack.c.b16 %v3418, %v3416
    %v3479 = vpack.c.b16 %v3419, %v3417
    %v3480 = vpack.c.b16 %v3422, %v3420
    %v3481 = vpack.c.b16 %v3423, %v3421
    %v3482 = vpack.c.b16 %v3426, %v3424
    %v3483 = vpack.c.b16 %v3427, %v3425
    %v3484 = vpack.c.b16 %v3430, %v3428
    %v3485 = vpack.c.b16 %v3431, %v3429
    %v3486 = vpack.c.b16 %v3434, %v3432
    %v3487 = vpack.c.b16 %v3435, %v3433
    %v3488 = vpack.c.b16 %v3438, %v3436
    %v3489 = vpack.c.b16 %v3439, %v3437
    %v3490 = vpack.c.b16 %v3442, %v3440
    %v3491 = vpack.c.b16 %v3443, %v3441
    %v3492 = vpack.c.b16 %v3446, %v3444
    %v3493 = vpack.c.b16 %v3447, %v3445
    %v3494 = vpack.c.b16 %v3450, %v3448
    %v3495 = vpack.c.b16 %v3451, %v3449
    %v3496 = vpack.c.b16 %v3454, %v3452
    %v3497 = vpack.c.b16 %v3455, %v3453
    %v3498 = vpack.c.b16 %v3458, %v3456
    %v3499 = vpack.c.b16 %v3459, %v3457
    %v3500 = vpack.c.b16 %v3462, %v3460
    %v3501 = vpack.c.b16 %v3463, %v3461
    %v3502 = vpack.c.b16 %v3466, %v3464
    %v3503 = vpack.c.b16 %v3467, %v3465
    %v3504 = vpack.c.b16 %v3470, %v3468
    %v3505 = vpack.c.b16 %v3471, %v3469
    %v3506 = vpack.c.b16 %v3474, %v3472
    %v3507 = vpack.c.b16 %v3475, %v3473
    %3540 = vmatprep.subr.bf16.mxu0 %v3477
    %3541 = vmatpush1.bf16.msra.mxu0 %v3476
    %3542 = vmatprep.subr.bf16.mxu0 %v3479
    %3543 = vmatpush1.bf16.msra.mxu0 %v3478
    %3544 = vmatprep.subr.bf16.mxu0 %v3481
    %3545 = vmatpush1.bf16.msra.mxu0 %v3480
    %3546 = vmatprep.subr.bf16.mxu0 %v3483
    %3547 = vmatpush1.bf16.msra.mxu0 %v3482
    %3548 = vmatprep.subr.bf16.mxu0 %v3485
    %3549 = vmatpush1.bf16.msra.mxu0 %v3484
    %3550 = vmatprep.subr.bf16.mxu0 %v3487
    %3551 = vmatpush1.bf16.msra.mxu0 %v3486
    %3552 = vmatprep.subr.bf16.mxu0 %v3489
    %3553 = vmatpush1.bf16.msra.mxu0 %v3488
    %3554 = vmatprep.subr.bf16.mxu0 %v3491
    %3555 = vmatpush1.bf16.msra.mxu0 %v3490
    %3556 = vmatprep.subr.bf16.mxu0 %v3493
    %3557 = vmatpush1.bf16.msra.mxu0 %v3492
    %3558 = vmatprep.subr.bf16.mxu0 %v3495
    %3559 = vmatpush1.bf16.msra.mxu0 %v3494
    %3560 = vmatprep.subr.bf16.mxu0 %v3497
    %3561 = vmatpush1.bf16.msra.mxu0 %v3496
    %3562 = vmatprep.subr.bf16.mxu0 %v3499
    %3563 = vmatpush1.bf16.msra.mxu0 %v3498
    %3564 = vmatprep.subr.bf16.mxu0 %v3501
    %3565 = vmatpush1.bf16.msra.mxu0 %v3500
    %3566 = vmatprep.subr.bf16.mxu0 %v3503
    %3567 = vmatpush1.bf16.msra.mxu0 %v3502
    %3568 = vmatprep.subr.bf16.mxu0 %v3505
    %3569 = vmatpush1.bf16.msra.mxu0 %v3504
    %3570 = vmatprep.subr.bf16.mxu0 %v3507
    %3571 = vmatpush1.bf16.msra.mxu0 %v3506
    %3572 = vmatprep.mubr.bf16.mxu0 %v3340
    %3573 = vmatmul.mubr.bf16.gmra.mrb[0].mxu0 %v3339
    %v3574 = vpop.f32.mrb[0].mxu0
    %v3575 = vadd.f32 0.0, %v3574
    %v3576 = vpop.f32.mrb[0].mxu0
    %v3577 = vadd.f32 0.0, %v3576
    %v3578 = vpop.f32.mrb[0].mxu0
    %v3579 = vadd.f32 0.0, %v3578
    %v3580 = vpop.f32.mrb[0].mxu0
    %v3581 = vadd.f32 0.0, %v3580
    %3582 = vmatprep.mubr.bf16.mxu0 %v3342
    %3583 = vmatmul.mubr.bf16.gmra.mrb[0].mxu0 %v3341
    %v3584 = vpop.f32.mrb[0].mxu0
    %v3585 = vadd.f32 0.0, %v3584
    %v3586 = vpop.f32.mrb[0].mxu0
    %v3587 = vadd.f32 0.0, %v3586
    %v3588 = vpop.f32.mrb[0].mxu0
    %v3589 = vadd.f32 0.0, %v3588
    %v3590 = vpop.f32.mrb[0].mxu0
    %v3591 = vadd.f32 0.0, %v3590
    %3592 = vmatprep.mubr.bf16.mxu0 %v3344
    %3593 = vmatmul.mubr.bf16.gmra.mrb[0].mxu0 %v3343
    %v3594 = vpop.f32.mrb[0].mxu0
    %v3595 = vadd.f32 0.0, %v3594
    %v3596 = vpop.f32.mrb[0].mxu0
    %v3597 = vadd.f32 0.0, %v3596
    %v3598 = vpop.f32.mrb[0].mxu0
    %v3599 = vadd.f32 0.0, %v3598
    %v3600 = vpop.f32.mrb[0].mxu0
    %v3601 = vadd.f32 0.0, %v3600
    %3602 = vmatprep.mubr.bf16.mxu0 %v3346
    %3603 = vmatmul.mubr.bf16.gmra.mrb[0].mxu0 %v3345
    %v3604 = vpop.f32.mrb[0].mxu0
    %v3605 = vadd.f32 0.0, %v3604
    %v3606 = vpop.f32.mrb[0].mxu0
    %v3607 = vadd.f32 0.0, %v3606
    %v3608 = vpop.f32.mrb[0].mxu0
    %v3609 = vadd.f32 0.0, %v3608
    %v3610 = vpop.f32.mrb[0].mxu0
    %v3611 = vadd.f32 0.0, %v3610
    %3612 = vdwg.mxu0
    %v3645 = vunpack.c.l.b16 %v3211
    %v3646 = vunpack.c.h.b16 %v3211
    %v3647 = vunpack.c.l.b16 %v3212
    %v3648 = vunpack.c.h.b16 %v3212
    %v3649 = vunpack.c.l.b16 %v3213
    %v3650 = vunpack.c.h.b16 %v3213
    %v3651 = vunpack.c.l.b16 %v3214
    %v3652 = vunpack.c.h.b16 %v3214
    %v3653 = vunpack.c.l.b16 %v3215
    %v3654 = vunpack.c.h.b16 %v3215
    %v3655 = vunpack.c.l.b16 %v3216
    %v3656 = vunpack.c.h.b16 %v3216
    %v3657 = vunpack.c.l.b16 %v3217
    %v3658 = vunpack.c.h.b16 %v3217
    %v3659 = vunpack.c.l.b16 %v3218
    %v3660 = vunpack.c.h.b16 %v3218
    %v3661 = vunpack.c.l.b16 %v3219
    %v3662 = vunpack.c.h.b16 %v3219
    %v3663 = vunpack.c.l.b16 %v3220
    %v3664 = vunpack.c.h.b16 %v3220
    %v3665 = vunpack.c.l.b16 %v3221
    %v3666 = vunpack.c.h.b16 %v3221
    %v3667 = vunpack.c.l.b16 %v3222
    %v3668 = vunpack.c.h.b16 %v3222
    %v3669 = vunpack.c.l.b16 %v3223
    %v3670 = vunpack.c.h.b16 %v3223
    %v3671 = vunpack.c.l.b16 %v3224
    %v3672 = vunpack.c.h.b16 %v3224
    %v3673 = vunpack.c.l.b16 %v3225
    %v3674 = vunpack.c.h.b16 %v3225
    %v3675 = vunpack.c.l.b16 %v3226
    %v3676 = vunpack.c.h.b16 %v3226
    %v3677 = vunpack.c.l.b16 %v3227
    %v3678 = vunpack.c.h.b16 %v3227
    %v3679 = vunpack.c.l.b16 %v3228
    %v3680 = vunpack.c.h.b16 %v3228
    %v3681 = vunpack.c.l.b16 %v3229
    %v3682 = vunpack.c.h.b16 %v3229
    %v3683 = vunpack.c.l.b16 %v3230
    %v3684 = vunpack.c.h.b16 %v3230
    %v3685 = vunpack.c.l.b16 %v3231
    %v3686 = vunpack.c.h.b16 %v3231
    %v3687 = vunpack.c.l.b16 %v3232
    %v3688 = vunpack.c.h.b16 %v3232
    %v3689 = vunpack.c.l.b16 %v3233
    %v3690 = vunpack.c.h.b16 %v3233
    %v3691 = vunpack.c.l.b16 %v3234
    %v3692 = vunpack.c.h.b16 %v3234
    %v3693 = vunpack.c.l.b16 %v3235
    %v3694 = vunpack.c.h.b16 %v3235
    %v3695 = vunpack.c.l.b16 %v3236
    %v3696 = vunpack.c.h.b16 %v3236
    %v3697 = vunpack.c.l.b16 %v3237
    %v3698 = vunpack.c.h.b16 %v3237
    %v3699 = vunpack.c.l.b16 %v3238
    %v3700 = vunpack.c.h.b16 %v3238
    %v3701 = vunpack.c.l.b16 %v3239
    %v3702 = vunpack.c.h.b16 %v3239
    %v3703 = vunpack.c.l.b16 %v3240
    %v3704 = vunpack.c.h.b16 %v3240
    %v3705 = vunpack.c.l.b16 %v3241
    %v3706 = vunpack.c.h.b16 %v3241
    %v3707 = vunpack.c.l.b16 %v3242
    %v3708 = vunpack.c.h.b16 %v3242
    %v3709 = vpack.c.b16 %v3647, %v3645
    %v3710 = vpack.c.b16 %v3648, %v3646
    %v3711 = vpack.c.b16 %v3651, %v3649
    %v3712 = vpack.c.b16 %v3652, %v3650
    %v3713 = vpack.c.b16 %v3655, %v3653
    %v3714 = vpack.c.b16 %v3656, %v3654
    %v3715 = vpack.c.b16 %v3659, %v3657
    %v3716 = vpack.c.b16 %v3660, %v3658
    %v3717 = vpack.c.b16 %v3663, %v3661
    %v3718 = vpack.c.b16 %v3664, %v3662
    %v3719 = vpack.c.b16 %v3667, %v3665
    %v3720 = vpack.c.b16 %v3668, %v3666
    %v3721 = vpack.c.b16 %v3671, %v3669
    %v3722 = vpack.c.b16 %v3672, %v3670
    %v3723 = vpack.c.b16 %v3675, %v3673
    %v3724 = vpack.c.b16 %v3676, %v3674
    %v3725 = vpack.c.b16 %v3679, %v3677
    %v3726 = vpack.c.b16 %v3680, %v3678
    %v3727 = vpack.c.b16 %v3683, %v3681
    %v3728 = vpack.c.b16 %v3684, %v3682
    %v3729 = vpack.c.b16 %v3687, %v3685
    %v3730 = vpack.c.b16 %v3688, %v3686
    %v3731 = vpack.c.b16 %v3691, %v3689
    %v3732 = vpack.c.b16 %v3692, %v3690
    %v3733 = vpack.c.b16 %v3695, %v3693
    %v3734 = vpack.c.b16 %v3696, %v3694
    %v3735 = vpack.c.b16 %v3699, %v3697
    %v3736 = vpack.c.b16 %v3700, %v3698
    %v3737 = vpack.c.b16 %v3703, %v3701
    %v3738 = vpack.c.b16 %v3704, %v3702
    %v3739 = vpack.c.b16 %v3707, %v3705
    %v3740 = vpack.c.b16 %v3708, %v3706
    %3773 = vmatprep.subr.bf16.mxu0 %v3710
    %3774 = vmatpush1.bf16.msra.mxu0 %v3709
    %3775 = vmatprep.subr.bf16.mxu0 %v3712
    %3776 = vmatpush1.bf16.msra.mxu0 %v3711
    %3777 = vmatprep.subr.bf16.mxu0 %v3714
    %3778 = vmatpush1.bf16.msra.mxu0 %v3713
    %3779 = vmatprep.subr.bf16.mxu0 %v3716
    %3780 = vmatpush1.bf16.msra.mxu0 %v3715
    %3781 = vmatprep.subr.bf16.mxu0 %v3718
    %3782 = vmatpush1.bf16.msra.mxu0 %v3717
    %3783 = vmatprep.subr.bf16.mxu0 %v3720
    %3784 = vmatpush1.bf16.msra.mxu0 %v3719
    %3785 = vmatprep.subr.bf16.mxu0 %v3722
    %3786 = vmatpush1.bf16.msra.mxu0 %v3721
    %3787 = vmatprep.subr.bf16.mxu0 %v3724
    %3788 = vmatpush1.bf16.msra.mxu0 %v3723
    %3789 = vmatprep.subr.bf16.mxu0 %v3726
    %3790 = vmatpush1.bf16.msra.mxu0 %v3725
    %3791 = vmatprep.subr.bf16.mxu0 %v3728
    %3792 = vmatpush1.bf16.msra.mxu0 %v3727
    %3793 = vmatprep.subr.bf16.mxu0 %v3730
    %3794 = vmatpush1.bf16.msra.mxu0 %v3729
    %3795 = vmatprep.subr.bf16.mxu0 %v3732
    %3796 = vmatpush1.bf16.msra.mxu0 %v3731
    %3797 = vmatprep.subr.bf16.mxu0 %v3734
    %3798 = vmatpush1.bf16.msra.mxu0 %v3733
    %3799 = vmatprep.subr.bf16.mxu0 %v3736
    %3800 = vmatpush1.bf16.msra.mxu0 %v3735
    %3801 = vmatprep.subr.bf16.mxu0 %v3738
    %3802 = vmatpush1.bf16.msra.mxu0 %v3737
    %3803 = vmatprep.subr.bf16.mxu0 %v3740
    %3804 = vmatpush1.bf16.msra.mxu0 %v3739
    %3805 = vmatprep.mubr.bf16.mxu0 %v3203
    %3806 = vmatmul.mubr.bf16.gmra.mrb[0].mxu0 %v3202
    %v3807 = vpop.f32.mrb[0].mxu0
    %v3808 = vadd.f32 %v3575, %v3807
    %v3809 = vpop.f32.mrb[0].mxu0
    %v3810 = vadd.f32 %v3577, %v3809
    %v3811 = vpop.f32.mrb[0].mxu0
    %v3812 = vadd.f32 %v3579, %v3811
    %v3813 = vpop.f32.mrb[0].mxu0
    %v3814 = vadd.f32 %v3581, %v3813
    %3815 = vmatprep.mubr.bf16.mxu0 %v3205
    %3816 = vmatmul.mubr.bf16.gmra.mrb[0].mxu0 %v3204
    %v3817 = vpop.f32.mrb[0].mxu0
    %v3818 = vadd.f32 %v3585, %v3817
    %v3819 = vpop.f32.mrb[0].mxu0
    %v3820 = vadd.f32 %v3587, %v3819
    %v3821 = vpop.f32.mrb[0].mxu0
    %v3822 = vadd.f32 %v3589, %v3821
    %v3823 = vpop.f32.mrb[0].mxu0
    %v3824 = vadd.f32 %v3591, %v3823
    %3825 = vmatprep.mubr.bf16.mxu0 %v3207
    %3826 = vmatmul.mubr.bf16.gmra.mrb[0].mxu0 %v3206
    %v3827 = vpop.f32.mrb[0].mxu0
    %v3828 = vadd.f32 %v3595, %v3827
    %v3829 = vpop.f32.mrb[0].mxu0
    %v3830 = vadd.f32 %v3597, %v3829
    %v3831 = vpop.f32.mrb[0].mxu0
    %v3832 = vadd.f32 %v3599, %v3831
    %v3833 = vpop.f32.mrb[0].mxu0
    %v3834 = vadd.f32 %v3601, %v3833
    %3835 = vmatprep.mubr.bf16.mxu0 %v3209
    %3836 = vmatmul.mubr.bf16.gmra.mrb[0].mxu0 %v3208
    %v3837 = vpop.f32.mrb[0].mxu0
    %v3838 = vadd.f32 %v3605, %v3837
    %v3839 = vpop.f32.mrb[0].mxu0
    %v3840 = vadd.f32 %v3607, %v3839
    %v3841 = vpop.f32.mrb[0].mxu0
    %v3842 = vadd.f32 %v3609, %v3841
    %v3843 = vpop.f32.mrb[0].mxu0
    %v3844 = vadd.f32 %v3611, %v3843
    %3845 = vdwg.mxu0
    %v3846 = vld [vmem:[#allocation3] sm:$0xfc]
    %v3847 = vld [vmem:[#allocation3 + $0x8] sm:$0xfc]
    %v3848 = vld [vmem:[#allocation3 + $0x20] sm:$0x3]
    %v3849 = vld [vmem:[#allocation3 + $0x28] sm:$0x3]
    %v3850 = vld [vmem:[#allocation3 + $0x30] sm:$0xfc]
    %v3851 = vld [vmem:[#allocation3 + $0x38] sm:$0xfc]
    %v3852 = vld [vmem:[#allocation3 + $0x50] sm:$0x3]
    %v3853 = vld [vmem:[#allocation3 + $0x58] sm:$0x3]
    %v3854 = vld [vmem:[#allocation3 + $0x60] sm:$0xfc]
    %v3855 = vld [vmem:[#allocation3 + $0x68] sm:$0xfc]
    %v3856 = vld [vmem:[#allocation3 + $0x80] sm:$0x3]
    %v3857 = vld [vmem:[#allocation3 + $0x88] sm:$0x3]
    %v3858 = vld [vmem:[#allocation3 + $0x90] sm:$0xfc]
    %v3859 = vld [vmem:[#allocation3 + $0x98] sm:$0xfc]
    %v3860 = vld [vmem:[#allocation3 + $0xb0] sm:$0x3]
    %v3861 = vld [vmem:[#allocation3 + $0xb8] sm:$0x3]
    %v3878 = vrot.slane %v3846, 2
    %v3879 = vrot.slane %v3188, 2
    %v3880 = vsel %vm1447, %v3878, %v3879
    %v3881 = vrot.slane %v3847, 2
    %v3882 = vrot.slane %v3189, 2
    %v3883 = vsel %vm1447, %v3881, %v3882
    %v3884 = vrot.slane %v3848, 2
    %v3885 = vsel %vm1447, %v3879, %v3884
    %v3886 = vrot.slane %v3849, 2
    %v3887 = vsel %vm1447, %v3882, %v3886
    %v3888 = vrot.slane %v3850, 2
    %v3889 = vrot.slane %v3192, 2
    %v3890 = vsel %vm1447, %v3888, %v3889
    %v3891 = vrot.slane %v3851, 2
    %v3892 = vrot.slane %v3193, 2
    %v3893 = vsel %vm1447, %v3891, %v3892
    %v3894 = vrot.slane %v3852, 2
    %v3895 = vsel %vm1447, %v3889, %v3894
    %v3896 = vrot.slane %v3853, 2
    %v3897 = vsel %vm1447, %v3892, %v3896
    %v3898 = vrot.slane %v3854, 2
    %v3899 = vrot.slane %v3196, 2
    %v3900 = vsel %vm1447, %v3898, %v3899
    %v3901 = vrot.slane %v3855, 2
    %v3902 = vrot.slane %v3197, 2
    %v3903 = vsel %vm1447, %v3901, %v3902
    %v3904 = vrot.slane %v3856, 2
    %v3905 = vsel %vm1447, %v3899, %v3904
    %v3906 = vrot.slane %v3857, 2
    %v3907 = vsel %vm1447, %v3902, %v3906
    %v3908 = vrot.slane %v3858, 2
    %v3909 = vrot.slane %v3200, 2
    %v3910 = vsel %vm1447, %v3908, %v3909
    %v3911 = vrot.slane %v3859, 2
    %v3912 = vrot.slane %v3201, 2
    %v3913 = vsel %vm1447, %v3911, %v3912
    %v3914 = vrot.slane %v3860, 2
    %v3915 = vsel %vm1447, %v3909, %v3914
    %v3916 = vrot.slane %v3861, 2
    %v3917 = vsel %vm1447, %v3912, %v3916
    %v3934 = vpack.c.bf16 %v3885, %v3880
    %v3935 = vpack.c.bf16 %v3887, %v3883
    %v3936 = vpack.c.bf16 %v3895, %v3890
    %v3937 = vpack.c.bf16 %v3897, %v3893
    %v3938 = vpack.c.bf16 %v3905, %v3900
    %v3939 = vpack.c.bf16 %v3907, %v3903
    %v3940 = vpack.c.bf16 %v3915, %v3910
    %v3941 = vpack.c.bf16 %v3917, %v3913
    %s3942 = scalar_lea.vmem [#allocation11], 2048
    %v3943 = vld [vmem:[%s3942] sm:$0xff]
    %v3944 = vld [vmem:[%s3942 + $0x8] sm:$0xff]
    %v3945 = vld [vmem:[%s3942 + $0x10] sm:$0xff]
    %v3946 = vld [vmem:[%s3942 + $0x18] sm:$0xff]
    %v3947 = vld [vmem:[%s3942 + $0x20] sm:$0xff]
    %v3948 = vld [vmem:[%s3942 + $0x28] sm:$0xff]
    %v3949 = vld [vmem:[%s3942 + $0x30] sm:$0xff]
    %v3950 = vld [vmem:[%s3942 + $0x38] sm:$0xff]
    %v3951 = vld [vmem:[%s3942 + $0x40] sm:$0xff]
    %v3952 = vld [vmem:[%s3942 + $0x48] sm:$0xff]
    %v3953 = vld [vmem:[%s3942 + $0x50] sm:$0xff]
    %v3954 = vld [vmem:[%s3942 + $0x58] sm:$0xff]
    %v3955 = vld [vmem:[%s3942 + $0x60] sm:$0xff]
    %v3956 = vld [vmem:[%s3942 + $0x68] sm:$0xff]
    %v3957 = vld [vmem:[%s3942 + $0x70] sm:$0xff]
    %v3958 = vld [vmem:[%s3942 + $0x78] sm:$0xff]
    %v3959 = vld [vmem:[%s3942 + $0x80] sm:$0xff]
    %v3960 = vld [vmem:[%s3942 + $0x88] sm:$0xff]
    %v3961 = vld [vmem:[%s3942 + $0x90] sm:$0xff]
    %v3962 = vld [vmem:[%s3942 + $0x98] sm:$0xff]
    %v3963 = vld [vmem:[%s3942 + $0xa0] sm:$0xff]
    %v3964 = vld [vmem:[%s3942 + $0xa8] sm:$0xff]
    %v3965 = vld [vmem:[%s3942 + $0xb0] sm:$0xff]
    %v3966 = vld [vmem:[%s3942 + $0xb8] sm:$0xff]
    %v3967 = vld [vmem:[%s3942 + $0xc0] sm:$0xff]
    %v3968 = vld [vmem:[%s3942 + $0xc8] sm:$0xff]
    %v3969 = vld [vmem:[%s3942 + $0xd0] sm:$0xff]
    %v3970 = vld [vmem:[%s3942 + $0xd8] sm:$0xff]
    %v3971 = vld [vmem:[%s3942 + $0xe0] sm:$0xff]
    %v3972 = vld [vmem:[%s3942 + $0xe8] sm:$0xff]
    %v3973 = vld [vmem:[%s3942 + $0xf0] sm:$0xff]
    %v3974 = vld [vmem:[%s3942 + $0xf8] sm:$0xff]
    %v4007 = vunpack.c.l.b16 %v3943
    %v4008 = vunpack.c.h.b16 %v3943
    %v4009 = vunpack.c.l.b16 %v3944
    %v4010 = vunpack.c.h.b16 %v3944
    %v4011 = vunpack.c.l.b16 %v3945
    %v4012 = vunpack.c.h.b16 %v3945
    %v4013 = vunpack.c.l.b16 %v3946
    %v4014 = vunpack.c.h.b16 %v3946
    %v4015 = vunpack.c.l.b16 %v3947
    %v4016 = vunpack.c.h.b16 %v3947
    %v4017 = vunpack.c.l.b16 %v3948
    %v4018 = vunpack.c.h.b16 %v3948
    %v4019 = vunpack.c.l.b16 %v3949
    %v4020 = vunpack.c.h.b16 %v3949
    %v4021 = vunpack.c.l.b16 %v3950
    %v4022 = vunpack.c.h.b16 %v3950
    %v4023 = vunpack.c.l.b16 %v3951
    %v4024 = vunpack.c.h.b16 %v3951
    %v4025 = vunpack.c.l.b16 %v3952
    %v4026 = vunpack.c.h.b16 %v3952
    %v4027 = vunpack.c.l.b16 %v3953
    %v4028 = vunpack.c.h.b16 %v3953
    %v4029 = vunpack.c.l.b16 %v3954
    %v4030 = vunpack.c.h.b16 %v3954
    %v4031 = vunpack.c.l.b16 %v3955
    %v4032 = vunpack.c.h.b16 %v3955
    %v4033 = vunpack.c.l.b16 %v3956
    %v4034 = vunpack.c.h.b16 %v3956
    %v4035 = vunpack.c.l.b16 %v3957
    %v4036 = vunpack.c.h.b16 %v3957
    %v4037 = vunpack.c.l.b16 %v3958
    %v4038 = vunpack.c.h.b16 %v3958
    %v4039 = vunpack.c.l.b16 %v3959
    %v4040 = vunpack.c.h.b16 %v3959
    %v4041 = vunpack.c.l.b16 %v3960
    %v4042 = vunpack.c.h.b16 %v3960
    %v4043 = vunpack.c.l.b16 %v3961
    %v4044 = vunpack.c.h.b16 %v3961
    %v4045 = vunpack.c.l.b16 %v3962
    %v4046 = vunpack.c.h.b16 %v3962
    %v4047 = vunpack.c.l.b16 %v3963
    %v4048 = vunpack.c.h.b16 %v3963
    %v4049 = vunpack.c.l.b16 %v3964
    %v4050 = vunpack.c.h.b16 %v3964
    %v4051 = vunpack.c.l.b16 %v3965
    %v4052 = vunpack.c.h.b16 %v3965
    %v4053 = vunpack.c.l.b16 %v3966
    %v4054 = vunpack.c.h.b16 %v3966
    %v4055 = vunpack.c.l.b16 %v3967
    %v4056 = vunpack.c.h.b16 %v3967
    %v4057 = vunpack.c.l.b16 %v3968
    %v4058 = vunpack.c.h.b16 %v3968
    %v4059 = vunpack.c.l.b16 %v3969
    %v4060 = vunpack.c.h.b16 %v3969
    %v4061 = vunpack.c.l.b16 %v3970
    %v4062 = vunpack.c.h.b16 %v3970
    %v4063 = vunpack.c.l.b16 %v3971
    %v4064 = vunpack.c.h.b16 %v3971
    %v4065 = vunpack.c.l.b16 %v3972
    %v4066 = vunpack.c.h.b16 %v3972
    %v4067 = vunpack.c.l.b16 %v3973
    %v4068 = vunpack.c.h.b16 %v3973
    %v4069 = vunpack.c.l.b16 %v3974
    %v4070 = vunpack.c.h.b16 %v3974
    %v4071 = vpack.c.b16 %v4009, %v4007
    %v4072 = vpack.c.b16 %v4010, %v4008
    %v4073 = vpack.c.b16 %v4013, %v4011
    %v4074 = vpack.c.b16 %v4014, %v4012
    %v4075 = vpack.c.b16 %v4017, %v4015
    %v4076 = vpack.c.b16 %v4018, %v4016
    %v4077 = vpack.c.b16 %v4021, %v4019
    %v4078 = vpack.c.b16 %v4022, %v4020
    %v4079 = vpack.c.b16 %v4025, %v4023
    %v4080 = vpack.c.b16 %v4026, %v4024
    %v4081 = vpack.c.b16 %v4029, %v4027
    %v4082 = vpack.c.b16 %v4030, %v4028
    %v4083 = vpack.c.b16 %v4033, %v4031
    %v4084 = vpack.c.b16 %v4034, %v4032
    %v4085 = vpack.c.b16 %v4037, %v4035
    %v4086 = vpack.c.b16 %v4038, %v4036
    %v4087 = vpack.c.b16 %v4041, %v4039
    %v4088 = vpack.c.b16 %v4042, %v4040
    %v4089 = vpack.c.b16 %v4045, %v4043
    %v4090 = vpack.c.b16 %v4046, %v4044
    %v4091 = vpack.c.b16 %v4049, %v4047
    %v4092 = vpack.c.b16 %v4050, %v4048
    %v4093 = vpack.c.b16 %v4053, %v4051
    %v4094 = vpack.c.b16 %v4054, %v4052
    %v4095 = vpack.c.b16 %v4057, %v4055
    %v4096 = vpack.c.b16 %v4058, %v4056
    %v4097 = vpack.c.b16 %v4061, %v4059
    %v4098 = vpack.c.b16 %v4062, %v4060
    %v4099 = vpack.c.b16 %v4065, %v4063
    %v4100 = vpack.c.b16 %v4066, %v4064
    %v4101 = vpack.c.b16 %v4069, %v4067
    %v4102 = vpack.c.b16 %v4070, %v4068
    %4135 = vmatprep.subr.bf16.mxu0 %v4072
    %4136 = vmatpush1.bf16.msra.mxu0 %v4071
    %4137 = vmatprep.subr.bf16.mxu0 %v4074
    %4138 = vmatpush1.bf16.msra.mxu0 %v4073
    %4139 = vmatprep.subr.bf16.mxu0 %v4076
    %4140 = vmatpush1.bf16.msra.mxu0 %v4075
    %4141 = vmatprep.subr.bf16.mxu0 %v4078
    %4142 = vmatpush1.bf16.msra.mxu0 %v4077
    %4143 = vmatprep.subr.bf16.mxu0 %v4080
    %4144 = vmatpush1.bf16.msra.mxu0 %v4079
    %4145 = vmatprep.subr.bf16.mxu0 %v4082
    %4146 = vmatpush1.bf16.msra.mxu0 %v4081
    %4147 = vmatprep.subr.bf16.mxu0 %v4084
    %4148 = vmatpush1.bf16.msra.mxu0 %v4083
    %4149 = vmatprep.subr.bf16.mxu0 %v4086
    %4150 = vmatpush1.bf16.msra.mxu0 %v4085
    %4151 = vmatprep.subr.bf16.mxu0 %v4088
    %4152 = vmatpush1.bf16.msra.mxu0 %v4087
    %4153 = vmatprep.subr.bf16.mxu0 %v4090
    %4154 = vmatpush1.bf16.msra.mxu0 %v4089
    %4155 = vmatprep.subr.bf16.mxu0 %v4092
    %4156 = vmatpush1.bf16.msra.mxu0 %v4091
    %4157 = vmatprep.subr.bf16.mxu0 %v4094
    %4158 = vmatpush1.bf16.msra.mxu0 %v4093
    %4159 = vmatprep.subr.bf16.mxu0 %v4096
    %4160 = vmatpush1.bf16.msra.mxu0 %v4095
    %4161 = vmatprep.subr.bf16.mxu0 %v4098
    %4162 = vmatpush1.bf16.msra.mxu0 %v4097
    %4163 = vmatprep.subr.bf16.mxu0 %v4100
    %4164 = vmatpush1.bf16.msra.mxu0 %v4099
    %4165 = vmatprep.subr.bf16.mxu0 %v4102
    %4166 = vmatpush1.bf16.msra.mxu0 %v4101
    %4167 = vmatprep.mubr.bf16.mxu0 %v3935
    %4168 = vmatmul.mubr.bf16.gmra.mrb[0].mxu0 %v3934
    %v4169 = vpop.f32.mrb[0].mxu0
    %v4170 = vadd.f32 0.0, %v4169
    %v4171 = vpop.f32.mrb[0].mxu0
    %v4172 = vadd.f32 0.0, %v4171
    %v4173 = vpop.f32.mrb[0].mxu0
    %v4174 = vadd.f32 0.0, %v4173
    %v4175 = vpop.f32.mrb[0].mxu0
    %v4176 = vadd.f32 0.0, %v4175
    %4177 = vmatprep.mubr.bf16.mxu0 %v3937
    %4178 = vmatmul.mubr.bf16.gmra.mrb[0].mxu0 %v3936
    %v4179 = vpop.f32.mrb[0].mxu0
    %v4180 = vadd.f32 0.0, %v4179
    %v4181 = vpop.f32.mrb[0].mxu0
    %v4182 = vadd.f32 0.0, %v4181
    %v4183 = vpop.f32.mrb[0].mxu0
    %v4184 = vadd.f32 0.0, %v4183
    %v4185 = vpop.f32.mrb[0].mxu0
    %v4186 = vadd.f32 0.0, %v4185
    %4187 = vmatprep.mubr.bf16.mxu0 %v3939
    %4188 = vmatmul.mubr.bf16.gmra.mrb[0].mxu0 %v3938
    %v4189 = vpop.f32.mrb[0].mxu0
    %v4190 = vadd.f32 0.0, %v4189
    %v4191 = vpop.f32.mrb[0].mxu0
    %v4192 = vadd.f32 0.0, %v4191
    %v4193 = vpop.f32.mrb[0].mxu0
    %v4194 = vadd.f32 0.0, %v4193
    %v4195 = vpop.f32.mrb[0].mxu0
    %v4196 = vadd.f32 0.0, %v4195
    %4197 = vmatprep.mubr.bf16.mxu0 %v3941
    %4198 = vmatmul.mubr.bf16.gmra.mrb[0].mxu0 %v3940
    %v4199 = vpop.f32.mrb[0].mxu0
    %v4200 = vadd.f32 0.0, %v4199
    %v4201 = vpop.f32.mrb[0].mxu0
    %v4202 = vadd.f32 0.0, %v4201
    %v4203 = vpop.f32.mrb[0].mxu0
    %v4204 = vadd.f32 0.0, %v4203
    %v4205 = vpop.f32.mrb[0].mxu0
    %v4206 = vadd.f32 0.0, %v4205
    %4207 = vdwg.mxu0
    %v4208 = vadd.f32 %v3808, %v4170
    %v4209 = vadd.f32 %v3810, %v4172
    %v4210 = vadd.f32 %v3812, %v4174
    %v4211 = vadd.f32 %v3814, %v4176
    %v4212 = vadd.f32 %v3818, %v4180
    %v4213 = vadd.f32 %v3820, %v4182
    %v4214 = vadd.f32 %v3822, %v4184
    %v4215 = vadd.f32 %v3824, %v4186
    %v4216 = vadd.f32 %v3828, %v4190
    %v4217 = vadd.f32 %v3830, %v4192
    %v4218 = vadd.f32 %v3832, %v4194
    %v4219 = vadd.f32 %v3834, %v4196
    %v4220 = vadd.f32 %v3838, %v4200
    %v4221 = vadd.f32 %v3840, %v4202
    %v4222 = vadd.f32 %v3842, %v4204
    %v4223 = vadd.f32 %v3844, %v4206
    %s4224 = scalar_lea.vmem [#allocation13], 4
    %v4225 = vld [vmem:[%s4224] sm:$0x3]
    %v4227 = vlaneseq
    %v4228 = vshrl.u32 %v4227, 7
    %v4229 = vsub.s32 0, %v4228
    %v4230 = vrot.slane %v4225, %v4229
    %v4231 = vlaneseq
    %v4232 = vshrl.u32 %v4231, 7
    %v4233 = vsub.s32 1, %v4232
    %v4234 = vrot.slane %v4225, %v4233
    %v4237 = vadd.f32 %v4208, %v4230
    %v4238 = vadd.f32 %v4209, %v4234
    %v4239 = vadd.f32 %v4210, %v4230
    %v4240 = vadd.f32 %v4211, %v4234
    %v4241 = vadd.f32 %v4212, %v4230
    %v4242 = vadd.f32 %v4213, %v4234
    %v4243 = vadd.f32 %v4214, %v4230
    %v4244 = vadd.f32 %v4215, %v4234
    %v4245 = vadd.f32 %v4216, %v4230
    %v4246 = vadd.f32 %v4217, %v4234
    %v4247 = vadd.f32 %v4218, %v4230
    %v4248 = vadd.f32 %v4219, %v4234
    %v4249 = vadd.f32 %v4220, %v4230
    %v4250 = vadd.f32 %v4221, %v4234
    %v4251 = vadd.f32 %v4222, %v4230
    %v4252 = vadd.f32 %v4223, %v4234
    %vm4253 = vcmp.gt.f32.partialorder %v4237, 0.0
    %vm4254 = vcmp.gt.f32.partialorder %v4238, 0.0
    %vm4255 = vcmp.gt.f32.partialorder %v4239, 0.0
    %vm4256 = vcmp.gt.f32.partialorder %v4240, 0.0
    %vm4257 = vcmp.gt.f32.partialorder %v4241, 0.0
    %vm4258 = vcmp.gt.f32.partialorder %v4242, 0.0
    %vm4259 = vcmp.gt.f32.partialorder %v4243, 0.0
    %vm4260 = vcmp.gt.f32.partialorder %v4244, 0.0
    %vm4261 = vcmp.gt.f32.partialorder %v4245, 0.0
    %vm4262 = vcmp.gt.f32.partialorder %v4246, 0.0
    %vm4263 = vcmp.gt.f32.partialorder %v4247, 0.0
    %vm4264 = vcmp.gt.f32.partialorder %v4248, 0.0
    %vm4265 = vcmp.gt.f32.partialorder %v4249, 0.0
    %vm4266 = vcmp.gt.f32.partialorder %v4250, 0.0
    %vm4267 = vcmp.gt.f32.partialorder %v4251, 0.0
    %vm4268 = vcmp.gt.f32.partialorder %v4252, 0.0
    %s4269 = scalar_lea.vmem [#allocation14], 4
    %v4270 = vld [vmem:[%s4269] sm:$0x3]
    %v4272 = vlaneseq
    %v4273 = vshrl.u32 %v4272, 7
    %v4274 = vsub.s32 0, %v4273
    %v4275 = vrot.slane %v4270, %v4274
    %v4276 = vlaneseq
    %v4277 = vshrl.u32 %v4276, 7
    %v4278 = vsub.s32 1, %v4277
    %v4279 = vrot.slane %v4270, %v4278
    %v4282 = vmul.f32 %v4275, %v4237
    %v4283 = vmul.f32 %v4279, %v4238
    %v4284 = vmul.f32 %v4275, %v4239
    %v4285 = vmul.f32 %v4279, %v4240
    %v4286 = vmul.f32 %v4275, %v4241
    %v4287 = vmul.f32 %v4279, %v4242
    %v4288 = vmul.f32 %v4275, %v4243
    %v4289 = vmul.f32 %v4279, %v4244
    %v4290 = vmul.f32 %v4275, %v4245
    %v4291 = vmul.f32 %v4279, %v4246
    %v4292 = vmul.f32 %v4275, %v4247
    %v4293 = vmul.f32 %v4279, %v4248
    %v4294 = vmul.f32 %v4275, %v4249
    %v4295 = vmul.f32 %v4279, %v4250
    %v4296 = vmul.f32 %v4275, %v4251
    %v4297 = vmul.f32 %v4279, %v4252
    %v4298 = vsel %vm4253, %v4237, %v4282
    %v4299 = vsel %vm4254, %v4238, %v4283
    %v4300 = vsel %vm4255, %v4239, %v4284
    %v4301 = vsel %vm4256, %v4240, %v4285
    %v4302 = vsel %vm4257, %v4241, %v4286
    %v4303 = vsel %vm4258, %v4242, %v4287
    %v4304 = vsel %vm4259, %v4243, %v4288
    %v4305 = vsel %vm4260, %v4244, %v4289
    %v4306 = vsel %vm4261, %v4245, %v4290
    %v4307 = vsel %vm4262, %v4246, %v4291
    %v4308 = vsel %vm4263, %v4247, %v4292
    %v4309 = vsel %vm4264, %v4248, %v4293
    %v4310 = vsel %vm4265, %v4249, %v4294
    %v4311 = vsel %vm4266, %v4250, %v4295
    %v4312 = vsel %vm4267, %v4251, %v4296
    %v4313 = vsel %vm4268, %v4252, %v4297
    %v4314 = vld [vmem:[#allocation4] sm:$0xff]
    %v4315 = vld [vmem:[#allocation4 + $0x8] sm:$0xff]
    %v4316 = vld [vmem:[#allocation4 + $0x10] sm:$0xff]
    %v4317 = vld [vmem:[#allocation4 + $0x18] sm:$0xff]
    %v4318 = vld [vmem:[#allocation4 + $0x20] sm:$0xff]
    %v4319 = vld [vmem:[#allocation4 + $0x28] sm:$0xff]
    %v4320 = vld [vmem:[#allocation4 + $0x30] sm:$0xff]
    %v4321 = vld [vmem:[#allocation4 + $0x38] sm:$0xff]
    %v4322 = vld [vmem:[#allocation4 + $0x40] sm:$0xff]
    %v4323 = vld [vmem:[#allocation4 + $0x48] sm:$0xff]
    %v4324 = vld [vmem:[#allocation4 + $0x50] sm:$0xff]
    %v4325 = vld [vmem:[#allocation4 + $0x58] sm:$0xff]
    %v4326 = vld [vmem:[#allocation4 + $0x60] sm:$0xff]
    %v4327 = vld [vmem:[#allocation4 + $0x68] sm:$0xff]
    %v4328 = vld [vmem:[#allocation4 + $0x70] sm:$0xff]
    %v4329 = vld [vmem:[#allocation4 + $0x78] sm:$0xff]
    %v4330 = vadd.f32 %v4298, %v4314
    %v4331 = vadd.f32 %v4299, %v4315
    %v4332 = vadd.f32 %v4300, %v4316
    %v4333 = vadd.f32 %v4301, %v4317
    %v4334 = vadd.f32 %v4302, %v4318
    %v4335 = vadd.f32 %v4303, %v4319
    %v4336 = vadd.f32 %v4304, %v4320
    %v4337 = vadd.f32 %v4305, %v4321
    %v4338 = vadd.f32 %v4306, %v4322
    %v4339 = vadd.f32 %v4307, %v4323
    %v4340 = vadd.f32 %v4308, %v4324
    %v4341 = vadd.f32 %v4309, %v4325
    %v4342 = vadd.f32 %v4310, %v4326
    %v4343 = vadd.f32 %v4311, %v4327
    %v4344 = vadd.f32 %v4312, %v4328
    %v4345 = vadd.f32 %v4313, %v4329
    %v4362 = vrot.slane %v4330, 7
    %v4363 = vrot.slane %v4331, 7
    %v4364 = vrot.slane %v4332, 7
    %v4365 = vsel %vm682, %v4362, %v4364
    %v4366 = vrot.slane %v4333, 7
    %v4367 = vsel %vm682, %v4363, %v4366
    %v4368 = vrot.slane %v4334, 7
    %v4369 = vrot.slane %v4335, 7
    %v4370 = vrot.slane %v4336, 7
    %v4371 = vsel %vm682, %v4368, %v4370
    %v4372 = vrot.slane %v4337, 7
    %v4373 = vsel %vm682, %v4369, %v4372
    %v4374 = vrot.slane %v4338, 7
    %v4375 = vrot.slane %v4339, 7
    %v4376 = vrot.slane %v4340, 7
    %v4377 = vsel %vm682, %v4374, %v4376
    %v4378 = vrot.slane %v4341, 7
    %v4379 = vsel %vm682, %v4375, %v4378
    %v4380 = vrot.slane %v4342, 7
    %v4381 = vrot.slane %v4343, 7
    %v4382 = vrot.slane %v4344, 7
    %v4383 = vsel %vm682, %v4380, %v4382
    %v4384 = vrot.slane %v4345, 7
    %v4385 = vsel %vm682, %v4381, %v4384
    %4410 = vst [vmem:[#allocation3] sm:$0xfe] %v4362
    %4411 = vst [vmem:[#allocation3 + $0x8] sm:$0xfe] %v4363
    %4412 = vst [vmem:[#allocation3 + $0x10] sm:$0xff] %v4365
    %4413 = vst [vmem:[#allocation3 + $0x18] sm:$0xff] %v4367
    %4414 = vst [vmem:[#allocation3 + $0x20] sm:$0x1] %v4364
    %4415 = vst [vmem:[#allocation3 + $0x28] sm:$0x1] %v4366
    %4416 = vst [vmem:[#allocation3 + $0x30] sm:$0xfe] %v4368
    %4417 = vst [vmem:[#allocation3 + $0x38] sm:$0xfe] %v4369
    %4418 = vst [vmem:[#allocation3 + $0x40] sm:$0xff] %v4371
    %4419 = vst [vmem:[#allocation3 + $0x48] sm:$0xff] %v4373
    %4420 = vst [vmem:[#allocation3 + $0x50] sm:$0x1] %v4370
    %4421 = vst [vmem:[#allocation3 + $0x58] sm:$0x1] %v4372
    %4422 = vst [vmem:[#allocation3 + $0x60] sm:$0xfe] %v4374
    %4423 = vst [vmem:[#allocation3 + $0x68] sm:$0xfe] %v4375
    %4424 = vst [vmem:[#allocation3 + $0x70] sm:$0xff] %v4377
    %4425 = vst [vmem:[#allocation3 + $0x78] sm:$0xff] %v4379
    %4426 = vst [vmem:[#allocation3 + $0x80] sm:$0x1] %v4376
    %4427 = vst [vmem:[#allocation3 + $0x88] sm:$0x1] %v4378
    %4428 = vst [vmem:[#allocation3 + $0x90] sm:$0xfe] %v4380
    %4429 = vst [vmem:[#allocation3 + $0x98] sm:$0xfe] %v4381
    %4430 = vst [vmem:[#allocation3 + $0xa0] sm:$0xff] %v4383
    %4431 = vst [vmem:[#allocation3 + $0xa8] sm:$0xff] %v4385
    %4432 = vst [vmem:[#allocation3 + $0xb0] sm:$0x1] %v4382
    %4433 = vst [vmem:[#allocation3 + $0xb8] sm:$0x1] %v4384
    %v4434 = vld [vmem:[#allocation3] sm:$0xff]
    %v4435 = vld [vmem:[#allocation3 + $0x8] sm:$0xff]
    %v4436 = vld [vmem:[#allocation3 + $0x10] sm:$0xff]
    %v4437 = vld [vmem:[#allocation3 + $0x18] sm:$0xff]
    %v4438 = vld [vmem:[#allocation3 + $0x30] sm:$0xff]
    %v4439 = vld [vmem:[#allocation3 + $0x38] sm:$0xff]
    %v4440 = vld [vmem:[#allocation3 + $0x40] sm:$0xff]
    %v4441 = vld [vmem:[#allocation3 + $0x48] sm:$0xff]
    %v4442 = vld [vmem:[#allocation3 + $0x60] sm:$0xff]
    %v4443 = vld [vmem:[#allocation3 + $0x68] sm:$0xff]
    %v4444 = vld [vmem:[#allocation3 + $0x70] sm:$0xff]
    %v4445 = vld [vmem:[#allocation3 + $0x78] sm:$0xff]
    %v4446 = vld [vmem:[#allocation3 + $0x90] sm:$0xff]
    %v4447 = vld [vmem:[#allocation3 + $0x98] sm:$0xff]
    %v4448 = vld [vmem:[#allocation3 + $0xa0] sm:$0xff]
    %v4449 = vld [vmem:[#allocation3 + $0xa8] sm:$0xff]
    %v4450 = vpack.c.bf16 %v4436, %v4434
    %v4451 = vpack.c.bf16 %v4437, %v4435
    %v4452 = vpack.c.bf16 %v4440, %v4438
    %v4453 = vpack.c.bf16 %v4441, %v4439
    %v4454 = vpack.c.bf16 %v4444, %v4442
    %v4455 = vpack.c.bf16 %v4445, %v4443
    %v4456 = vpack.c.bf16 %v4448, %v4446
    %v4457 = vpack.c.bf16 %v4449, %v4447
    %v4458 = vld [vmem:[#allocation16] sm:$0xff]
    %v4459 = vld [vmem:[#allocation16 + $0x8] sm:$0xff]
    %v4460 = vld [vmem:[#allocation16 + $0x10] sm:$0xff]
    %v4461 = vld [vmem:[#allocation16 + $0x18] sm:$0xff]
    %v4462 = vld [vmem:[#allocation16 + $0x20] sm:$0xff]
    %v4463 = vld [vmem:[#allocation16 + $0x28] sm:$0xff]
    %v4464 = vld [vmem:[#allocation16 + $0x30] sm:$0xff]
    %v4465 = vld [vmem:[#allocation16 + $0x38] sm:$0xff]
    %v4466 = vld [vmem:[#allocation16 + $0x40] sm:$0xff]
    %v4467 = vld [vmem:[#allocation16 + $0x48] sm:$0xff]
    %v4468 = vld [vmem:[#allocation16 + $0x50] sm:$0xff]
    %v4469 = vld [vmem:[#allocation16 + $0x58] sm:$0xff]
    %v4470 = vld [vmem:[#allocation16 + $0x60] sm:$0xff]
    %v4471 = vld [vmem:[#allocation16 + $0x68] sm:$0xff]
    %v4472 = vld [vmem:[#allocation16 + $0x70] sm:$0xff]
    %v4473 = vld [vmem:[#allocation16 + $0x78] sm:$0xff]
    %v4474 = vld [vmem:[#allocation16 + $0x80] sm:$0xff]
    %v4475 = vld [vmem:[#allocation16 + $0x88] sm:$0xff]
    %v4476 = vld [vmem:[#allocation16 + $0x90] sm:$0xff]
    %v4477 = vld [vmem:[#allocation16 + $0x98] sm:$0xff]
    %v4478 = vld [vmem:[#allocation16 + $0xa0] sm:$0xff]
    %v4479 = vld [vmem:[#allocation16 + $0xa8] sm:$0xff]
    %v4480 = vld [vmem:[#allocation16 + $0xb0] sm:$0xff]
    %v4481 = vld [vmem:[#allocation16 + $0xb8] sm:$0xff]
    %v4482 = vld [vmem:[#allocation16 + $0xc0] sm:$0xff]
    %v4483 = vld [vmem:[#allocation16 + $0xc8] sm:$0xff]
    %v4484 = vld [vmem:[#allocation16 + $0xd0] sm:$0xff]
    %v4485 = vld [vmem:[#allocation16 + $0xd8] sm:$0xff]
    %v4486 = vld [vmem:[#allocation16 + $0xe0] sm:$0xff]
    %v4487 = vld [vmem:[#allocation16 + $0xe8] sm:$0xff]
    %v4488 = vld [vmem:[#allocation16 + $0xf0] sm:$0xff]
    %v4489 = vld [vmem:[#allocation16 + $0xf8] sm:$0xff]
    %v4490 = vld [vmem:[#allocation3] sm:$0xfe]
    %v4491 = vld [vmem:[#allocation3 + $0x8] sm:$0xfe]
    %v4492 = vld [vmem:[#allocation3 + $0x20] sm:$0x1]
    %v4493 = vld [vmem:[#allocation3 + $0x28] sm:$0x1]
    %v4494 = vld [vmem:[#allocation3 + $0x30] sm:$0xfe]
    %v4495 = vld [vmem:[#allocation3 + $0x38] sm:$0xfe]
    %v4496 = vld [vmem:[#allocation3 + $0x50] sm:$0x1]
    %v4497 = vld [vmem:[#allocation3 + $0x58] sm:$0x1]
    %v4498 = vld [vmem:[#allocation3 + $0x60] sm:$0xfe]
    %v4499 = vld [vmem:[#allocation3 + $0x68] sm:$0xfe]
    %v4500 = vld [vmem:[#allocation3 + $0x80] sm:$0x1]
    %v4501 = vld [vmem:[#allocation3 + $0x88] sm:$0x1]
    %v4502 = vld [vmem:[#allocation3 + $0x90] sm:$0xfe]
    %v4503 = vld [vmem:[#allocation3 + $0x98] sm:$0xfe]
    %v4504 = vld [vmem:[#allocation3 + $0xb0] sm:$0x1]
    %v4505 = vld [vmem:[#allocation3 + $0xb8] sm:$0x1]
    %v4530 = vrot.slane %v4490, 1
    %v4531 = vrot.slane %v4436, 1
    %v4532 = vsel %vm851, %v4530, %v4531
    %v4533 = vrot.slane %v4491, 1
    %v4534 = vrot.slane %v4437, 1
    %v4535 = vsel %vm851, %v4533, %v4534
    %v4536 = vrot.slane %v4492, 1
    %v4537 = vsel %vm851, %v4531, %v4536
    %v4538 = vrot.slane %v4493, 1
    %v4539 = vsel %vm851, %v4534, %v4538
    %v4540 = vrot.slane %v4494, 1
    %v4541 = vrot.slane %v4440, 1
    %v4542 = vsel %vm851, %v4540, %v4541
    %v4543 = vrot.slane %v4495, 1
    %v4544 = vrot.slane %v4441, 1
    %v4545 = vsel %vm851, %v4543, %v4544
    %v4546 = vrot.slane %v4496, 1
    %v4547 = vsel %vm851, %v4541, %v4546
    %v4548 = vrot.slane %v4497, 1
    %v4549 = vsel %vm851, %v4544, %v4548
    %v4550 = vrot.slane %v4498, 1
    %v4551 = vrot.slane %v4444, 1
    %v4552 = vsel %vm851, %v4550, %v4551
    %v4553 = vrot.slane %v4499, 1
    %v4554 = vrot.slane %v4445, 1
    %v4555 = vsel %vm851, %v4553, %v4554
    %v4556 = vrot.slane %v4500, 1
    %v4557 = vsel %vm851, %v4551, %v4556
    %v4558 = vrot.slane %v4501, 1
    %v4559 = vsel %vm851, %v4554, %v4558
    %v4560 = vrot.slane %v4502, 1
    %v4561 = vrot.slane %v4448, 1
    %v4562 = vsel %vm851, %v4560, %v4561
    %v4563 = vrot.slane %v4503, 1
    %v4564 = vrot.slane %v4449, 1
    %v4565 = vsel %vm851, %v4563, %v4564
    %v4566 = vrot.slane %v4504, 1
    %v4567 = vsel %vm851, %v4561, %v4566
    %v4568 = vrot.slane %v4505, 1
    %v4569 = vsel %vm851, %v4564, %v4568
    %v4586 = vpack.c.bf16 %v4537, %v4532
    %v4587 = vpack.c.bf16 %v4539, %v4535
    %v4588 = vpack.c.bf16 %v4547, %v4542
    %v4589 = vpack.c.bf16 %v4549, %v4545
    %v4590 = vpack.c.bf16 %v4557, %v4552
    %v4591 = vpack.c.bf16 %v4559, %v4555
    %v4592 = vpack.c.bf16 %v4567, %v4562
    %v4593 = vpack.c.bf16 %v4569, %v4565
    %s4594 = scalar_lea.vmem [#allocation16], 256
    %v4595 = vld [vmem:[%s4594] sm:$0xff]
    %v4596 = vld [vmem:[%s4594 + $0x8] sm:$0xff]
    %v4597 = vld [vmem:[%s4594 + $0x10] sm:$0xff]
    %v4598 = vld [vmem:[%s4594 + $0x18] sm:$0xff]
    %v4599 = vld [vmem:[%s4594 + $0x20] sm:$0xff]
    %v4600 = vld [vmem:[%s4594 + $0x28] sm:$0xff]
    %v4601 = vld [vmem:[%s4594 + $0x30] sm:$0xff]
    %v4602 = vld [vmem:[%s4594 + $0x38] sm:$0xff]
    %v4603 = vld [vmem:[%s4594 + $0x40] sm:$0xff]
    %v4604 = vld [vmem:[%s4594 + $0x48] sm:$0xff]
    %v4605 = vld [vmem:[%s4594 + $0x50] sm:$0xff]
    %v4606 = vld [vmem:[%s4594 + $0x58] sm:$0xff]
    %v4607 = vld [vmem:[%s4594 + $0x60] sm:$0xff]
    %v4608 = vld [vmem:[%s4594 + $0x68] sm:$0xff]
    %v4609 = vld [vmem:[%s4594 + $0x70] sm:$0xff]
    %v4610 = vld [vmem:[%s4594 + $0x78] sm:$0xff]
    %v4611 = vld [vmem:[%s4594 + $0x80] sm:$0xff]
    %v4612 = vld [vmem:[%s4594 + $0x88] sm:$0xff]
    %v4613 = vld [vmem:[%s4594 + $0x90] sm:$0xff]
    %v4614 = vld [vmem:[%s4594 + $0x98] sm:$0xff]
    %v4615 = vld [vmem:[%s4594 + $0xa0] sm:$0xff]
    %v4616 = vld [vmem:[%s4594 + $0xa8] sm:$0xff]
    %v4617 = vld [vmem:[%s4594 + $0xb0] sm:$0xff]
    %v4618 = vld [vmem:[%s4594 + $0xb8] sm:$0xff]
    %v4619 = vld [vmem:[%s4594 + $0xc0] sm:$0xff]
    %v4620 = vld [vmem:[%s4594 + $0xc8] sm:$0xff]
    %v4621 = vld [vmem:[%s4594 + $0xd0] sm:$0xff]
    %v4622 = vld [vmem:[%s4594 + $0xd8] sm:$0xff]
    %v4623 = vld [vmem:[%s4594 + $0xe0] sm:$0xff]
    %v4624 = vld [vmem:[%s4594 + $0xe8] sm:$0xff]
    %v4625 = vld [vmem:[%s4594 + $0xf0] sm:$0xff]
    %v4626 = vld [vmem:[%s4594 + $0xf8] sm:$0xff]
    %v4659 = vunpack.c.l.b16 %v4595
    %v4660 = vunpack.c.h.b16 %v4595
    %v4661 = vunpack.c.l.b16 %v4596
    %v4662 = vunpack.c.h.b16 %v4596
    %v4663 = vunpack.c.l.b16 %v4597
    %v4664 = vunpack.c.h.b16 %v4597
    %v4665 = vunpack.c.l.b16 %v4598
    %v4666 = vunpack.c.h.b16 %v4598
    %v4667 = vunpack.c.l.b16 %v4599
    %v4668 = vunpack.c.h.b16 %v4599
    %v4669 = vunpack.c.l.b16 %v4600
    %v4670 = vunpack.c.h.b16 %v4600
    %v4671 = vunpack.c.l.b16 %v4601
    %v4672 = vunpack.c.h.b16 %v4601
    %v4673 = vunpack.c.l.b16 %v4602
    %v4674 = vunpack.c.h.b16 %v4602
    %v4675 = vunpack.c.l.b16 %v4603
    %v4676 = vunpack.c.h.b16 %v4603
    %v4677 = vunpack.c.l.b16 %v4604
    %v4678 = vunpack.c.h.b16 %v4604
    %v4679 = vunpack.c.l.b16 %v4605
    %v4680 = vunpack.c.h.b16 %v4605
    %v4681 = vunpack.c.l.b16 %v4606
    %v4682 = vunpack.c.h.b16 %v4606
    %v4683 = vunpack.c.l.b16 %v4607
    %v4684 = vunpack.c.h.b16 %v4607
    %v4685 = vunpack.c.l.b16 %v4608
    %v4686 = vunpack.c.h.b16 %v4608
    %v4687 = vunpack.c.l.b16 %v4609
    %v4688 = vunpack.c.h.b16 %v4609
    %v4689 = vunpack.c.l.b16 %v4610
    %v4690 = vunpack.c.h.b16 %v4610
    %v4691 = vunpack.c.l.b16 %v4611
    %v4692 = vunpack.c.h.b16 %v4611
    %v4693 = vunpack.c.l.b16 %v4612
    %v4694 = vunpack.c.h.b16 %v4612
    %v4695 = vunpack.c.l.b16 %v4613
    %v4696 = vunpack.c.h.b16 %v4613
    %v4697 = vunpack.c.l.b16 %v4614
    %v4698 = vunpack.c.h.b16 %v4614
    %v4699 = vunpack.c.l.b16 %v4615
    %v4700 = vunpack.c.h.b16 %v4615
    %v4701 = vunpack.c.l.b16 %v4616
    %v4702 = vunpack.c.h.b16 %v4616
    %v4703 = vunpack.c.l.b16 %v4617
    %v4704 = vunpack.c.h.b16 %v4617
    %v4705 = vunpack.c.l.b16 %v4618
    %v4706 = vunpack.c.h.b16 %v4618
    %v4707 = vunpack.c.l.b16 %v4619
    %v4708 = vunpack.c.h.b16 %v4619
    %v4709 = vunpack.c.l.b16 %v4620
    %v4710 = vunpack.c.h.b16 %v4620
    %v4711 = vunpack.c.l.b16 %v4621
    %v4712 = vunpack.c.h.b16 %v4621
    %v4713 = vunpack.c.l.b16 %v4622
    %v4714 = vunpack.c.h.b16 %v4622
    %v4715 = vunpack.c.l.b16 %v4623
    %v4716 = vunpack.c.h.b16 %v4623
    %v4717 = vunpack.c.l.b16 %v4624
    %v4718 = vunpack.c.h.b16 %v4624
    %v4719 = vunpack.c.l.b16 %v4625
    %v4720 = vunpack.c.h.b16 %v4625
    %v4721 = vunpack.c.l.b16 %v4626
    %v4722 = vunpack.c.h.b16 %v4626
    %v4723 = vpack.c.b16 %v4661, %v4659
    %v4724 = vpack.c.b16 %v4662, %v4660
    %v4725 = vpack.c.b16 %v4665, %v4663
    %v4726 = vpack.c.b16 %v4666, %v4664
    %v4727 = vpack.c.b16 %v4669, %v4667
    %v4728 = vpack.c.b16 %v4670, %v4668
    %v4729 = vpack.c.b16 %v4673, %v4671
    %v4730 = vpack.c.b16 %v4674, %v4672
    %v4731 = vpack.c.b16 %v4677, %v4675
    %v4732 = vpack.c.b16 %v4678, %v4676
    %v4733 = vpack.c.b16 %v4681, %v4679
    %v4734 = vpack.c.b16 %v4682, %v4680
    %v4735 = vpack.c.b16 %v4685, %v4683
    %v4736 = vpack.c.b16 %v4686, %v4684
    %v4737 = vpack.c.b16 %v4689, %v4687
    %v4738 = vpack.c.b16 %v4690, %v4688
    %v4739 = vpack.c.b16 %v4693, %v4691
    %v4740 = vpack.c.b16 %v4694, %v4692
    %v4741 = vpack.c.b16 %v4697, %v4695
    %v4742 = vpack.c.b16 %v4698, %v4696
    %v4743 = vpack.c.b16 %v4701, %v4699
    %v4744 = vpack.c.b16 %v4702, %v4700
    %v4745 = vpack.c.b16 %v4705, %v4703
    %v4746 = vpack.c.b16 %v4706, %v4704
    %v4747 = vpack.c.b16 %v4709, %v4707
    %v4748 = vpack.c.b16 %v4710, %v4708
    %v4749 = vpack.c.b16 %v4713, %v4711
    %v4750 = vpack.c.b16 %v4714, %v4712
    %v4751 = vpack.c.b16 %v4717, %v4715
    %v4752 = vpack.c.b16 %v4718, %v4716
    %v4753 = vpack.c.b16 %v4721, %v4719
    %v4754 = vpack.c.b16 %v4722, %v4720
    %4787 = vmatprep.subr.bf16.mxu0 %v4724
    %4788 = vmatpush1.bf16.msra.mxu0 %v4723
    %4789 = vmatprep.subr.bf16.mxu0 %v4726
    %4790 = vmatpush1.bf16.msra.mxu0 %v4725
    %4791 = vmatprep.subr.bf16.mxu0 %v4728
    %4792 = vmatpush1.bf16.msra.mxu0 %v4727
    %4793 = vmatprep.subr.bf16.mxu0 %v4730
    %4794 = vmatpush1.bf16.msra.mxu0 %v4729
    %4795 = vmatprep.subr.bf16.mxu0 %v4732
    %4796 = vmatpush1.bf16.msra.mxu0 %v4731
    %4797 = vmatprep.subr.bf16.mxu0 %v4734
    %4798 = vmatpush1.bf16.msra.mxu0 %v4733
    %4799 = vmatprep.subr.bf16.mxu0 %v4736
    %4800 = vmatpush1.bf16.msra.mxu0 %v4735
    %4801 = vmatprep.subr.bf16.mxu0 %v4738
    %4802 = vmatpush1.bf16.msra.mxu0 %v4737
    %4803 = vmatprep.subr.bf16.mxu0 %v4740
    %4804 = vmatpush1.bf16.msra.mxu0 %v4739
    %4805 = vmatprep.subr.bf16.mxu0 %v4742
    %4806 = vmatpush1.bf16.msra.mxu0 %v4741
    %4807 = vmatprep.subr.bf16.mxu0 %v4744
    %4808 = vmatpush1.bf16.msra.mxu0 %v4743
    %4809 = vmatprep.subr.bf16.mxu0 %v4746
    %4810 = vmatpush1.bf16.msra.mxu0 %v4745
    %4811 = vmatprep.subr.bf16.mxu0 %v4748
    %4812 = vmatpush1.bf16.msra.mxu0 %v4747
    %4813 = vmatprep.subr.bf16.mxu0 %v4750
    %4814 = vmatpush1.bf16.msra.mxu0 %v4749
    %4815 = vmatprep.subr.bf16.mxu0 %v4752
    %4816 = vmatpush1.bf16.msra.mxu0 %v4751
    %4817 = vmatprep.subr.bf16.mxu0 %v4754
    %4818 = vmatpush1.bf16.msra.mxu0 %v4753
    %4819 = vmatprep.mubr.bf16.mxu0 %v4587
    %4820 = vmatmul.mubr.bf16.gmra.mrb[0].mxu0 %v4586
    %v4821 = vpop.f32.mrb[0].mxu0
    %v4822 = vadd.f32 0.0, %v4821
    %v4823 = vpop.f32.mrb[0].mxu0
    %v4824 = vadd.f32 0.0, %v4823
    %v4825 = vpop.f32.mrb[0].mxu0
    %v4826 = vadd.f32 0.0, %v4825
    %v4827 = vpop.f32.mrb[0].mxu0
    %v4828 = vadd.f32 0.0, %v4827
    %4829 = vmatprep.mubr.bf16.mxu0 %v4589
    %4830 = vmatmul.mubr.bf16.gmra.mrb[0].mxu0 %v4588
    %v4831 = vpop.f32.mrb[0].mxu0
    %v4832 = vadd.f32 0.0, %v4831
    %v4833 = vpop.f32.mrb[0].mxu0
    %v4834 = vadd.f32 0.0, %v4833
    %v4835 = vpop.f32.mrb[0].mxu0
    %v4836 = vadd.f32 0.0, %v4835
    %v4837 = vpop.f32.mrb[0].mxu0
    %v4838 = vadd.f32 0.0, %v4837
    %4839 = vmatprep.mubr.bf16.mxu0 %v4591
    %4840 = vmatmul.mubr.bf16.gmra.mrb[0].mxu0 %v4590
    %v4841 = vpop.f32.mrb[0].mxu0
    %v4842 = vadd.f32 0.0, %v4841
    %v4843 = vpop.f32.mrb[0].mxu0
    %v4844 = vadd.f32 0.0, %v4843
    %v4845 = vpop.f32.mrb[0].mxu0
    %v4846 = vadd.f32 0.0, %v4845
    %v4847 = vpop.f32.mrb[0].mxu0
    %v4848 = vadd.f32 0.0, %v4847
    %4849 = vmatprep.mubr.bf16.mxu0 %v4593
    %4850 = vmatmul.mubr.bf16.gmra.mrb[0].mxu0 %v4592
    %v4851 = vpop.f32.mrb[0].mxu0
    %v4852 = vadd.f32 0.0, %v4851
    %v4853 = vpop.f32.mrb[0].mxu0
    %v4854 = vadd.f32 0.0, %v4853
    %v4855 = vpop.f32.mrb[0].mxu0
    %v4856 = vadd.f32 0.0, %v4855
    %v4857 = vpop.f32.mrb[0].mxu0
    %v4858 = vadd.f32 0.0, %v4857
    %4859 = vdwg.mxu0
    %v4892 = vunpack.c.l.b16 %v4458
    %v4893 = vunpack.c.h.b16 %v4458
    %v4894 = vunpack.c.l.b16 %v4459
    %v4895 = vunpack.c.h.b16 %v4459
    %v4896 = vunpack.c.l.b16 %v4460
    %v4897 = vunpack.c.h.b16 %v4460
    %v4898 = vunpack.c.l.b16 %v4461
    %v4899 = vunpack.c.h.b16 %v4461
    %v4900 = vunpack.c.l.b16 %v4462
    %v4901 = vunpack.c.h.b16 %v4462
    %v4902 = vunpack.c.l.b16 %v4463
    %v4903 = vunpack.c.h.b16 %v4463
    %v4904 = vunpack.c.l.b16 %v4464
    %v4905 = vunpack.c.h.b16 %v4464
    %v4906 = vunpack.c.l.b16 %v4465
    %v4907 = vunpack.c.h.b16 %v4465
    %v4908 = vunpack.c.l.b16 %v4466
    %v4909 = vunpack.c.h.b16 %v4466
    %v4910 = vunpack.c.l.b16 %v4467
    %v4911 = vunpack.c.h.b16 %v4467
    %v4912 = vunpack.c.l.b16 %v4468
    %v4913 = vunpack.c.h.b16 %v4468
    %v4914 = vunpack.c.l.b16 %v4469
    %v4915 = vunpack.c.h.b16 %v4469
    %v4916 = vunpack.c.l.b16 %v4470
    %v4917 = vunpack.c.h.b16 %v4470
    %v4918 = vunpack.c.l.b16 %v4471
    %v4919 = vunpack.c.h.b16 %v4471
    %v4920 = vunpack.c.l.b16 %v4472
    %v4921 = vunpack.c.h.b16 %v4472
    %v4922 = vunpack.c.l.b16 %v4473
    %v4923 = vunpack.c.h.b16 %v4473
    %v4924 = vunpack.c.l.b16 %v4474
    %v4925 = vunpack.c.h.b16 %v4474
    %v4926 = vunpack.c.l.b16 %v4475
    %v4927 = vunpack.c.h.b16 %v4475
    %v4928 = vunpack.c.l.b16 %v4476
    %v4929 = vunpack.c.h.b16 %v4476
    %v4930 = vunpack.c.l.b16 %v4477
    %v4931 = vunpack.c.h.b16 %v4477
    %v4932 = vunpack.c.l.b16 %v4478
    %v4933 = vunpack.c.h.b16 %v4478
    %v4934 = vunpack.c.l.b16 %v4479
    %v4935 = vunpack.c.h.b16 %v4479
    %v4936 = vunpack.c.l.b16 %v4480
    %v4937 = vunpack.c.h.b16 %v4480
    %v4938 = vunpack.c.l.b16 %v4481
    %v4939 = vunpack.c.h.b16 %v4481
    %v4940 = vunpack.c.l.b16 %v4482
    %v4941 = vunpack.c.h.b16 %v4482
    %v4942 = vunpack.c.l.b16 %v4483
    %v4943 = vunpack.c.h.b16 %v4483
    %v4944 = vunpack.c.l.b16 %v4484
    %v4945 = vunpack.c.h.b16 %v4484
    %v4946 = vunpack.c.l.b16 %v4485
    %v4947 = vunpack.c.h.b16 %v4485
    %v4948 = vunpack.c.l.b16 %v4486
    %v4949 = vunpack.c.h.b16 %v4486
    %v4950 = vunpack.c.l.b16 %v4487
    %v4951 = vunpack.c.h.b16 %v4487
    %v4952 = vunpack.c.l.b16 %v4488
    %v4953 = vunpack.c.h.b16 %v4488
    %v4954 = vunpack.c.l.b16 %v4489
    %v4955 = vunpack.c.h.b16 %v4489
    %v4956 = vpack.c.b16 %v4894, %v4892
    %v4957 = vpack.c.b16 %v4895, %v4893
    %v4958 = vpack.c.b16 %v4898, %v4896
    %v4959 = vpack.c.b16 %v4899, %v4897
    %v4960 = vpack.c.b16 %v4902, %v4900
    %v4961 = vpack.c.b16 %v4903, %v4901
    %v4962 = vpack.c.b16 %v4906, %v4904
    %v4963 = vpack.c.b16 %v4907, %v4905
    %v4964 = vpack.c.b16 %v4910, %v4908
    %v4965 = vpack.c.b16 %v4911, %v4909
    %v4966 = vpack.c.b16 %v4914, %v4912
    %v4967 = vpack.c.b16 %v4915, %v4913
    %v4968 = vpack.c.b16 %v4918, %v4916
    %v4969 = vpack.c.b16 %v4919, %v4917
    %v4970 = vpack.c.b16 %v4922, %v4920
    %v4971 = vpack.c.b16 %v4923, %v4921
    %v4972 = vpack.c.b16 %v4926, %v4924
    %v4973 = vpack.c.b16 %v4927, %v4925
    %v4974 = vpack.c.b16 %v4930, %v4928
    %v4975 = vpack.c.b16 %v4931, %v4929
    %v4976 = vpack.c.b16 %v4934, %v4932
    %v4977 = vpack.c.b16 %v4935, %v4933
    %v4978 = vpack.c.b16 %v4938, %v4936
    %v4979 = vpack.c.b16 %v4939, %v4937
    %v4980 = vpack.c.b16 %v4942, %v4940
    %v4981 = vpack.c.b16 %v4943, %v4941
    %v4982 = vpack.c.b16 %v4946, %v4944
    %v4983 = vpack.c.b16 %v4947, %v4945
    %v4984 = vpack.c.b16 %v4950, %v4948
    %v4985 = vpack.c.b16 %v4951, %v4949
    %v4986 = vpack.c.b16 %v4954, %v4952
    %v4987 = vpack.c.b16 %v4955, %v4953
    %5020 = vmatprep.subr.bf16.mxu0 %v4957
    %5021 = vmatpush1.bf16.msra.mxu0 %v4956
    %5022 = vmatprep.subr.bf16.mxu0 %v4959
    %5023 = vmatpush1.bf16.msra.mxu0 %v4958
    %5024 = vmatprep.subr.bf16.mxu0 %v4961
    %5025 = vmatpush1.bf16.msra.mxu0 %v4960
    %5026 = vmatprep.subr.bf16.mxu0 %v4963
    %5027 = vmatpush1.bf16.msra.mxu0 %v4962
    %5028 = vmatprep.subr.bf16.mxu0 %v4965
    %5029 = vmatpush1.bf16.msra.mxu0 %v4964
    %5030 = vmatprep.subr.bf16.mxu0 %v4967
    %5031 = vmatpush1.bf16.msra.mxu0 %v4966
    %5032 = vmatprep.subr.bf16.mxu0 %v4969
    %5033 = vmatpush1.bf16.msra.mxu0 %v4968
    %5034 = vmatprep.subr.bf16.mxu0 %v4971
    %5035 = vmatpush1.bf16.msra.mxu0 %v4970
    %5036 = vmatprep.subr.bf16.mxu0 %v4973
    %5037 = vmatpush1.bf16.msra.mxu0 %v4972
    %5038 = vmatprep.subr.bf16.mxu0 %v4975
    %5039 = vmatpush1.bf16.msra.mxu0 %v4974
    %5040 = vmatprep.subr.bf16.mxu0 %v4977
    %5041 = vmatpush1.bf16.msra.mxu0 %v4976
    %5042 = vmatprep.subr.bf16.mxu0 %v4979
    %5043 = vmatpush1.bf16.msra.mxu0 %v4978
    %5044 = vmatprep.subr.bf16.mxu0 %v4981
    %5045 = vmatpush1.bf16.msra.mxu0 %v4980
    %5046 = vmatprep.subr.bf16.mxu0 %v4983
    %5047 = vmatpush1.bf16.msra.mxu0 %v4982
    %5048 = vmatprep.subr.bf16.mxu0 %v4985
    %5049 = vmatpush1.bf16.msra.mxu0 %v4984
    %5050 = vmatprep.subr.bf16.mxu0 %v4987
    %5051 = vmatpush1.bf16.msra.mxu0 %v4986
    %5052 = vmatprep.mubr.bf16.mxu0 %v4451
    %5053 = vmatmul.mubr.bf16.gmra.mrb[0].mxu0 %v4450
    %v5054 = vpop.f32.mrb[0].mxu0
    %v5055 = vadd.f32 %v4822, %v5054
    %v5056 = vpop.f32.mrb[0].mxu0
    %v5057 = vadd.f32 %v4824, %v5056
    %v5058 = vpop.f32.mrb[0].mxu0
    %v5059 = vadd.f32 %v4826, %v5058
    %v5060 = vpop.f32.mrb[0].mxu0
    %v5061 = vadd.f32 %v4828, %v5060
    %5062 = vmatprep.mubr.bf16.mxu0 %v4453
    %5063 = vmatmul.mubr.bf16.gmra.mrb[0].mxu0 %v4452
    %v5064 = vpop.f32.mrb[0].mxu0
    %v5065 = vadd.f32 %v4832, %v5064
    %v5066 = vpop.f32.mrb[0].mxu0
    %v5067 = vadd.f32 %v4834, %v5066
    %v5068 = vpop.f32.mrb[0].mxu0
    %v5069 = vadd.f32 %v4836, %v5068
    %v5070 = vpop.f32.mrb[0].mxu0
    %v5071 = vadd.f32 %v4838, %v5070
    %5072 = vmatprep.mubr.bf16.mxu0 %v4455
    %5073 = vmatmul.mubr.bf16.gmra.mrb[0].mxu0 %v4454
    %v5074 = vpop.f32.mrb[0].mxu0
    %v5075 = vadd.f32 %v4842, %v5074
    %v5076 = vpop.f32.mrb[0].mxu0
    %v5077 = vadd.f32 %v4844, %v5076
    %v5078 = vpop.f32.mrb[0].mxu0
    %v5079 = vadd.f32 %v4846, %v5078
    %v5080 = vpop.f32.mrb[0].mxu0
    %v5081 = vadd.f32 %v4848, %v5080
    %5082 = vmatprep.mubr.bf16.mxu0 %v4457
    %5083 = vmatmul.mubr.bf16.gmra.mrb[0].mxu0 %v4456
    %v5084 = vpop.f32.mrb[0].mxu0
    %v5085 = vadd.f32 %v4852, %v5084
    %v5086 = vpop.f32.mrb[0].mxu0
    %v5087 = vadd.f32 %v4854, %v5086
    %v5088 = vpop.f32.mrb[0].mxu0
    %v5089 = vadd.f32 %v4856, %v5088
    %v5090 = vpop.f32.mrb[0].mxu0
    %v5091 = vadd.f32 %v4858, %v5090
    %5092 = vdwg.mxu0
    %v5093 = vld [vmem:[#allocation3] sm:$0xfc]
    %v5094 = vld [vmem:[#allocation3 + $0x8] sm:$0xfc]
    %v5095 = vld [vmem:[#allocation3 + $0x20] sm:$0x3]
    %v5096 = vld [vmem:[#allocation3 + $0x28] sm:$0x3]
    %v5097 = vld [vmem:[#allocation3 + $0x30] sm:$0xfc]
    %v5098 = vld [vmem:[#allocation3 + $0x38] sm:$0xfc]
    %v5099 = vld [vmem:[#allocation3 + $0x50] sm:$0x3]
    %v5100 = vld [vmem:[#allocation3 + $0x58] sm:$0x3]
    %v5101 = vld [vmem:[#allocation3 + $0x60] sm:$0xfc]
    %v5102 = vld [vmem:[#allocation3 + $0x68] sm:$0xfc]
    %v5103 = vld [vmem:[#allocation3 + $0x80] sm:$0x3]
    %v5104 = vld [vmem:[#allocation3 + $0x88] sm:$0x3]
    %v5105 = vld [vmem:[#allocation3 + $0x90] sm:$0xfc]
    %v5106 = vld [vmem:[#allocation3 + $0x98] sm:$0xfc]
    %v5107 = vld [vmem:[#allocation3 + $0xb0] sm:$0x3]
    %v5108 = vld [vmem:[#allocation3 + $0xb8] sm:$0x3]
    %v5125 = vrot.slane %v5093, 2
    %v5126 = vrot.slane %v4436, 2
    %v5127 = vsel %vm1447, %v5125, %v5126
    %v5128 = vrot.slane %v5094, 2
    %v5129 = vrot.slane %v4437, 2
    %v5130 = vsel %vm1447, %v5128, %v5129
    %v5131 = vrot.slane %v5095, 2
    %v5132 = vsel %vm1447, %v5126, %v5131
    %v5133 = vrot.slane %v5096, 2
    %v5134 = vsel %vm1447, %v5129, %v5133
    %v5135 = vrot.slane %v5097, 2
    %v5136 = vrot.slane %v4440, 2
    %v5137 = vsel %vm1447, %v5135, %v5136
    %v5138 = vrot.slane %v5098, 2
    %v5139 = vrot.slane %v4441, 2
    %v5140 = vsel %vm1447, %v5138, %v5139
    %v5141 = vrot.slane %v5099, 2
    %v5142 = vsel %vm1447, %v5136, %v5141
    %v5143 = vrot.slane %v5100, 2
    %v5144 = vsel %vm1447, %v5139, %v5143
    %v5145 = vrot.slane %v5101, 2
    %v5146 = vrot.slane %v4444, 2
    %v5147 = vsel %vm1447, %v5145, %v5146
    %v5148 = vrot.slane %v5102, 2
    %v5149 = vrot.slane %v4445, 2
    %v5150 = vsel %vm1447, %v5148, %v5149
    %v5151 = vrot.slane %v5103, 2
    %v5152 = vsel %vm1447, %v5146, %v5151
    %v5153 = vrot.slane %v5104, 2
    %v5154 = vsel %vm1447, %v5149, %v5153
    %v5155 = vrot.slane %v5105, 2
    %v5156 = vrot.slane %v4448, 2
    %v5157 = vsel %vm1447, %v5155, %v5156
    %v5158 = vrot.slane %v5106, 2
    %v5159 = vrot.slane %v4449, 2
    %v5160 = vsel %vm1447, %v5158, %v5159
    %v5161 = vrot.slane %v5107, 2
    %v5162 = vsel %vm1447, %v5156, %v5161
    %v5163 = vrot.slane %v5108, 2
    %v5164 = vsel %vm1447, %v5159, %v5163
    %v5181 = vpack.c.bf16 %v5132, %v5127
    %v5182 = vpack.c.bf16 %v5134, %v5130
    %v5183 = vpack.c.bf16 %v5142, %v5137
    %v5184 = vpack.c.bf16 %v5144, %v5140
    %v5185 = vpack.c.bf16 %v5152, %v5147
    %v5186 = vpack.c.bf16 %v5154, %v5150
    %v5187 = vpack.c.bf16 %v5162, %v5157
    %v5188 = vpack.c.bf16 %v5164, %v5160
    %s5189 = scalar_lea.vmem [#allocation16], 512
    %v5190 = vld [vmem:[%s5189] sm:$0xff]
    %v5191 = vld [vmem:[%s5189 + $0x8] sm:$0xff]
    %v5192 = vld [vmem:[%s5189 + $0x10] sm:$0xff]
    %v5193 = vld [vmem:[%s5189 + $0x18] sm:$0xff]
    %v5194 = vld [vmem:[%s5189 + $0x20] sm:$0xff]
    %v5195 = vld [vmem:[%s5189 + $0x28] sm:$0xff]
    %v5196 = vld [vmem:[%s5189 + $0x30] sm:$0xff]
    %v5197 = vld [vmem:[%s5189 + $0x38] sm:$0xff]
    %v5198 = vld [vmem:[%s5189 + $0x40] sm:$0xff]
    %v5199 = vld [vmem:[%s5189 + $0x48] sm:$0xff]
    %v5200 = vld [vmem:[%s5189 + $0x50] sm:$0xff]
    %v5201 = vld [vmem:[%s5189 + $0x58] sm:$0xff]
    %v5202 = vld [vmem:[%s5189 + $0x60] sm:$0xff]
    %v5203 = vld [vmem:[%s5189 + $0x68] sm:$0xff]
    %v5204 = vld [vmem:[%s5189 + $0x70] sm:$0xff]
    %v5205 = vld [vmem:[%s5189 + $0x78] sm:$0xff]
    %v5206 = vld [vmem:[%s5189 + $0x80] sm:$0xff]
    %v5207 = vld [vmem:[%s5189 + $0x88] sm:$0xff]
    %v5208 = vld [vmem:[%s5189 + $0x90] sm:$0xff]
    %v5209 = vld [vmem:[%s5189 + $0x98] sm:$0xff]
    %v5210 = vld [vmem:[%s5189 + $0xa0] sm:$0xff]
    %v5211 = vld [vmem:[%s5189 + $0xa8] sm:$0xff]
    %v5212 = vld [vmem:[%s5189 + $0xb0] sm:$0xff]
    %v5213 = vld [vmem:[%s5189 + $0xb8] sm:$0xff]
    %v5214 = vld [vmem:[%s5189 + $0xc0] sm:$0xff]
    %v5215 = vld [vmem:[%s5189 + $0xc8] sm:$0xff]
    %v5216 = vld [vmem:[%s5189 + $0xd0] sm:$0xff]
    %v5217 = vld [vmem:[%s5189 + $0xd8] sm:$0xff]
    %v5218 = vld [vmem:[%s5189 + $0xe0] sm:$0xff]
    %v5219 = vld [vmem:[%s5189 + $0xe8] sm:$0xff]
    %v5220 = vld [vmem:[%s5189 + $0xf0] sm:$0xff]
    %v5221 = vld [vmem:[%s5189 + $0xf8] sm:$0xff]
    %v5254 = vunpack.c.l.b16 %v5190
    %v5255 = vunpack.c.h.b16 %v5190
    %v5256 = vunpack.c.l.b16 %v5191
    %v5257 = vunpack.c.h.b16 %v5191
    %v5258 = vunpack.c.l.b16 %v5192
    %v5259 = vunpack.c.h.b16 %v5192
    %v5260 = vunpack.c.l.b16 %v5193
    %v5261 = vunpack.c.h.b16 %v5193
    %v5262 = vunpack.c.l.b16 %v5194
    %v5263 = vunpack.c.h.b16 %v5194
    %v5264 = vunpack.c.l.b16 %v5195
    %v5265 = vunpack.c.h.b16 %v5195
    %v5266 = vunpack.c.l.b16 %v5196
    %v5267 = vunpack.c.h.b16 %v5196
    %v5268 = vunpack.c.l.b16 %v5197
    %v5269 = vunpack.c.h.b16 %v5197
    %v5270 = vunpack.c.l.b16 %v5198
    %v5271 = vunpack.c.h.b16 %v5198
    %v5272 = vunpack.c.l.b16 %v5199
    %v5273 = vunpack.c.h.b16 %v5199
    %v5274 = vunpack.c.l.b16 %v5200
    %v5275 = vunpack.c.h.b16 %v5200
    %v5276 = vunpack.c.l.b16 %v5201
    %v5277 = vunpack.c.h.b16 %v5201
    %v5278 = vunpack.c.l.b16 %v5202
    %v5279 = vunpack.c.h.b16 %v5202
    %v5280 = vunpack.c.l.b16 %v5203
    %v5281 = vunpack.c.h.b16 %v5203
    %v5282 = vunpack.c.l.b16 %v5204
    %v5283 = vunpack.c.h.b16 %v5204
    %v5284 = vunpack.c.l.b16 %v5205
    %v5285 = vunpack.c.h.b16 %v5205
    %v5286 = vunpack.c.l.b16 %v5206
    %v5287 = vunpack.c.h.b16 %v5206
    %v5288 = vunpack.c.l.b16 %v5207
    %v5289 = vunpack.c.h.b16 %v5207
    %v5290 = vunpack.c.l.b16 %v5208
    %v5291 = vunpack.c.h.b16 %v5208
    %v5292 = vunpack.c.l.b16 %v5209
    %v5293 = vunpack.c.h.b16 %v5209
    %v5294 = vunpack.c.l.b16 %v5210
    %v5295 = vunpack.c.h.b16 %v5210
    %v5296 = vunpack.c.l.b16 %v5211
    %v5297 = vunpack.c.h.b16 %v5211
    %v5298 = vunpack.c.l.b16 %v5212
    %v5299 = vunpack.c.h.b16 %v5212
    %v5300 = vunpack.c.l.b16 %v5213
    %v5301 = vunpack.c.h.b16 %v5213
    %v5302 = vunpack.c.l.b16 %v5214
    %v5303 = vunpack.c.h.b16 %v5214
    %v5304 = vunpack.c.l.b16 %v5215
    %v5305 = vunpack.c.h.b16 %v5215
    %v5306 = vunpack.c.l.b16 %v5216
    %v5307 = vunpack.c.h.b16 %v5216
    %v5308 = vunpack.c.l.b16 %v5217
    %v5309 = vunpack.c.h.b16 %v5217
    %v5310 = vunpack.c.l.b16 %v5218
    %v5311 = vunpack.c.h.b16 %v5218
    %v5312 = vunpack.c.l.b16 %v5219
    %v5313 = vunpack.c.h.b16 %v5219
    %v5314 = vunpack.c.l.b16 %v5220
    %v5315 = vunpack.c.h.b16 %v5220
    %v5316 = vunpack.c.l.b16 %v5221
    %v5317 = vunpack.c.h.b16 %v5221
    %v5318 = vpack.c.b16 %v5256, %v5254
    %v5319 = vpack.c.b16 %v5257, %v5255
    %v5320 = vpack.c.b16 %v5260, %v5258
    %v5321 = vpack.c.b16 %v5261, %v5259
    %v5322 = vpack.c.b16 %v5264, %v5262
    %v5323 = vpack.c.b16 %v5265, %v5263
    %v5324 = vpack.c.b16 %v5268, %v5266
    %v5325 = vpack.c.b16 %v5269, %v5267
    %v5326 = vpack.c.b16 %v5272, %v5270
    %v5327 = vpack.c.b16 %v5273, %v5271
    %v5328 = vpack.c.b16 %v5276, %v5274
    %v5329 = vpack.c.b16 %v5277, %v5275
    %v5330 = vpack.c.b16 %v5280, %v5278
    %v5331 = vpack.c.b16 %v5281, %v5279
    %v5332 = vpack.c.b16 %v5284, %v5282
    %v5333 = vpack.c.b16 %v5285, %v5283
    %v5334 = vpack.c.b16 %v5288, %v5286
    %v5335 = vpack.c.b16 %v5289, %v5287
    %v5336 = vpack.c.b16 %v5292, %v5290
    %v5337 = vpack.c.b16 %v5293, %v5291
    %v5338 = vpack.c.b16 %v5296, %v5294
    %v5339 = vpack.c.b16 %v5297, %v5295
    %v5340 = vpack.c.b16 %v5300, %v5298
    %v5341 = vpack.c.b16 %v5301, %v5299
    %v5342 = vpack.c.b16 %v5304, %v5302
    %v5343 = vpack.c.b16 %v5305, %v5303
    %v5344 = vpack.c.b16 %v5308, %v5306
    %v5345 = vpack.c.b16 %v5309, %v5307
    %v5346 = vpack.c.b16 %v5312, %v5310
    %v5347 = vpack.c.b16 %v5313, %v5311
    %v5348 = vpack.c.b16 %v5316, %v5314
    %v5349 = vpack.c.b16 %v5317, %v5315
    %5382 = vmatprep.subr.bf16.mxu0 %v5319
    %5383 = vmatpush1.bf16.msra.mxu0 %v5318
    %5384 = vmatprep.subr.bf16.mxu0 %v5321
    %5385 = vmatpush1.bf16.msra.mxu0 %v5320
    %5386 = vmatprep.subr.bf16.mxu0 %v5323
    %5387 = vmatpush1.bf16.msra.mxu0 %v5322
    %5388 = vmatprep.subr.bf16.mxu0 %v5325
    %5389 = vmatpush1.bf16.msra.mxu0 %v5324
    %5390 = vmatprep.subr.bf16.mxu0 %v5327
    %5391 = vmatpush1.bf16.msra.mxu0 %v5326
    %5392 = vmatprep.subr.bf16.mxu0 %v5329
    %5393 = vmatpush1.bf16.msra.mxu0 %v5328
    %5394 = vmatprep.subr.bf16.mxu0 %v5331
    %5395 = vmatpush1.bf16.msra.mxu0 %v5330
    %5396 = vmatprep.subr.bf16.mxu0 %v5333
    %5397 = vmatpush1.bf16.msra.mxu0 %v5332
    %5398 = vmatprep.subr.bf16.mxu0 %v5335
    %5399 = vmatpush1.bf16.msra.mxu0 %v5334
    %5400 = vmatprep.subr.bf16.mxu0 %v5337
    %5401 = vmatpush1.bf16.msra.mxu0 %v5336
    %5402 = vmatprep.subr.bf16.mxu0 %v5339
    %5403 = vmatpush1.bf16.msra.mxu0 %v5338
    %5404 = vmatprep.subr.bf16.mxu0 %v5341
    %5405 = vmatpush1.bf16.msra.mxu0 %v5340
    %5406 = vmatprep.subr.bf16.mxu0 %v5343
    %5407 = vmatpush1.bf16.msra.mxu0 %v5342
    %5408 = vmatprep.subr.bf16.mxu0 %v5345
    %5409 = vmatpush1.bf16.msra.mxu0 %v5344
    %5410 = vmatprep.subr.bf16.mxu0 %v5347
    %5411 = vmatpush1.bf16.msra.mxu0 %v5346
    %5412 = vmatprep.subr.bf16.mxu0 %v5349
    %5413 = vmatpush1.bf16.msra.mxu0 %v5348
    %5414 = vmatprep.mubr.bf16.mxu0 %v5182
    %5415 = vmatmul.mubr.bf16.gmra.mrb[0].mxu0 %v5181
    %v5416 = vpop.f32.mrb[0].mxu0
    %v5417 = vadd.f32 0.0, %v5416
    %v5418 = vpop.f32.mrb[0].mxu0
    %v5419 = vadd.f32 0.0, %v5418
    %v5420 = vpop.f32.mrb[0].mxu0
    %v5421 = vadd.f32 0.0, %v5420
    %v5422 = vpop.f32.mrb[0].mxu0
    %v5423 = vadd.f32 0.0, %v5422
    %5424 = vmatprep.mubr.bf16.mxu0 %v5184
    %5425 = vmatmul.mubr.bf16.gmra.mrb[0].mxu0 %v5183
    %v5426 = vpop.f32.mrb[0].mxu0
    %v5427 = vadd.f32 0.0, %v5426
    %v5428 = vpop.f32.mrb[0].mxu0
    %v5429 = vadd.f32 0.0, %v5428
    %v5430 = vpop.f32.mrb[0].mxu0
    %v5431 = vadd.f32 0.0, %v5430
    %v5432 = vpop.f32.mrb[0].mxu0
    %v5433 = vadd.f32 0.0, %v5432
    %5434 = vmatprep.mubr.bf16.mxu0 %v5186
    %5435 = vmatmul.mubr.bf16.gmra.mrb[0].mxu0 %v5185
    %v5436 = vpop.f32.mrb[0].mxu0
    %v5437 = vadd.f32 0.0, %v5436
    %v5438 = vpop.f32.mrb[0].mxu0
    %v5439 = vadd.f32 0.0, %v5438
    %v5440 = vpop.f32.mrb[0].mxu0
    %v5441 = vadd.f32 0.0, %v5440
    %v5442 = vpop.f32.mrb[0].mxu0
    %v5443 = vadd.f32 0.0, %v5442
    %5444 = vmatprep.mubr.bf16.mxu0 %v5188
    %5445 = vmatmul.mubr.bf16.gmra.mrb[0].mxu0 %v5187
    %v5446 = vpop.f32.mrb[0].mxu0
    %v5447 = vadd.f32 0.0, %v5446
    %v5448 = vpop.f32.mrb[0].mxu0
    %v5449 = vadd.f32 0.0, %v5448
    %v5450 = vpop.f32.mrb[0].mxu0
    %v5451 = vadd.f32 0.0, %v5450
    %v5452 = vpop.f32.mrb[0].mxu0
    %v5453 = vadd.f32 0.0, %v5452
    %5454 = vdwg.mxu0
    %v5455 = vadd.f32 %v5055, %v5417
    %v5456 = vadd.f32 %v5057, %v5419
    %v5457 = vadd.f32 %v5059, %v5421
    %v5458 = vadd.f32 %v5061, %v5423
    %v5459 = vadd.f32 %v5065, %v5427
    %v5460 = vadd.f32 %v5067, %v5429
    %v5461 = vadd.f32 %v5069, %v5431
    %v5462 = vadd.f32 %v5071, %v5433
    %v5463 = vadd.f32 %v5075, %v5437
    %v5464 = vadd.f32 %v5077, %v5439
    %v5465 = vadd.f32 %v5079, %v5441
    %v5466 = vadd.f32 %v5081, %v5443
    %v5467 = vadd.f32 %v5085, %v5447
    %v5468 = vadd.f32 %v5087, %v5449
    %v5469 = vadd.f32 %v5089, %v5451
    %v5470 = vadd.f32 %v5091, %v5453
    %v5471 = vld [vmem:[#allocation17] sm:$0x3]
    %v5473 = vlaneseq
    %v5474 = vshrl.u32 %v5473, 7
    %v5475 = vsub.s32 0, %v5474
    %v5476 = vrot.slane %v5471, %v5475
    %v5477 = vlaneseq
    %v5478 = vshrl.u32 %v5477, 7
    %v5479 = vsub.s32 1, %v5478
    %v5480 = vrot.slane %v5471, %v5479
    %v5483 = vadd.f32 %v5455, %v5476
    %v5484 = vadd.f32 %v5456, %v5480
    %v5485 = vadd.f32 %v5457, %v5476
    %v5486 = vadd.f32 %v5458, %v5480
    %v5487 = vadd.f32 %v5459, %v5476
    %v5488 = vadd.f32 %v5460, %v5480
    %v5489 = vadd.f32 %v5461, %v5476
    %v5490 = vadd.f32 %v5462, %v5480
    %v5491 = vadd.f32 %v5463, %v5476
    %v5492 = vadd.f32 %v5464, %v5480
    %v5493 = vadd.f32 %v5465, %v5476
    %v5494 = vadd.f32 %v5466, %v5480
    %v5495 = vadd.f32 %v5467, %v5476
    %v5496 = vadd.f32 %v5468, %v5480
    %v5497 = vadd.f32 %v5469, %v5476
    %v5498 = vadd.f32 %v5470, %v5480
    %v5499 = vld [vmem:[#allocation5] sm:$0xff]
    %v5500 = vld [vmem:[#allocation5 + $0x8] sm:$0xff]
    %v5501 = vld [vmem:[#allocation5 + $0x10] sm:$0xff]
    %v5502 = vld [vmem:[#allocation5 + $0x18] sm:$0xff]
    %v5503 = vld [vmem:[#allocation5 + $0x20] sm:$0xff]
    %v5504 = vld [vmem:[#allocation5 + $0x28] sm:$0xff]
    %v5505 = vld [vmem:[#allocation5 + $0x30] sm:$0xff]
    %v5506 = vld [vmem:[#allocation5 + $0x38] sm:$0xff]
    %v5507 = vld [vmem:[#allocation19] sm:$0xff]
    %v5508 = vld [vmem:[#allocation19 + $0x8] sm:$0xff]
    %v5509 = vld [vmem:[#allocation19 + $0x10] sm:$0xff]
    %v5510 = vld [vmem:[#allocation19 + $0x18] sm:$0xff]
    %v5511 = vld [vmem:[#allocation19 + $0x20] sm:$0xff]
    %v5512 = vld [vmem:[#allocation19 + $0x28] sm:$0xff]
    %v5513 = vld [vmem:[#allocation19 + $0x30] sm:$0xff]
    %v5514 = vld [vmem:[#allocation19 + $0x38] sm:$0xff]
    %v5515 = vld [vmem:[#allocation19 + $0x40] sm:$0xff]
    %v5516 = vld [vmem:[#allocation19 + $0x48] sm:$0xff]
    %v5517 = vld [vmem:[#allocation19 + $0x50] sm:$0xff]
    %v5518 = vld [vmem:[#allocation19 + $0x58] sm:$0xff]
    %v5520 = vsel %vm196, %v5499, 0
    %v5523 = vsel %vm196, %v5500, 0
    %v5526 = vsel %vm196, %v5501, 0
    %v5529 = vsel %vm196, %v5502, 0
    %v5532 = vsel %vm196, %v5503, 0
    %v5535 = vsel %vm196, %v5504, 0
    %v5538 = vsel %vm196, %v5505, 0
    %v5541 = vsel %vm196, %v5506, 0
    %5543 = vmatprep.subr.mxu0 %v5508
    %5544 = vmatpush1.msra.mxu0 %v5507
    %5545 = vmatprep.subr.mxu0 %v5510
    %5546 = vmatpush1.msra.mxu0 %v5509
    %5547 = vmatprep.subr.mxu0 %v5512
    %5548 = vmatpush1.msra.mxu0 %v5511
    %5549 = vmatprep.subr.mxu0 %v5514
    %5550 = vmatpush1.msra.mxu0 %v5513
    %5551 = vmatprep.subr.mxu0 %v5516
    %5552 = vmatpush1.msra.mxu0 %v5515
    %5553 = vmatprep.subr.mxu0 %v5518
    %5554 = vmatpush1.msra.mxu0 %v5517
    %5555 = vmatprep.subr.mxu0 0.0
    %5556 = vmatpush1.msra.mxu0 0.0
    %5557 = vmatprep.subr.mxu0 0.0
    %5558 = vmatpush1.msra.mxu0 0.0
    %5559 = vmatprep.subr.mxu0 0.0
    %5560 = vmatpush1.msra.mxu0 0.0
    %5561 = vmatprep.subr.mxu0 0.0
    %5562 = vmatpush1.msra.mxu0 0.0
    %5563 = vmatprep.subr.mxu0 0.0
    %5564 = vmatpush1.msra.mxu0 0.0
    %5565 = vmatprep.subr.mxu0 0.0
    %5566 = vmatpush1.msra.mxu0 0.0
    %5567 = vmatprep.subr.mxu0 0.0
    %5568 = vmatpush1.msra.mxu0 0.0
    %5569 = vmatprep.subr.mxu0 0.0
    %5570 = vmatpush1.msra.mxu0 0.0
    %5571 = vmatprep.subr.mxu0 0.0
    %5572 = vmatpush1.msra.mxu0 0.0
    %5573 = vmatprep.subr.mxu0 0.0
    %5574 = vmatpush1.msra.mxu0 0.0
    %5575 = vmatprep.subr.mxu0 0.0
    %5576 = vmatpush1.msra.mxu0 0.0
    %5577 = vmatprep.subr.mxu0 0.0
    %5578 = vmatpush1.msra.mxu0 0.0
    %5579 = vmatprep.subr.mxu0 0.0
    %5580 = vmatpush1.msra.mxu0 0.0
    %5581 = vmatprep.subr.mxu0 0.0
    %5582 = vmatpush1.msra.mxu0 0.0
    %5583 = vmatprep.subr.mxu0 0.0
    %5584 = vmatpush1.msra.mxu0 0.0
    %5585 = vmatprep.subr.mxu0 0.0
    %5586 = vmatpush1.msra.mxu0 0.0
    %5587 = vmatprep.subr.mxu0 0.0
    %5588 = vmatpush1.msra.mxu0 0.0
    %5589 = vmatprep.subr.mxu0 0.0
    %5590 = vmatpush1.msra.mxu0 0.0
    %5591 = vmatprep.subr.mxu0 0.0
    %5592 = vmatpush1.msra.mxu0 0.0
    %5593 = vmatprep.subr.mxu0 0.0
    %5594 = vmatpush1.msra.mxu0 0.0
    %5595 = vmatprep.subr.mxu0 0.0
    %5596 = vmatpush1.msra.mxu0 0.0
    %5597 = vmatprep.subr.mxu0 0.0
    %5598 = vmatpush1.msra.mxu0 0.0
    %5599 = vmatprep.subr.mxu0 0.0
    %5600 = vmatpush1.msra.mxu0 0.0
    %5601 = vmatprep.subr.mxu0 0.0
    %5602 = vmatpush1.msra.mxu0 0.0
    %5603 = vmatprep.subr.mxu0 0.0
    %5604 = vmatpush1.msra.mxu0 0.0
    %5605 = vmatprep.subr.mxu0 0.0
    %5606 = vmatpush1.msra.mxu0 0.0
    %5607 = vmatprep.mubr.f32.mxu0 0.0
    %5608 = vmatmul.mubr.f32.gmra.mrb[0].mxu0 %v5520
    %v5609 = vpop.f32.mrb[0].mxu0
    %v5610 = vadd.f32 0.0, %v5609
    %v5611 = vpop.f32.mrb[0].mxu0
    %v5612 = vadd.f32 0.0, %v5611
    %5613 = vmatprep.mubr.f32.mxu0 0.0
    %5614 = vmatmul.mubr.f32.gmra.mrb[0].mxu0 %v5523
    %v5615 = vpop.f32.mrb[0].mxu0
    %v5616 = vadd.f32 0.0, %v5615
    %v5617 = vpop.f32.mrb[0].mxu0
    %v5618 = vadd.f32 0.0, %v5617
    %5619 = vmatprep.mubr.f32.mxu0 0.0
    %5620 = vmatmul.mubr.f32.gmra.mrb[0].mxu0 %v5526
    %v5621 = vpop.f32.mrb[0].mxu0
    %v5622 = vadd.f32 0.0, %v5621
    %v5623 = vpop.f32.mrb[0].mxu0
    %v5624 = vadd.f32 0.0, %v5623
    %5625 = vmatprep.mubr.f32.mxu0 0.0
    %5626 = vmatmul.mubr.f32.gmra.mrb[0].mxu0 %v5529
    %v5627 = vpop.f32.mrb[0].mxu0
    %v5628 = vadd.f32 0.0, %v5627
    %v5629 = vpop.f32.mrb[0].mxu0
    %v5630 = vadd.f32 0.0, %v5629
    %5631 = vmatprep.mubr.f32.mxu0 0.0
    %5632 = vmatmul.mubr.f32.gmra.mrb[0].mxu0 %v5532
    %v5633 = vpop.f32.mrb[0].mxu0
    %v5634 = vadd.f32 0.0, %v5633
    %v5635 = vpop.f32.mrb[0].mxu0
    %v5636 = vadd.f32 0.0, %v5635
    %5637 = vmatprep.mubr.f32.mxu0 0.0
    %5638 = vmatmul.mubr.f32.gmra.mrb[0].mxu0 %v5535
    %v5639 = vpop.f32.mrb[0].mxu0
    %v5640 = vadd.f32 0.0, %v5639
    %v5641 = vpop.f32.mrb[0].mxu0
    %v5642 = vadd.f32 0.0, %v5641
    %5643 = vmatprep.mubr.f32.mxu0 0.0
    %5644 = vmatmul.mubr.f32.gmra.mrb[0].mxu0 %v5538
    %v5645 = vpop.f32.mrb[0].mxu0
    %v5646 = vadd.f32 0.0, %v5645
    %v5647 = vpop.f32.mrb[0].mxu0
    %v5648 = vadd.f32 0.0, %v5647
    %5649 = vmatprep.mubr.f32.mxu0 0.0
    %5650 = vmatmul.mubr.f32.gmra.mrb[0].mxu0 %v5541
    %v5651 = vpop.f32.mrb[0].mxu0
    %v5652 = vadd.f32 0.0, %v5651
    %v5653 = vpop.f32.mrb[0].mxu0
    %v5654 = vadd.f32 0.0, %v5653
    %5655 = vdwg.mxu0
    %v5656 = vadd.f32 %v5483, %v5610
    %v5657 = vadd.f32 %v5484, %v5612
    %v5658 = vadd.f32 %v5485, %v5616
    %v5659 = vadd.f32 %v5486, %v5618
    %v5660 = vadd.f32 %v5487, %v5622
    %v5661 = vadd.f32 %v5488, %v5624
    %v5662 = vadd.f32 %v5489, %v5628
    %v5663 = vadd.f32 %v5490, %v5630
    %v5664 = vadd.f32 %v5491, %v5634
    %v5665 = vadd.f32 %v5492, %v5636
    %v5666 = vadd.f32 %v5493, %v5640
    %v5667 = vadd.f32 %v5494, %v5642
    %v5668 = vadd.f32 %v5495, %v5646
    %v5669 = vadd.f32 %v5496, %v5648
    %v5670 = vadd.f32 %v5497, %v5652
    %v5671 = vadd.f32 %v5498, %v5654
    %v5672 = vmax.f32 %v5656, 0.0
    %v5673 = vmax.f32 %v5657, 0.0
    %v5674 = vmax.f32 %v5658, 0.0
    %v5675 = vmax.f32 %v5659, 0.0
    %v5676 = vmax.f32 %v5660, 0.0
    %v5677 = vmax.f32 %v5661, 0.0
    %v5678 = vmax.f32 %v5662, 0.0
    %v5679 = vmax.f32 %v5663, 0.0
    %v5680 = vmax.f32 %v5664, 0.0
    %v5681 = vmax.f32 %v5665, 0.0
    %v5682 = vmax.f32 %v5666, 0.0
    %v5683 = vmax.f32 %v5667, 0.0
    %v5684 = vmax.f32 %v5668, 0.0
    %v5685 = vmax.f32 %v5669, 0.0
    %v5686 = vmax.f32 %v5670, 0.0
    %v5687 = vmax.f32 %v5671, 0.0
    %v5688 = vmin.f32 %v5672, 255.0
    %v5689 = vmin.f32 %v5673, 255.0
    %v5690 = vmin.f32 %v5674, 255.0
    %v5691 = vmin.f32 %v5675, 255.0
    %v5692 = vmin.f32 %v5676, 255.0
    %v5693 = vmin.f32 %v5677, 255.0
    %v5694 = vmin.f32 %v5678, 255.0
    %v5695 = vmin.f32 %v5679, 255.0
    %v5696 = vmin.f32 %v5680, 255.0
    %v5697 = vmin.f32 %v5681, 255.0
    %v5698 = vmin.f32 %v5682, 255.0
    %v5699 = vmin.f32 %v5683, 255.0
    %v5700 = vmin.f32 %v5684, 255.0
    %v5701 = vmin.f32 %v5685, 255.0
    %v5702 = vmin.f32 %v5686, 255.0
    %v5703 = vmin.f32 %v5687, 255.0
    %v5704 = vpack.c.bf16 %v5690, %v5688
    %v5705 = vpack.c.bf16 %v5691, %v5689
    %v5706 = vpack.c.bf16 %v5694, %v5692
    %v5707 = vpack.c.bf16 %v5695, %v5693
    %v5708 = vpack.c.bf16 %v5698, %v5696
    %v5709 = vpack.c.bf16 %v5699, %v5697
    %v5710 = vpack.c.bf16 %v5702, %v5700
    %v5711 = vpack.c.bf16 %v5703, %v5701
    %v5720 = vunpack.c.l.b16 %v5704
    %v5721 = vunpack.c.l.b16 %v5705
    %v5722 = vunpack.c.h.b16 %v5704
    %v5723 = vunpack.c.h.b16 %v5705
    %v5724 = vunpack.c.l.b16 %v5706
    %v5725 = vunpack.c.l.b16 %v5707
    %v5726 = vunpack.c.h.b16 %v5706
    %v5727 = vunpack.c.h.b16 %v5707
    %v5728 = vunpack.c.l.b16 %v5708
    %v5729 = vunpack.c.l.b16 %v5709
    %v5730 = vunpack.c.h.b16 %v5708
    %v5731 = vunpack.c.h.b16 %v5709
    %v5732 = vunpack.c.l.b16 %v5710
    %v5733 = vunpack.c.l.b16 %v5711
    %v5734 = vunpack.c.h.b16 %v5710
    %v5735 = vunpack.c.h.b16 %v5711
    %v5736 = vpack.c.b16 %v5721, %v5720
    %v5737 = vpack.c.b16 %v5723, %v5722
    %v5738 = vpack.c.b16 %v5725, %v5724
    %v5739 = vpack.c.b16 %v5727, %v5726
    %v5740 = vpack.c.b16 %v5729, %v5728
    %v5741 = vpack.c.b16 %v5731, %v5730
    %v5742 = vpack.c.b16 %v5733, %v5732
    %v5743 = vpack.c.b16 %v5735, %v5734
    %5752 = vst [vmem:[#allocation20] sm:$0xff] %v5736
    %5753 = vst [vmem:[#allocation20 + $0x8] sm:$0xff] %v5737
    %5754 = vst [vmem:[#allocation20 + $0x10] sm:$0xff] %v5738
    %5755 = vst [vmem:[#allocation20 + $0x18] sm:$0xff] %v5739
    %5756 = vst [vmem:[#allocation20 + $0x20] sm:$0xff] %v5740
    %5757 = vst [vmem:[#allocation20 + $0x28] sm:$0xff] %v5741
    %5758 = vst [vmem:[#allocation20 + $0x30] sm:$0xff] %v5742
    %5759 = vst [vmem:[#allocation20 + $0x38] sm:$0xff] %v5743
    // Predicated region
    $region74: #{tpu_custom_call.1} parent=1 // pred_check
      _
    $region75: #{tpu_custom_call.1} parent=1 // pred_check_branch
      %5761 = sbr.rel (0) target = $region77
    $region76: #{tpu_custom_call.1} parent=1 // pred_region
      %s5763 = ssub.s32 1024, 1024
      %5764 = vsyncadd [#allocation7], %s5763
      %s5765 = sshll.u32 [#allocation20], 4
      %s5766 = int_to_ptr.vmem [resolvable:$true] %s5765
      %5771 = dma.vmem_to_hbm [thread:$0]  %s5766, 1024, %s9, [#allocation7], 128, 128, 8
    $region77: #{tpu_custom_call.1} parent=1 // pred_fallthru
      _
    // Predicated region
    $region78: #{tpu_custom_call.1} parent=1 // pred_check
      _
    $region79: #{tpu_custom_call.1} parent=1 // pred_check_branch
      %5773 = sbr.rel (0) target = $region81
    $region80: #{tpu_custom_call.1} parent=1 // pred_region
      %5774 = dma.done [#allocation7], 1024
    $region81: #{tpu_custom_call.1} parent=1 // pred_fallthru
      _
    %5775 = vsyncpa [#allocation6], 1
    %5776 = vsyncpa [#allocation9], 1
    %5777 = vsyncpa [#allocation12], 1
    %5778 = vsyncpa [#allocation15], 1
    %5779 = vsyncpa [#allocation18], 1
    %5780 = vsyncpa [#allocation7], 1

</llo_original>
